<compile_context>
chip_gen: v6e
topology: v6e:2x2x1
jax: 0.10.0
libtpu: 0.0.40
codegen_flags: <defaults>
</compile_context>

<pallas_src>
import functools

import jax
import jax.numpy as jnp
import numpy as np
from jax import lax
from jax.experimental import pallas as pl
from jax.experimental.pallas import tpu as pltpu


# -----------------------------------------------------------------------------
# Exact GELU.  Same f32 erf rational approximation XLA uses on TPU (ErfImpl32),
# so it matches jax.nn.gelu(approximate=False) / torch GELU to f32 roundoff and
# only needs mul/add + one reciprocal (EUP).
# -----------------------------------------------------------------------------
_ERF_ALPHA = (0.00022905065861350646, 0.0034082910107109506, 0.050955695062380861,
              0.18520832239976145, 1.128379143519084)
_ERF_BETA = (-1.1791602954361697e-7, 2.3547966471313185e-05, 0.0010179625278914885,
             0.014070470171167667, 0.11098505178285362, 0.49746925110067538, 1.0)
_ERF_CLAMP = 3.832506856900711
_INV_SQRT2 = 0.7071067811865476


def _erf_f32(x):
    x = jnp.clip(x, -_ERF_CLAMP, _ERF_CLAMP)
    x2 = x * x
    p = jnp.float32(_ERF_ALPHA[0])
    for c in _ERF_ALPHA[1:]:
        p = p * x2 + jnp.float32(c)
    q = jnp.float32(_ERF_BETA[0])
    for c in _ERF_BETA[1:]:
        q = q * x2 + jnp.float32(c)
    # divide -> EUP reciprocal (keeps the VALU chain short in the GELU epilogue)
    return (x * p) * pl.reciprocal(q, approx=False)


def _gelu_exact(x):
    return 0.5 * x * (1.0 + _erf_f32(x * _INV_SQRT2))


# -----------------------------------------------------------------------------
# Fused kernel.  One grid step = one (batch, row-tile):
#   stage 1: 3x3 conv (pad=1) + GELU over TH+1 rows (the +1 row feeds stage 2)
#   stage 2: polyphase ConvTranspose2d(k=3, s=2, p=1, op=1) + GELU
# -----------------------------------------------------------------------------
def _decoder_block_kernel(x_ref, w1_ref, w2_ref, o_ref, *, TH, H, W, Ci, Cm, Co):
    t = pl.program_id(1)
    r0 = pl.multiple_of(t * TH, TH)

    # Haloed input rows for this tile: h rows [r0, r0+TH] need padded-x rows
    # [r0, r0+TH+2]  ->  TH+3 rows of the (1 top / 2 bottom / 1 left-right)-padded input.
    xs = x_ref[pl.ds(r0, TH + 3), :, :]                      # (TH+3, W+2, Ci)

    # ---- stage 1: in-VMEM im2col (no HBM patch matrix) + single GEMM + GELU ----
    taps = []
    for kh in range(3):
        for kw in range(3):
            taps.append(xs[kh:kh + TH + 1, kw:kw + W, :])    # (TH+1, W, Ci)
    a1 = jnp.concatenate(taps, axis=-1).reshape((TH + 1) * W, 9 * Ci)
    acc1 = jnp.dot(a1, w1_ref[...], preferred_element_type=jnp.float32)
    h = _gelu_exact(acc1).astype(x_ref.dtype).reshape(TH + 1, W, Cm)

    # Zero the extra (TH-th) row when it lies outside the image: for the bottom
    # tile it is the transposed conv's implicit zero row, not conv-of-padding.
    extra_ok = (r0 + TH) < H
    rid = lax.broadcasted_iota(jnp.int32, (TH + 1, W, Cm), 0)
    h = jnp.where((rid < TH) | extra_ok, h, jnp.zeros_like(h))

    # Column-shifted copy: hs[m, n] = h[m, n+1]  (zero at n = W-1).
    zcol = jnp.zeros((TH + 1, 1, Cm), h.dtype)
    hs = jnp.concatenate([h[:, 1:, :], zcol], axis=1)

    # The 4 polyphase taps of the stride-2 transposed conv.
    h00 = h[:TH]                 # h[m,   n  ]
    h01 = hs[:TH]                # h[m,   n+1]
    h10 = h[1:TH + 1]            # h[m+1, n  ]
    h11 = hs[1:TH + 1]           # h[m+1, n+1]

    # ---- stage 2: all 4 output phases as ONE GEMM (K = 4*Cm, N = 4*Co) ----
    a2 = jnp.concatenate([h00, h01, h10, h11], axis=-1).reshape(TH * W, 4 * Cm)
    y = _gelu_exact(jnp.dot(a2, w2_ref[...], preferred_element_type=jnp.float32))
    # y columns are ordered (dy, dx, co); split by output-row parity and store.
    y_even = y[:, :2 * Co].astype(o_ref.dtype).reshape(TH, W, 2 * Co)
    y_odd = y[:, 2 * Co:].astype(o_ref.dtype).reshape(TH, W, 2 * Co)
    o_ref[:, 0, :, :] = y_even                                # rows 2m
    o_ref[:, 1, :, :] = y_odd                                 # rows 2m+1


def _pick_tile_rows(H, W, target_pixels=2048):
    """Largest divisor of H giving roughly <= target_pixels GEMM rows per step."""
    th = max(1, min(H, target_pixels // max(W, 1)))
    while H % th:
        th -= 1
    return th


@functools.partial(jax.jit, static_argnames=("tile_rows", "use_bf16"))
def decoder_block(x_nchw, w1, w2, *, tile_rows=None, use_bf16=False):
    """DecoderBlock forward.

    x_nchw : (B, Ci, H, W)   float32
    w1     : (Cm, Ci, 3, 3)  Conv2d weight (OIHW), bias-free
    w2     : (Cm, Co, 3, 3)  ConvTranspose2d weight (in, out, kH, kW), bias-free
    returns: (B, Co, 2H, 2W)
    """
    B, Ci, H, W = x_nchw.shape
    Cm = w1.shape[0]
    Co = w2.shape[1]

    odtype = x_nchw.dtype
    cdtype = jnp.bfloat16 if use_bf16 else odtype   # MXU operand dtype

    TH = _pick_tile_rows(H, W) if tile_rows is None else int(tile_rows)
    if H % TH != 0:
        raise ValueError(f"tile_rows={TH} must divide H={H}")
    T = H // TH

    # NHWC; pad rows by (1 top, 2 bottom) and cols by (1, 1) so every row tile
    # can read TH+3 rows; the conv row made purely of bottom padding is masked
    # to zero inside the kernel.
    x = jnp.transpose(x_nchw, (0, 2, 3, 1))
    xp = jnp.pad(x, ((0, 0), (1, 2), (1, 1), (0, 0))).astype(cdtype)
    xp = xp.reshape(B * (H + 3), W + 2, Ci)

    # Conv1 weight as an im2col GEMM matrix, K ordered (kh, kw, ci).
    w1m = jnp.transpose(w1, (2, 3, 1, 0)).reshape(9 * Ci, Cm).astype(cdtype)

    # Polyphase ConvTranspose2d weight.  out[2m+dy, 2n+dx] only touches taps
    # h[m+a, n+b] (a,b in {0,1}) with kernel entry (ky, kx) = (dy-2a+1, dx-2b+1).
    # Rows = taps [h00; h01; h10; h11], cols = phases (dy,dx) x Co.
    def wk(ky, kx):
        return w2[:, :, ky, kx]                                # (Cm, Co)

    Z = jnp.zeros((Cm, Co), w2.dtype)
    w2c = jnp.concatenate([
        jnp.concatenate([wk(1, 1), wk(1, 2), wk(2, 1), wk(2, 2)], axis=1),  # h00
        jnp.concatenate([Z,        wk(1, 0), Z,        wk(2, 0)], axis=1),  # h01
        jnp.concatenate([Z,        Z,        wk(0, 1), wk(0, 2)], axis=1),  # h10
        jnp.concatenate([Z,        Z,        Z,        wk(0, 0)], axis=1),  # h11
    ], axis=0).astype(cdtype)                                  # (4*Cm, 4*Co)

    kernel = functools.partial(_decoder_block_kernel,
                               TH=TH, H=H, W=W, Ci=Ci, Cm=Cm, Co=Co)

    isz = jnp.dtype(cdtype).itemsize
    osz = jnp.dtype(odtype).itemsize
    vmem_est = (
        2 * (H + 3) * (W + 2) * Ci * isz               # x block (double-buffered)
        + 2 * (9 * Ci * Cm + 16 * Cm * Co) * isz       # resident weight matrices
        + 2 * TH * 2 * W * 2 * Co * osz                # out block (double-buffered)
        + (TH + 1) * W * (9 * Ci + 2 * Cm) * 4         # stage-1 patches + h (f32)
        + TH * W * (4 * Cm + 8 * Co) * 4               # stage-2 operand + result (f32)
    )
    vmem_limit = int(min(max(2 * vmem_est, 24 * 2 ** 20), 48 * 2 ** 20))

    out = pl.pallas_call(
        kernel,
        out_shape=jax.ShapeDtypeStruct((B * H, 2, W, 2 * Co), odtype),
        grid=(B, T),
        in_specs=[
            pl.BlockSpec((H + 3, W + 2, Ci), lambda b, t: (b, 0, 0)),
            pl.BlockSpec((9 * Ci, Cm), lambda b, t: (0, 0)),
            pl.BlockSpec((4 * Cm, 4 * Co), lambda b, t: (0, 0)),
        ],
        out_specs=pl.BlockSpec((TH, 2, W, 2 * Co),
                               lambda b, t: (b * T + t, 0, 0, 0)),
        compiler_params=pltpu.CompilerParams(
            dimension_semantics=("parallel", "parallel"),
            vmem_limit_bytes=vmem_limit),
    )(xp, w1m, w2c)

    # (B*H, 2, W, 2*Co) -> (B, 2H, 2W, Co) is a pure contiguity-preserving merge.
    out = out.reshape(B, 2 * H, 2 * W, Co)
    return jnp.transpose(out, (0, 3, 1, 2))                    # back to NCHW
    # TODO(synk): for very large H*W*Ci, switch the per-batch x block to a
    # manually DMA'd haloed row tile (pl.ANY + make_async_copy) to bound VMEM.


# -----------------------------------------------------------------------------
# Pure-JAX reference (lax convs + jax.nn.gelu) for the correctness check.
# -----------------------------------------------------------------------------
def _reference(x, w1, w2):
    h = lax.conv_general_dilated(
        x, w1, window_strides=(1, 1), padding=((1, 1), (1, 1)),
        dimension_numbers=("NCHW", "OIHW", "NCHW"))
    h = jax.nn.gelu(h, approximate=False)
    wconv = jnp.transpose(w2[:, :, ::-1, ::-1], (1, 0, 2, 3))   # (Co, Cm, 3, 3)
    y = lax.conv_general_dilated(
        h, wconv, window_strides=(1, 1), padding=((1, 2), (1, 2)),
        lhs_dilation=(2, 2), dimension_numbers=("NCHW", "OIHW", "NCHW"))
    return jax.nn.gelu(y, approximate=False)


if __name__ == "__main__":
    key = jax.random.PRNGKey(0)
    k_x, k_w1, k_w2 = jax.random.split(key, 3)

    B, Ci, Cm, Co, H, W = 2, 4, 8, 4, 16, 16
    x = jax.random.normal(k_x, (B, Ci, H, W), jnp.float32)
    # Conv2d weight (OIHW); ConvTranspose2d weight (in, out, kH, kW).
    w1 = 0.2 * jax.random.normal(k_w1, (Cm, Ci, 3, 3), jnp.float32)
    w2 = 0.2 * jax.random.normal(k_w2, (Cm, Co, 3, 3), jnp.float32)

    ref = jax.block_until_ready(_reference(x, w1, w2))

    # f32 path (single row tile per batch element).
    out = jax.block_until_ready(decoder_block(x, w1, w2))
    assert out.shape == (B, Co, 2 * H, 2 * W), out.shape
    np.testing.assert_allclose(np.asarray(out), np.asarray(ref), rtol=2e-3, atol=2e-3)

    # f32 path with multiple row tiles (exercises halo slicing + boundary masking).
    out_t = jax.block_until_ready(decoder_block(x, w1, w2, tile_rows=8))
    np.testing.assert_allclose(np.asarray(out_t), np.asarray(ref), rtol=2e-3, atol=2e-3)

    # bf16 MXU-operand path (v6e/v7x); f32 accumulation + f32 GELU, looser tolerance.
    out_bf = jax.block_until_ready(decoder_block(x, w1, w2, use_bf16=True))
    np.testing.assert_allclose(np.asarray(out_bf), np.asarray(ref), rtol=3e-2, atol=3e-2)

    print("KERNEL_OK")
</pallas_src>

<mosaic_0001>
module attributes {stable_mosaic.version = 11 : i64} {
  func.func @_decoder_block_kernel(%arg0: i32, %arg1: i32, %arg2: memref<19x18x4xf32, #tpu.memory_space<vmem>>, %arg3: memref<36x8xf32, #tpu.memory_space<vmem>>, %arg4: memref<32x16xf32, #tpu.memory_space<vmem>>, %arg5: memref<16x2x16x8xf32, #tpu.memory_space<vmem>>) attributes {dimension_semantics = [#tpu.dimension_semantics<parallel>, #tpu.dimension_semantics<parallel>], iteration_bounds = array<i64: 2, 1>, scalar_prefetch = 0 : i64, scratch_operands = 0 : i64, tpu.core_type = #tpu.core_type<tc>, window_params = [{transform_indices = @transform_0, window_bounds = array<i64: 19, 18, 4>}, {pipeline_mode = #tpu.pipeline_mode<synchronous>, transform_indices = @transform_1, window_bounds = array<i64: 36, 8>}, {pipeline_mode = #tpu.pipeline_mode<synchronous>, transform_indices = @transform_2, window_bounds = array<i64: 32, 16>}, {transform_indices = @transform_3, window_bounds = array<i64: 16, 2, 16, 8>}]} {
    %c16_i32 = arith.constant 16 : i32
    %0 = arith.muli %arg1, %c16_i32 : i32
    %1 = tpu.assume_multiple %0, 16 : i32
    %2 = arith.index_cast %1 : i32 to index
    %c0 = arith.constant 0 : index
    %c0_0 = arith.constant 0 : index
    %3 = vector.load %arg2[%2, %c0, %c0_0] : memref<19x18x4xf32, #tpu.memory_space<vmem>>, vector<19x18x4xf32>
    %4 = vector.extract_strided_slice %3 {offsets = [0, 0, 0], sizes = [17, 16, 4], strides = [1, 1, 1]} : vector<19x18x4xf32> to vector<17x16x4xf32>
    %5 = vector.extract_strided_slice %3 {offsets = [0, 1, 0], sizes = [17, 16, 4], strides = [1, 1, 1]} : vector<19x18x4xf32> to vector<17x16x4xf32>
    %6 = vector.extract_strided_slice %3 {offsets = [0, 2, 0], sizes = [17, 16, 4], strides = [1, 1, 1]} : vector<19x18x4xf32> to vector<17x16x4xf32>
    %7 = vector.extract_strided_slice %3 {offsets = [1, 0, 0], sizes = [17, 16, 4], strides = [1, 1, 1]} : vector<19x18x4xf32> to vector<17x16x4xf32>
    %8 = vector.extract_strided_slice %3 {offsets = [1, 1, 0], sizes = [17, 16, 4], strides = [1, 1, 1]} : vector<19x18x4xf32> to vector<17x16x4xf32>
    %9 = vector.extract_strided_slice %3 {offsets = [1, 2, 0], sizes = [17, 16, 4], strides = [1, 1, 1]} : vector<19x18x4xf32> to vector<17x16x4xf32>
    %10 = vector.extract_strided_slice %3 {offsets = [2, 0, 0], sizes = [17, 16, 4], strides = [1, 1, 1]} : vector<19x18x4xf32> to vector<17x16x4xf32>
    %11 = vector.extract_strided_slice %3 {offsets = [2, 1, 0], sizes = [17, 16, 4], strides = [1, 1, 1]} : vector<19x18x4xf32> to vector<17x16x4xf32>
    %12 = vector.extract_strided_slice %3 {offsets = [2, 2, 0], sizes = [17, 16, 4], strides = [1, 1, 1]} : vector<19x18x4xf32> to vector<17x16x4xf32>
    %13 = tpu.concatenate %4, %5, %6, %7, %8, %9, %10, %11, %12 in 2 : vector<17x16x4xf32>, vector<17x16x4xf32>, vector<17x16x4xf32>, vector<17x16x4xf32>, vector<17x16x4xf32>, vector<17x16x4xf32>, vector<17x16x4xf32>, vector<17x16x4xf32>, vector<17x16x4xf32> -> vector<17x16x36xf32>
    %14 = vector.shape_cast %13 : vector<17x16x36xf32> to vector<272x36xf32>
    %c0_1 = arith.constant 0 : index
    %c0_2 = arith.constant 0 : index
    %15 = vector.load %arg3[%c0_1, %c0_2] : memref<36x8xf32, #tpu.memory_space<vmem>>, vector<36x8xf32>
    %cst = arith.constant dense<0.000000e+00> : vector<272x8xf32>
    %16 = tpu.matmul %14, %15, %cst {dimension_numbers = #tpu.dot_dimension_numbers<[1], [0], [0], [1], [0, 0, 1, 1], [], []>} : vector<272x36xf32>, vector<36x8xf32>, vector<272x8xf32> -> vector<272x8xf32>
    %cst_3 = arith.constant 5.000000e-01 : f32
    %17 = vector.broadcast %cst_3 : f32 to vector<272x8xf32>
    %18 = arith.mulf %17, %16 : vector<272x8xf32>
    %cst_4 = arith.constant 0.707106769 : f32
    %19 = vector.broadcast %cst_4 : f32 to vector<272x8xf32>
    %20 = arith.mulf %16, %19 : vector<272x8xf32>
    %cst_5 = arith.constant -3.8325069 : f32
    %cst_6 = arith.constant 3.8325069 : f32
    %21 = vector.broadcast %cst_5 : f32 to vector<272x8xf32>
    %22 = arith.maximumf %21, %20 : vector<272x8xf32>
    %23 = vector.broadcast %cst_6 : f32 to vector<272x8xf32>
    %24 = arith.minimumf %23, %22 : vector<272x8xf32>
    %25 = arith.mulf %24, %24 : vector<272x8xf32>
    %cst_7 = arith.constant 2.29050653E-4 : f32
    %26 = vector.broadcast %cst_7 : f32 to vector<272x8xf32>
    %27 = arith.mulf %26, %25 : vector<272x8xf32>
    %cst_8 = arith.constant 0.00340829091 : f32
    %28 = vector.broadcast %cst_8 : f32 to vector<272x8xf32>
    %29 = arith.addf %27, %28 : vector<272x8xf32>
    %30 = arith.mulf %29, %25 : vector<272x8xf32>
    %cst_9 = arith.constant 0.0509556942 : f32
    %31 = vector.broadcast %cst_9 : f32 to vector<272x8xf32>
    %32 = arith.addf %30, %31 : vector<272x8xf32>
    %33 = arith.mulf %32, %25 : vector<272x8xf32>
    %cst_10 = arith.constant 0.185208321 : f32
    %34 = vector.broadcast %cst_10 : f32 to vector<272x8xf32>
    %35 = arith.addf %33, %34 : vector<272x8xf32>
    %36 = arith.mulf %35, %25 : vector<272x8xf32>
    %cst_11 = arith.constant 1.12837911 : f32
    %37 = vector.broadcast %cst_11 : f32 to vector<272x8xf32>
    %38 = arith.addf %36, %37 : vector<272x8xf32>
    %cst_12 = arith.constant -1.17916031E-7 : f32
    %39 = vector.broadcast %cst_12 : f32 to vector<272x8xf32>
    %40 = arith.mulf %39, %25 : vector<272x8xf32>
    %cst_13 = arith.constant 2.35479656E-5 : f32
    %41 = vector.broadcast %cst_13 : f32 to vector<272x8xf32>
    %42 = arith.addf %40, %41 : vector<272x8xf32>
    %43 = arith.mulf %42, %25 : vector<272x8xf32>
    %cst_14 = arith.constant 0.00101796258 : f32
    %44 = vector.broadcast %cst_14 : f32 to vector<272x8xf32>
    %45 = arith.addf %43, %44 : vector<272x8xf32>
    %46 = arith.mulf %45, %25 : vector<272x8xf32>
    %cst_15 = arith.constant 0.0140704699 : f32
    %47 = vector.broadcast %cst_15 : f32 to vector<272x8xf32>
    %48 = arith.addf %46, %47 : vector<272x8xf32>
    %49 = arith.mulf %48, %25 : vector<272x8xf32>
    %cst_16 = arith.constant 0.110985048 : f32
    %50 = vector.broadcast %cst_16 : f32 to vector<272x8xf32>
    %51 = arith.addf %49, %50 : vector<272x8xf32>
    %52 = arith.mulf %51, %25 : vector<272x8xf32>
    %cst_17 = arith.constant 0.497469246 : f32
    %53 = vector.broadcast %cst_17 : f32 to vector<272x8xf32>
    %54 = arith.addf %52, %53 : vector<272x8xf32>
    %55 = arith.mulf %54, %25 : vector<272x8xf32>
    %cst_18 = arith.constant 1.000000e+00 : f32
    %56 = vector.broadcast %cst_18 : f32 to vector<272x8xf32>
    %57 = arith.addf %55, %56 : vector<272x8xf32>
    %58 = arith.mulf %24, %38 : vector<272x8xf32>
    %59 = tpu.reciprocal %57 : vector<272x8xf32> -> vector<272x8xf32>
    %60 = arith.mulf %58, %59 : vector<272x8xf32>
    %cst_19 = arith.constant 1.000000e+00 : f32
    %61 = vector.broadcast %cst_19 : f32 to vector<272x8xf32>
    %62 = arith.addf %61, %60 : vector<272x8xf32>
    %63 = arith.mulf %18, %62 : vector<272x8xf32>
    %64 = vector.shape_cast %63 : vector<272x8xf32> to vector<17x16x8xf32>
    %c16_i32_20 = arith.constant 16 : i32
    %65 = arith.addi %1, %c16_i32_20 : i32
    %c16_i32_21 = arith.constant 16 : i32
    %66 = arith.cmpi slt, %65, %c16_i32_21 : i32
    %67 = tpu.iota {dimensions = array<i32: 0>} : vector<17x16x8xi32>
    %c16_i32_22 = arith.constant 16 : i32
    %68 = vector.broadcast %c16_i32_22 : i32 to vector<17x16x8xi32>
    %69 = arith.cmpi slt, %67, %68 : vector<17x16x8xi32>
    %70 = vector.broadcast %66 : i1 to vector<17x16x8xi1>
    %71 = arith.ori %69, %70 : vector<17x16x8xi1>
    %cst_23 = arith.constant 0.000000e+00 : f32
    %72 = vector.broadcast %cst_23 : f32 to vector<17x16x8xf32>
    %73 = arith.select %71, %64, %72 : vector<17x16x8xi1>, vector<17x16x8xf32>
    %cst_24 = arith.constant 0.000000e+00 : f32
    %74 = vector.broadcast %cst_24 : f32 to vector<17x1x8xf32>
    %75 = vector.extract_strided_slice %73 {offsets = [0, 1, 0], sizes = [17, 15, 8], strides = [1, 1, 1]} : vector<17x16x8xf32> to vector<17x15x8xf32>
    %76 = tpu.concatenate %75, %74 in 1 : vector<17x15x8xf32>, vector<17x1x8xf32> -> vector<17x16x8xf32>
    %77 = vector.extract_strided_slice %73 {offsets = [0, 0, 0], sizes = [16, 16, 8], strides = [1, 1, 1]} : vector<17x16x8xf32> to vector<16x16x8xf32>
    %78 = vector.extract_strided_slice %76 {offsets = [0, 0, 0], sizes = [16, 16, 8], strides = [1, 1, 1]} : vector<17x16x8xf32> to vector<16x16x8xf32>
    %79 = vector.extract_strided_slice %73 {offsets = [1, 0, 0], sizes = [16, 16, 8], strides = [1, 1, 1]} : vector<17x16x8xf32> to vector<16x16x8xf32>
    %80 = vector.extract_strided_slice %76 {offsets = [1, 0, 0], sizes = [16, 16, 8], strides = [1, 1, 1]} : vector<17x16x8xf32> to vector<16x16x8xf32>
    %81 = tpu.concatenate %77, %78, %79, %80 in 2 : vector<16x16x8xf32>, vector<16x16x8xf32>, vector<16x16x8xf32>, vector<16x16x8xf32> -> vector<16x16x32xf32>
    %82 = vector.shape_cast %81 : vector<16x16x32xf32> to vector<256x32xf32>
    %c0_25 = arith.constant 0 : index
    %c0_26 = arith.constant 0 : index
    %83 = vector.load %arg4[%c0_25, %c0_26] : memref<32x16xf32, #tpu.memory_space<vmem>>, vector<32x16xf32>
    %cst_27 = arith.constant dense<0.000000e+00> : vector<256x16xf32>
    %84 = tpu.matmul %82, %83, %cst_27 {dimension_numbers = #tpu.dot_dimension_numbers<[1], [0], [0], [1], [0, 0, 1, 1], [], []>} : vector<256x32xf32>, vector<32x16xf32>, vector<256x16xf32> -> vector<256x16xf32>
    %cst_28 = arith.constant 5.000000e-01 : f32
    %85 = vector.broadcast %cst_28 : f32 to vector<256x16xf32>
    %86 = arith.mulf %85, %84 : vector<256x16xf32>
    %cst_29 = arith.constant 0.707106769 : f32
    %87 = vector.broadcast %cst_29 : f32 to vector<256x16xf32>
    %88 = arith.mulf %84, %87 : vector<256x16xf32>
    %cst_30 = arith.constant -3.8325069 : f32
    %cst_31 = arith.constant 3.8325069 : f32
    %89 = vector.broadcast %cst_30 : f32 to vector<256x16xf32>
    %90 = arith.maximumf %89, %88 : vector<256x16xf32>
    %91 = vector.broadcast %cst_31 : f32 to vector<256x16xf32>
    %92 = arith.minimumf %91, %90 : vector<256x16xf32>
    %93 = arith.mulf %92, %92 : vector<256x16xf32>
    %cst_32 = arith.constant 2.29050653E-4 : f32
    %94 = vector.broadcast %cst_32 : f32 to vector<256x16xf32>
    %95 = arith.mulf %94, %93 : vector<256x16xf32>
    %cst_33 = arith.constant 0.00340829091 : f32
    %96 = vector.broadcast %cst_33 : f32 to vector<256x16xf32>
    %97 = arith.addf %95, %96 : vector<256x16xf32>
    %98 = arith.mulf %97, %93 : vector<256x16xf32>
    %cst_34 = arith.constant 0.0509556942 : f32
    %99 = vector.broadcast %cst_34 : f32 to vector<256x16xf32>
    %100 = arith.addf %98, %99 : vector<256x16xf32>
    %101 = arith.mulf %100, %93 : vector<256x16xf32>
    %cst_35 = arith.constant 0.185208321 : f32
    %102 = vector.broadcast %cst_35 : f32 to vector<256x16xf32>
    %103 = arith.addf %101, %102 : vector<256x16xf32>
    %104 = arith.mulf %103, %93 : vector<256x16xf32>
    %cst_36 = arith.constant 1.12837911 : f32
    %105 = vector.broadcast %cst_36 : f32 to vector<256x16xf32>
    %106 = arith.addf %104, %105 : vector<256x16xf32>
    %cst_37 = arith.constant -1.17916031E-7 : f32
    %107 = vector.broadcast %cst_37 : f32 to vector<256x16xf32>
    %108 = arith.mulf %107, %93 : vector<256x16xf32>
    %cst_38 = arith.constant 2.35479656E-5 : f32
    %109 = vector.broadcast %cst_38 : f32 to vector<256x16xf32>
    %110 = arith.addf %108, %109 : vector<256x16xf32>
    %111 = arith.mulf %110, %93 : vector<256x16xf32>
    %cst_39 = arith.constant 0.00101796258 : f32
    %112 = vector.broadcast %cst_39 : f32 to vector<256x16xf32>
    %113 = arith.addf %111, %112 : vector<256x16xf32>
    %114 = arith.mulf %113, %93 : vector<256x16xf32>
    %cst_40 = arith.constant 0.0140704699 : f32
    %115 = vector.broadcast %cst_40 : f32 to vector<256x16xf32>
    %116 = arith.addf %114, %115 : vector<256x16xf32>
    %117 = arith.mulf %116, %93 : vector<256x16xf32>
    %cst_41 = arith.constant 0.110985048 : f32
    %118 = vector.broadcast %cst_41 : f32 to vector<256x16xf32>
    %119 = arith.addf %117, %118 : vector<256x16xf32>
    %120 = arith.mulf %119, %93 : vector<256x16xf32>
    %cst_42 = arith.constant 0.497469246 : f32
    %121 = vector.broadcast %cst_42 : f32 to vector<256x16xf32>
    %122 = arith.addf %120, %121 : vector<256x16xf32>
    %123 = arith.mulf %122, %93 : vector<256x16xf32>
    %cst_43 = arith.constant 1.000000e+00 : f32
    %124 = vector.broadcast %cst_43 : f32 to vector<256x16xf32>
    %125 = arith.addf %123, %124 : vector<256x16xf32>
    %126 = arith.mulf %92, %106 : vector<256x16xf32>
    %127 = tpu.reciprocal %125 : vector<256x16xf32> -> vector<256x16xf32>
    %128 = arith.mulf %126, %127 : vector<256x16xf32>
    %cst_44 = arith.constant 1.000000e+00 : f32
    %129 = vector.broadcast %cst_44 : f32 to vector<256x16xf32>
    %130 = arith.addf %129, %128 : vector<256x16xf32>
    %131 = arith.mulf %86, %130 : vector<256x16xf32>
    %132 = vector.extract_strided_slice %131 {offsets = [0, 0], sizes = [256, 8], strides = [1, 1]} : vector<256x16xf32> to vector<256x8xf32>
    %133 = vector.shape_cast %132 : vector<256x8xf32> to vector<16x16x8xf32>
    %134 = vector.extract_strided_slice %131 {offsets = [0, 8], sizes = [256, 8], strides = [1, 1]} : vector<256x16xf32> to vector<256x8xf32>
    %135 = vector.shape_cast %134 : vector<256x8xf32> to vector<16x16x8xf32>
    %c0_45 = arith.constant 0 : index
    %c0_46 = arith.constant 0 : index
    %c0_47 = arith.constant 0 : index
    %c0_48 = arith.constant 0 : index
    %136 = vector.load %arg5[%c0_45, %c0_46, %c0_47, %c0_48] : memref<16x2x16x8xf32, #tpu.memory_space<vmem>>, vector<16x1x16x8xf32>
    %137 = vector.shape_cast %136 : vector<16x1x16x8xf32> to vector<16x16x8xf32>
    %138 = vector.shape_cast %133 : vector<16x16x8xf32> to vector<16x1x16x8xf32>
    tpu.vector_store %arg5[%c0_45, %c0_46, %c0_47, %c0_48], %138 {strides = array<i32>} : memref<16x2x16x8xf32, #tpu.memory_space<vmem>>, vector<16x1x16x8xf32>,
    %c0_49 = arith.constant 0 : index
    %c1 = arith.constant 1 : index
    %c0_50 = arith.constant 0 : index
    %c0_51 = arith.constant 0 : index
    %139 = vector.load %arg5[%c0_49, %c1, %c0_50, %c0_51] : memref<16x2x16x8xf32, #tpu.memory_space<vmem>>, vector<16x1x16x8xf32>
    %140 = vector.shape_cast %139 : vector<16x1x16x8xf32> to vector<16x16x8xf32>
    %141 = vector.shape_cast %135 : vector<16x16x8xf32> to vector<16x1x16x8xf32>
    tpu.vector_store %arg5[%c0_49, %c1, %c0_50, %c0_51], %141 {strides = array<i32>} : memref<16x2x16x8xf32, #tpu.memory_space<vmem>>, vector<16x1x16x8xf32>,
    return
  }
  func.func @transform_0(%arg0: i32, %arg1: i32) -> (i32, i32, i32) {
    %c0_i32 = arith.constant 0 : i32
    %c0_i32_0 = arith.constant 0 : i32
    %c0_i32_1 = arith.constant 0 : i32
    return %arg0, %c0_i32, %c0_i32_0 : i32, i32, i32
  }
  func.func @transform_1(%arg0: i32, %arg1: i32) -> (i32, i32) {
    %c0_i32 = arith.constant 0 : i32
    %c0_i32_0 = arith.constant 0 : i32
    %c0_i32_1 = arith.constant 0 : i32
    return %c0_i32, %c0_i32_0 : i32, i32
  }
  func.func @transform_2(%arg0: i32, %arg1: i32) -> (i32, i32) {
    %c0_i32 = arith.constant 0 : i32
    %c0_i32_0 = arith.constant 0 : i32
    %c0_i32_1 = arith.constant 0 : i32
    return %c0_i32, %c0_i32_0 : i32, i32
  }
  func.func @transform_3(%arg0: i32, %arg1: i32) -> (i32, i32, i32, i32) {
    %c1_i32 = arith.constant 1 : i32
    %0 = arith.muli %arg0, %c1_i32 : i32
    %1 = arith.addi %0, %arg1 : i32
    %c0_i32 = arith.constant 0 : i32
    %c0_i32_0 = arith.constant 0 : i32
    %c0_i32_1 = arith.constant 0 : i32
    %c0_i32_2 = arith.constant 0 : i32
    return %1, %c0_i32, %c0_i32_0, %c0_i32_1 : i32, i32, i32, i32
  }
}

</mosaic_0001>

<llo_original>
// kernel: decoder_block.1
$region0: #{decoder_block.1}
  #allocation0 [shape = 'u32[]', space=smem, size = 0x4, offset = 0x4, fixed_abs, tag = 'smem constant byte address 0x4 - core index']
  #allocation1 [shape = 'u32[144,128]{1,0:T(1,128)}', space=vmem, size = 0x12000, scoped, tag = 'internal scratch']
  %s0 = inlined_call_operand.vmem [shape: f32[38,18,4], index: 0, kind: input, shape index: {}]
  %s1 = inlined_call_operand.vmem [shape: f32[36,8], index: 1, kind: input, shape index: {}]
  %s2 = inlined_call_operand.vmem [shape: f32[32,16], index: 2, kind: input, shape index: {}]
  %s3 = inlined_call_operand.vmem [shape: f32[32,2,16,8], index: 3, kind: output, shape index: {}]
  %s4 = sld [smem:[#allocation0]]
  $region45: #{decoder_block.1} parent=0
    _
  %s6 = ssub.s32 1, %s4
  %s7 = scalar_select 0, %s6, %s4
  loop: start=0, step=1, limit=4
  $region2: #{decoder_block.1} parent=0 // loop_pre_header
    _
  $region3: #{decoder_block.1} parent=0 // loop_header
    %s9 = sphi 0, %s13
    %p10 = scmp.ge.s32.totalorder %s9, 4
    %s16 = sphi 0, %s28
    %s17 = sphi 0, %s24
    %s18 = sphi 0, %s16
    %s19 = sphi 0, %s17
    %s20 = sphi 0, %s18
    %s21 = sphi 0, %s19
    %s31 = sphi 0, %s33
    %s34 = sphi 0, %s31
    %s35 = sphi 0, %s34
    %s51 = sphi 0, %s35
    %s55 = sphi 0, %s55
    %s57 = sphi 0, %s55
    %s58 = sphi 0, %s57
    %s72 = sphi 0, %s58
    %s76 = sphi 0, %s76
    %s78 = sphi 0, %s76
    %s79 = sphi 0, %s78
    %s93 = sphi 0, %s79
    %s101 = sphi 0, %s103
    %s104 = sphi 0, %s101
    %s105 = sphi 0, %s104
    %s121 = sphi 0, %s105
  $region4: #{decoder_block.1} parent=0 // loop_header_branch
    %12 = sbr.rel (%p10) target = $region8
  $region5: #{decoder_block.1} parent=0 // loop_body
    %s14 = ssub.s32 %s9, 1
    %s15 = ssub.s32 %s9, 2
    %s22 = sadd.s32 1, %s17
    %p23 = scmp.ge.s32.totalorder %s22, 1
    %s24 = scalar_select %p23, 0, %s22
    %s25 = sadd.s32 1, %s16
    %s26 = scalar_select %p23, %s25, %s16
    %p27 = scmp.ge.s32.totalorder %s26, 2
    %s28 = scalar_select %p27, 0, %s26
    %s29 = ssub.s32 %s16, %s28
    %p30 = scmp.eq.s32.totalorder %s29, 0
    %s32 = sadd.s32 %s31, 1
    %s33 = scalar_select %p30, %s31, %s32
    %p36 = pneg %p30
    %p37 = scmp.eq.s32.totalorder %s9, 1
    %p38 = por %p36, %p37
    %p39 = scmp.ne.s32.totalorder %s31, %s34
    %p40 = scmp.eq.s32.totalorder %s9, 0
    %p41 = por %p39, %p40
    %p42 = scmp.ne.s32.totalorder %s31, %s34
    %p43 = scmp.eq.s32.totalorder %s14, 1
    %p44 = por %p42, %p43
    %p45 = scmp.ne.s32.totalorder %s34, %s35
    %p46 = scmp.eq.s32.totalorder %s14, 0
    %p47 = por %p45, %p46
    %p48 = scmp.ne.s32.totalorder %s34, %s35
    %p49 = scmp.eq.s32.totalorder %s15, 1
    %p50 = por %p48, %p49
    %p52 = scmp.ne.s32.totalorder %s35, %s51
    %p53 = scmp.eq.s32.totalorder %s15, 0
    %p54 = por %p52, %p53
    %s56 = sadd.s32 %s55, 1
    %p59 = scmp.eq.s32.totalorder %s9, 1
    %p60 = scmp.ne.s32.totalorder %s55, %s57
    %p61 = scmp.eq.s32.totalorder %s9, 0
    %p62 = por %p60, %p61
    %p63 = scmp.ne.s32.totalorder %s55, %s57
    %p64 = scmp.eq.s32.totalorder %s14, 1
    %p65 = por %p63, %p64
    %p66 = scmp.ne.s32.totalorder %s57, %s58
    %p67 = scmp.eq.s32.totalorder %s14, 0
    %p68 = por %p66, %p67
    %p69 = scmp.ne.s32.totalorder %s57, %s58
    %p70 = scmp.eq.s32.totalorder %s15, 1
    %p71 = por %p69, %p70
    %p73 = scmp.ne.s32.totalorder %s58, %s72
    %p74 = scmp.eq.s32.totalorder %s15, 0
    %p75 = por %p73, %p74
    %s77 = sadd.s32 %s76, 1
    %p80 = scmp.eq.s32.totalorder %s9, 1
    %p81 = scmp.ne.s32.totalorder %s76, %s78
    %p82 = scmp.eq.s32.totalorder %s9, 0
    %p83 = por %p81, %p82
    %p84 = scmp.ne.s32.totalorder %s76, %s78
    %p85 = scmp.eq.s32.totalorder %s14, 1
    %p86 = por %p84, %p85
    %p87 = scmp.ne.s32.totalorder %s78, %s79
    %p88 = scmp.eq.s32.totalorder %s14, 0
    %p89 = por %p87, %p88
    %p90 = scmp.ne.s32.totalorder %s78, %s79
    %p91 = scmp.eq.s32.totalorder %s15, 1
    %p92 = por %p90, %p91
    %p94 = scmp.ne.s32.totalorder %s79, %s93
    %p95 = scmp.eq.s32.totalorder %s15, 0
    %p96 = por %p94, %p95
    %s97 = sadd.s32 %s16, %s17
    %s98 = sadd.s32 %s28, %s24
    %s99 = ssub.s32 %s97, %s98
    %p100 = scmp.eq.s32.totalorder %s99, 0
    %s102 = sadd.s32 %s101, 1
    %s103 = scalar_select %p100, %s101, %s102
    %p106 = pneg %p100
    %p107 = scmp.eq.s32.totalorder %s9, 1
    %p108 = por %p106, %p107
    %p109 = scmp.ne.s32.totalorder %s101, %s104
    %p110 = scmp.eq.s32.totalorder %s9, 0
    %p111 = por %p109, %p110
    %p112 = scmp.ne.s32.totalorder %s101, %s104
    %p113 = scmp.eq.s32.totalorder %s14, 1
    %p114 = por %p112, %p113
    %p115 = scmp.ne.s32.totalorder %s104, %s105
    %p116 = scmp.eq.s32.totalorder %s14, 0
    %p117 = por %p115, %p116
    %p118 = scmp.ne.s32.totalorder %s104, %s105
    %p119 = scmp.eq.s32.totalorder %s15, 1
    %p120 = por %p118, %p119
    %p122 = scmp.ne.s32.totalorder %s105, %s121
    %p123 = scmp.eq.s32.totalorder %s15, 0
    %p124 = por %p122, %p123
    %p125 = scmp.le.s32.totalorder 1, %s9
    %p126 = scmp.lt.s32.totalorder %s9, 3
    %p127 = pnand %p125, %p126
    %p128 = pneg %p127
    // Predicated region
    $region9: #{decoder_block.1} parent=5 // pred_check
      _
    $region10: #{decoder_block.1} parent=5 // pred_check_branch
      %130 = sbr.rel (%p127) target = $region12
    $region11: #{decoder_block.1} parent=5 // pred_region
      %s131 = ssub.s32 %s9, 1
      // Predicated region
      $region13: #{decoder_block.1} parent=11 // pred_check
        %p132 = pneg %p68
      $region14: #{decoder_block.1} parent=11 // pred_check_branch
        %134 = sbr.rel (%p132) target = $region16
      $region15: #{decoder_block.1} parent=11 // pred_region
        _
      $region16: #{decoder_block.1} parent=11 // pred_fallthru
        _
      // Predicated region
      $region17: #{decoder_block.1} parent=11 // pred_check
        %p135 = pneg %p89
      $region18: #{decoder_block.1} parent=11 // pred_check_branch
        %137 = sbr.rel (%p135) target = $region20
      $region19: #{decoder_block.1} parent=11 // pred_region
        _
      $region20: #{decoder_block.1} parent=11 // pred_fallthru
        _
    $region12: #{decoder_block.1} parent=5 // pred_fallthru
      _
    %p138 = scmp.lt.s32.totalorder %s9, 2
    // Predicated region
    $region21: #{decoder_block.1} parent=5 // pred_check
      %p139 = pneg %p138
    $region22: #{decoder_block.1} parent=5 // pred_check_branch
      %141 = sbr.rel (%p139) target = $region24
    $region23: #{decoder_block.1} parent=5 // pred_region
      // Predicated region
      $region25: #{decoder_block.1} parent=23 // pred_check
        %p142 = pneg %p41
      $region26: #{decoder_block.1} parent=23 // pred_check_branch
        %144 = sbr.rel (%p142) target = $region28
      $region27: #{decoder_block.1} parent=23 // pred_region
        %s145 = smul.u32 19, %s16
        %p146 = scmp.lt.s32.totalorder %s145, 37
        %s147 = scalar_select %p146, %s145, 37
        %s148 = smul.addr %s147, 3
        %s149 = smul.addr %s148, 8
        %s150 = scalar_lea.vmem %s0, %s149
        %s151 = smul.u32 19, %s16
      $region28: #{decoder_block.1} parent=23 // pred_fallthru
        _
    $region24: #{decoder_block.1} parent=5 // pred_fallthru
      _
    %p152 = scmp.le.s32.totalorder 1, %s9
    %p153 = scmp.lt.s32.totalorder %s9, 3
    %p154 = pnand %p152, %p153
    %p155 = pneg %p154
    // Predicated region
    $region29: #{decoder_block.1} parent=5 // pred_check
      _
    $region30: #{decoder_block.1} parent=5 // pred_check_branch
      %157 = sbr.rel (%p154) target = $region32
    $region31: #{decoder_block.1} parent=5 // pred_region
      %s158 = ssub.s32 %s9, 1
      %s159 = smul.u32 19, %s18
      %p160 = scmp.lt.s32.totalorder %s159, 37
      %s161 = scalar_select %p160, %s159, 37
      %s162 = smul.addr %s161, 3
      %s163 = smul.addr %s162, 8
      %s164 = scalar_lea.vmem %s0, %s163
      %p165 = pneg %p47
      %p166 = pneg %p44
      %p167 = pneg %p68
      %p168 = pneg %p65
      %p169 = pneg %p89
      %p170 = pneg %p86
      %p171 = pneg %p117
      %p172 = pneg %p114
      %s173 = sadd.s32 %s18, %s19
      %s174 = smul.u32 16, %s173
      %p175 = scmp.lt.s32.totalorder %s174, 31
      %s176 = scalar_select %p175, %s174, 31
      %s177 = smul.addr %s176, 4
      %s178 = smul.addr %s177, 8
      %s179 = scalar_lea.vmem %s3, %s178
      %s180 = smul.u32 19, %s18
      %p181 = scmp.lt.s32.totalorder %s180, 37
      %s182 = scalar_select %p181, %s180, 37
      %s183 = smul.addr %s182, 3
      %s184 = smul.addr %s183, 8
      %s185 = scalar_lea.vmem %s0, %s184
      %s186 = smul.u32 19, %s18
      %s187 = sadd.s32 %s18, %s19
      %s188 = smul.u32 16, %s187
      %p189 = scmp.lt.s32.totalorder %s188, 31
      %s190 = scalar_select %p189, %s188, 31
      %s191 = smul.addr %s190, 4
      %s192 = smul.addr %s191, 8
      %s193 = scalar_lea.vmem %s3, %s192
      %s194 = sadd.s32 %s18, %s19
      %s195 = smul.u32 16, %s194
      %s196 = smul.u32 %s19, 16
      %s197 = smul.u32 %s196, 24
      %s198 = scalar_lea.vmem %s185, %s197
      %v199 = vld [vmem:[%s198] sm:$0xff]
      %v200 = vld [vmem:[%s198 + $0x8] sm:$0xff]
      %v201 = vld [vmem:[%s198 + $0x10] sm:$0x3]
      %v202 = vld [vmem:[%s198 + $0x18] sm:$0xff]
      %v203 = vld [vmem:[%s198 + $0x20] sm:$0xff]
      %v204 = vld [vmem:[%s198 + $0x28] sm:$0x3]
      %v205 = vld [vmem:[%s198 + $0x30] sm:$0xff]
      %v206 = vld [vmem:[%s198 + $0x38] sm:$0xff]
      %v207 = vld [vmem:[%s198 + $0x40] sm:$0x3]
      %v208 = vld [vmem:[%s198 + $0x48] sm:$0xff]
      %v209 = vld [vmem:[%s198 + $0x50] sm:$0xff]
      %v210 = vld [vmem:[%s198 + $0x58] sm:$0x3]
      %v211 = vld [vmem:[%s198 + $0x60] sm:$0xff]
      %v212 = vld [vmem:[%s198 + $0x68] sm:$0xff]
      %v213 = vld [vmem:[%s198 + $0x70] sm:$0x3]
      %v214 = vld [vmem:[%s198 + $0x78] sm:$0xff]
      %v215 = vld [vmem:[%s198 + $0x80] sm:$0xff]
      %v216 = vld [vmem:[%s198 + $0x88] sm:$0x3]
      %v217 = vld [vmem:[%s198 + $0x90] sm:$0xff]
      %v218 = vld [vmem:[%s198 + $0x98] sm:$0xff]
      %v219 = vld [vmem:[%s198 + $0xa0] sm:$0x3]
      %v220 = vld [vmem:[%s198 + $0xa8] sm:$0xff]
      %v221 = vld [vmem:[%s198 + $0xb0] sm:$0xff]
      %v222 = vld [vmem:[%s198 + $0xb8] sm:$0x3]
      %v223 = vld [vmem:[%s198 + $0xc0] sm:$0xff]
      %v224 = vld [vmem:[%s198 + $0xc8] sm:$0xff]
      %v225 = vld [vmem:[%s198 + $0xd0] sm:$0x3]
      %v226 = vld [vmem:[%s198 + $0xd8] sm:$0xff]
      %v227 = vld [vmem:[%s198 + $0xe0] sm:$0xff]
      %v228 = vld [vmem:[%s198 + $0xe8] sm:$0x3]
      %v229 = vld [vmem:[%s198 + $0xf0] sm:$0xff]
      %v230 = vld [vmem:[%s198 + $0xf8] sm:$0xff]
      %v231 = vld [vmem:[%s198 + $0x100] sm:$0x3]
      %v232 = vld [vmem:[%s198 + $0x108] sm:$0xff]
      %v233 = vld [vmem:[%s198 + $0x110] sm:$0xff]
      %v234 = vld [vmem:[%s198 + $0x118] sm:$0x3]
      %v235 = vld [vmem:[%s198 + $0x120] sm:$0xff]
      %v236 = vld [vmem:[%s198 + $0x128] sm:$0xff]
      %v237 = vld [vmem:[%s198 + $0x130] sm:$0x3]
      %v238 = vld [vmem:[%s198 + $0x138] sm:$0xff]
      %v239 = vld [vmem:[%s198 + $0x140] sm:$0xff]
      %v240 = vld [vmem:[%s198 + $0x148] sm:$0x3]
      %v241 = vld [vmem:[%s198 + $0x150] sm:$0xff]
      %v242 = vld [vmem:[%s198 + $0x158] sm:$0xff]
      %v243 = vld [vmem:[%s198 + $0x160] sm:$0x3]
      %v244 = vld [vmem:[%s198 + $0x168] sm:$0xff]
      %v245 = vld [vmem:[%s198 + $0x170] sm:$0xff]
      %v246 = vld [vmem:[%s198 + $0x178] sm:$0x3]
      %v247 = vld [vmem:[%s198 + $0x180] sm:$0xff]
      %v248 = vld [vmem:[%s198 + $0x188] sm:$0xff]
      %v249 = vld [vmem:[%s198 + $0x190] sm:$0x3]
      %v250 = vld [vmem:[%s198 + $0x198] sm:$0xff]
      %v251 = vld [vmem:[%s198 + $0x1a0] sm:$0xff]
      %v252 = vld [vmem:[%s198 + $0x1a8] sm:$0x3]
      %v253 = vld [vmem:[%s198 + $0x1b0] sm:$0xff]
      %v254 = vld [vmem:[%s198 + $0x1b8] sm:$0xff]
      %v255 = vld [vmem:[%s198 + $0x1c0] sm:$0x3]
      %vm307 = vcmask 1046528
      %v308 = vrot.slane %v199, 1
      %v309 = vrot.slane %v200, 1
      %v310 = vsel %vm307, %v308, %v309
      %v311 = vrot.slane %v201, 1
      %v312 = vsel %vm307, %v309, %v311
      %v313 = vrot.slane %v202, 1
      %v314 = vrot.slane %v203, 1
      %v315 = vsel %vm307, %v313, %v314
      %v316 = vrot.slane %v204, 1
      %v317 = vsel %vm307, %v314, %v316
      %v318 = vrot.slane %v205, 1
      %v319 = vrot.slane %v206, 1
      %v320 = vsel %vm307, %v318, %v319
      %v321 = vrot.slane %v207, 1
      %v322 = vsel %vm307, %v319, %v321
      %v323 = vrot.slane %v208, 1
      %v324 = vrot.slane %v209, 1
      %v325 = vsel %vm307, %v323, %v324
      %v326 = vrot.slane %v210, 1
      %v327 = vsel %vm307, %v324, %v326
      %v328 = vrot.slane %v211, 1
      %v329 = vrot.slane %v212, 1
      %v330 = vsel %vm307, %v328, %v329
      %v331 = vrot.slane %v213, 1
      %v332 = vsel %vm307, %v329, %v331
      %v333 = vrot.slane %v214, 1
      %v334 = vrot.slane %v215, 1
      %v335 = vsel %vm307, %v333, %v334
      %v336 = vrot.slane %v216, 1
      %v337 = vsel %vm307, %v334, %v336
      %v338 = vrot.slane %v217, 1
      %v339 = vrot.slane %v218, 1
      %v340 = vsel %vm307, %v338, %v339
      %v341 = vrot.slane %v219, 1
      %v342 = vsel %vm307, %v339, %v341
      %v343 = vrot.slane %v220, 1
      %v344 = vrot.slane %v221, 1
      %v345 = vsel %vm307, %v343, %v344
      %v346 = vrot.slane %v222, 1
      %v347 = vsel %vm307, %v344, %v346
      %v348 = vrot.slane %v223, 1
      %v349 = vrot.slane %v224, 1
      %v350 = vsel %vm307, %v348, %v349
      %v351 = vrot.slane %v225, 1
      %v352 = vsel %vm307, %v349, %v351
      %v353 = vrot.slane %v226, 1
      %v354 = vrot.slane %v227, 1
      %v355 = vsel %vm307, %v353, %v354
      %v356 = vrot.slane %v228, 1
      %v357 = vsel %vm307, %v354, %v356
      %v358 = vrot.slane %v229, 1
      %v359 = vrot.slane %v230, 1
      %v360 = vsel %vm307, %v358, %v359
      %v361 = vrot.slane %v231, 1
      %v362 = vsel %vm307, %v359, %v361
      %v363 = vrot.slane %v232, 1
      %v364 = vrot.slane %v233, 1
      %v365 = vsel %vm307, %v363, %v364
      %v366 = vrot.slane %v234, 1
      %v367 = vsel %vm307, %v364, %v366
      %v368 = vrot.slane %v235, 1
      %v369 = vrot.slane %v236, 1
      %v370 = vsel %vm307, %v368, %v369
      %v371 = vrot.slane %v237, 1
      %v372 = vsel %vm307, %v369, %v371
      %v373 = vrot.slane %v238, 1
      %v374 = vrot.slane %v239, 1
      %v375 = vsel %vm307, %v373, %v374
      %v376 = vrot.slane %v240, 1
      %v377 = vsel %vm307, %v374, %v376
      %v378 = vrot.slane %v241, 1
      %v379 = vrot.slane %v242, 1
      %v380 = vsel %vm307, %v378, %v379
      %v381 = vrot.slane %v243, 1
      %v382 = vsel %vm307, %v379, %v381
      %v383 = vrot.slane %v244, 1
      %v384 = vrot.slane %v245, 1
      %v385 = vsel %vm307, %v383, %v384
      %v386 = vrot.slane %v246, 1
      %v387 = vsel %vm307, %v384, %v386
      %v388 = vrot.slane %v247, 1
      %v389 = vrot.slane %v248, 1
      %v390 = vsel %vm307, %v388, %v389
      %v391 = vrot.slane %v249, 1
      %v392 = vsel %vm307, %v389, %v391
      %393 = vrot.lane.b32.xlu0 %v310, 4
      %v394 = vpop.permute.xlu0 %393
      %395 = vrot.lane.b32.xlu0 %v312, 4
      %v396 = vpop.permute.xlu0 %395
      %397 = vrot.lane.b32.xlu0 %v315, 4
      %v398 = vpop.permute.xlu0 %397
      %399 = vrot.lane.b32.xlu0 %v317, 4
      %v400 = vpop.permute.xlu0 %399
      %401 = vrot.lane.b32.xlu0 %v320, 4
      %v402 = vpop.permute.xlu0 %401
      %403 = vrot.lane.b32.xlu0 %v322, 4
      %v404 = vpop.permute.xlu0 %403
      %405 = vrot.lane.b32.xlu0 %v325, 4
      %v406 = vpop.permute.xlu0 %405
      %407 = vrot.lane.b32.xlu0 %v327, 4
      %v408 = vpop.permute.xlu0 %407
      %409 = vrot.lane.b32.xlu0 %v330, 4
      %v410 = vpop.permute.xlu0 %409
      %411 = vrot.lane.b32.xlu0 %v332, 4
      %v412 = vpop.permute.xlu0 %411
      %413 = vrot.lane.b32.xlu0 %v335, 4
      %v414 = vpop.permute.xlu0 %413
      %415 = vrot.lane.b32.xlu0 %v337, 4
      %v416 = vpop.permute.xlu0 %415
      %417 = vrot.lane.b32.xlu0 %v340, 4
      %v418 = vpop.permute.xlu0 %417
      %419 = vrot.lane.b32.xlu0 %v342, 4
      %v420 = vpop.permute.xlu0 %419
      %421 = vrot.lane.b32.xlu0 %v345, 4
      %v422 = vpop.permute.xlu0 %421
      %423 = vrot.lane.b32.xlu0 %v347, 4
      %v424 = vpop.permute.xlu0 %423
      %425 = vrot.lane.b32.xlu0 %v350, 4
      %v426 = vpop.permute.xlu0 %425
      %427 = vrot.lane.b32.xlu0 %v352, 4
      %v428 = vpop.permute.xlu0 %427
      %429 = vrot.lane.b32.xlu0 %v355, 4
      %v430 = vpop.permute.xlu0 %429
      %431 = vrot.lane.b32.xlu0 %v357, 4
      %v432 = vpop.permute.xlu0 %431
      %433 = vrot.lane.b32.xlu0 %v360, 4
      %v434 = vpop.permute.xlu0 %433
      %435 = vrot.lane.b32.xlu0 %v362, 4
      %v436 = vpop.permute.xlu0 %435
      %437 = vrot.lane.b32.xlu0 %v365, 4
      %v438 = vpop.permute.xlu0 %437
      %439 = vrot.lane.b32.xlu0 %v367, 4
      %v440 = vpop.permute.xlu0 %439
      %441 = vrot.lane.b32.xlu0 %v370, 4
      %v442 = vpop.permute.xlu0 %441
      %443 = vrot.lane.b32.xlu0 %v372, 4
      %v444 = vpop.permute.xlu0 %443
      %445 = vrot.lane.b32.xlu0 %v375, 4
      %v446 = vpop.permute.xlu0 %445
      %447 = vrot.lane.b32.xlu0 %v377, 4
      %v448 = vpop.permute.xlu0 %447
      %449 = vrot.lane.b32.xlu0 %v380, 4
      %v450 = vpop.permute.xlu0 %449
      %451 = vrot.lane.b32.xlu0 %v382, 4
      %v452 = vpop.permute.xlu0 %451
      %453 = vrot.lane.b32.xlu0 %v385, 4
      %v454 = vpop.permute.xlu0 %453
      %455 = vrot.lane.b32.xlu0 %v387, 4
      %v456 = vpop.permute.xlu0 %455
      %457 = vrot.lane.b32.xlu0 %v390, 4
      %v458 = vpop.permute.xlu0 %457
      %459 = vrot.lane.b32.xlu0 %v392, 4
      %v460 = vpop.permute.xlu0 %459
      %vm495 = vcmask 1045504
      %v496 = vrot.slane %v199, 2
      %v497 = vrot.slane %v200, 2
      %v498 = vsel %vm495, %v496, %v497
      %v499 = vrot.slane %v201, 2
      %v500 = vsel %vm495, %v497, %v499
      %v501 = vrot.slane %v202, 2
      %v502 = vrot.slane %v203, 2
      %v503 = vsel %vm495, %v501, %v502
      %v504 = vrot.slane %v204, 2
      %v505 = vsel %vm495, %v502, %v504
      %v506 = vrot.slane %v205, 2
      %v507 = vrot.slane %v206, 2
      %v508 = vsel %vm495, %v506, %v507
      %v509 = vrot.slane %v207, 2
      %v510 = vsel %vm495, %v507, %v509
      %v511 = vrot.slane %v208, 2
      %v512 = vrot.slane %v209, 2
      %v513 = vsel %vm495, %v511, %v512
      %v514 = vrot.slane %v210, 2
      %v515 = vsel %vm495, %v512, %v514
      %v516 = vrot.slane %v211, 2
      %v517 = vrot.slane %v212, 2
      %v518 = vsel %vm495, %v516, %v517
      %v519 = vrot.slane %v213, 2
      %v520 = vsel %vm495, %v517, %v519
      %v521 = vrot.slane %v214, 2
      %v522 = vrot.slane %v215, 2
      %v523 = vsel %vm495, %v521, %v522
      %v524 = vrot.slane %v216, 2
      %v525 = vsel %vm495, %v522, %v524
      %v526 = vrot.slane %v217, 2
      %v527 = vrot.slane %v218, 2
      %v528 = vsel %vm495, %v526, %v527
      %v529 = vrot.slane %v219, 2
      %v530 = vsel %vm495, %v527, %v529
      %v531 = vrot.slane %v220, 2
      %v532 = vrot.slane %v221, 2
      %v533 = vsel %vm495, %v531, %v532
      %v534 = vrot.slane %v222, 2
      %v535 = vsel %vm495, %v532, %v534
      %v536 = vrot.slane %v223, 2
      %v537 = vrot.slane %v224, 2
      %v538 = vsel %vm495, %v536, %v537
      %v539 = vrot.slane %v225, 2
      %v540 = vsel %vm495, %v537, %v539
      %v541 = vrot.slane %v226, 2
      %v542 = vrot.slane %v227, 2
      %v543 = vsel %vm495, %v541, %v542
      %v544 = vrot.slane %v228, 2
      %v545 = vsel %vm495, %v542, %v544
      %v546 = vrot.slane %v229, 2
      %v547 = vrot.slane %v230, 2
      %v548 = vsel %vm495, %v546, %v547
      %v549 = vrot.slane %v231, 2
      %v550 = vsel %vm495, %v547, %v549
      %v551 = vrot.slane %v232, 2
      %v552 = vrot.slane %v233, 2
      %v553 = vsel %vm495, %v551, %v552
      %v554 = vrot.slane %v234, 2
      %v555 = vsel %vm495, %v552, %v554
      %v556 = vrot.slane %v235, 2
      %v557 = vrot.slane %v236, 2
      %v558 = vsel %vm495, %v556, %v557
      %v559 = vrot.slane %v237, 2
      %v560 = vsel %vm495, %v557, %v559
      %v561 = vrot.slane %v238, 2
      %v562 = vrot.slane %v239, 2
      %v563 = vsel %vm495, %v561, %v562
      %v564 = vrot.slane %v240, 2
      %v565 = vsel %vm495, %v562, %v564
      %v566 = vrot.slane %v241, 2
      %v567 = vrot.slane %v242, 2
      %v568 = vsel %vm495, %v566, %v567
      %v569 = vrot.slane %v243, 2
      %v570 = vsel %vm495, %v567, %v569
      %v571 = vrot.slane %v244, 2
      %v572 = vrot.slane %v245, 2
      %v573 = vsel %vm495, %v571, %v572
      %v574 = vrot.slane %v246, 2
      %v575 = vsel %vm495, %v572, %v574
      %v576 = vrot.slane %v247, 2
      %v577 = vrot.slane %v248, 2
      %v578 = vsel %vm495, %v576, %v577
      %v579 = vrot.slane %v249, 2
      %v580 = vsel %vm495, %v577, %v579
      %581 = vrot.lane.b32.xlu0 %v498, 8
      %v582 = vpop.permute.xlu0 %581
      %583 = vrot.lane.b32.xlu0 %v500, 8
      %v584 = vpop.permute.xlu0 %583
      %585 = vrot.lane.b32.xlu0 %v503, 8
      %v586 = vpop.permute.xlu0 %585
      %587 = vrot.lane.b32.xlu0 %v505, 8
      %v588 = vpop.permute.xlu0 %587
      %589 = vrot.lane.b32.xlu0 %v508, 8
      %v590 = vpop.permute.xlu0 %589
      %591 = vrot.lane.b32.xlu0 %v510, 8
      %v592 = vpop.permute.xlu0 %591
      %593 = vrot.lane.b32.xlu0 %v513, 8
      %v594 = vpop.permute.xlu0 %593
      %595 = vrot.lane.b32.xlu0 %v515, 8
      %v596 = vpop.permute.xlu0 %595
      %597 = vrot.lane.b32.xlu0 %v518, 8
      %v598 = vpop.permute.xlu0 %597
      %599 = vrot.lane.b32.xlu0 %v520, 8
      %v600 = vpop.permute.xlu0 %599
      %601 = vrot.lane.b32.xlu0 %v523, 8
      %v602 = vpop.permute.xlu0 %601
      %603 = vrot.lane.b32.xlu0 %v525, 8
      %v604 = vpop.permute.xlu0 %603
      %605 = vrot.lane.b32.xlu0 %v528, 8
      %v606 = vpop.permute.xlu0 %605
      %607 = vrot.lane.b32.xlu0 %v530, 8
      %v608 = vpop.permute.xlu0 %607
      %609 = vrot.lane.b32.xlu0 %v533, 8
      %v610 = vpop.permute.xlu0 %609
      %611 = vrot.lane.b32.xlu0 %v535, 8
      %v612 = vpop.permute.xlu0 %611
      %613 = vrot.lane.b32.xlu0 %v538, 8
      %v614 = vpop.permute.xlu0 %613
      %615 = vrot.lane.b32.xlu0 %v540, 8
      %v616 = vpop.permute.xlu0 %615
      %617 = vrot.lane.b32.xlu0 %v543, 8
      %v618 = vpop.permute.xlu0 %617
      %619 = vrot.lane.b32.xlu0 %v545, 8
      %v620 = vpop.permute.xlu0 %619
      %621 = vrot.lane.b32.xlu0 %v548, 8
      %v622 = vpop.permute.xlu0 %621
      %623 = vrot.lane.b32.xlu0 %v550, 8
      %v624 = vpop.permute.xlu0 %623
      %625 = vrot.lane.b32.xlu0 %v553, 8
      %v626 = vpop.permute.xlu0 %625
      %627 = vrot.lane.b32.xlu0 %v555, 8
      %v628 = vpop.permute.xlu0 %627
      %629 = vrot.lane.b32.xlu0 %v558, 8
      %v630 = vpop.permute.xlu0 %629
      %631 = vrot.lane.b32.xlu0 %v560, 8
      %v632 = vpop.permute.xlu0 %631
      %633 = vrot.lane.b32.xlu0 %v563, 8
      %v634 = vpop.permute.xlu0 %633
      %635 = vrot.lane.b32.xlu0 %v565, 8
      %v636 = vpop.permute.xlu0 %635
      %637 = vrot.lane.b32.xlu0 %v568, 8
      %v638 = vpop.permute.xlu0 %637
      %639 = vrot.lane.b32.xlu0 %v570, 8
      %v640 = vpop.permute.xlu0 %639
      %641 = vrot.lane.b32.xlu0 %v573, 8
      %v642 = vpop.permute.xlu0 %641
      %643 = vrot.lane.b32.xlu0 %v575, 8
      %v644 = vpop.permute.xlu0 %643
      %645 = vrot.lane.b32.xlu0 %v578, 8
      %v646 = vpop.permute.xlu0 %645
      %647 = vrot.lane.b32.xlu0 %v580, 8
      %v648 = vpop.permute.xlu0 %647
      %685 = vrot.lane.b32.xlu0 %v202, 12
      %v686 = vpop.permute.xlu0 %685
      %687 = vrot.lane.b32.xlu0 %v203, 12
      %v688 = vpop.permute.xlu0 %687
      %689 = vrot.lane.b32.xlu0 %v205, 12
      %v690 = vpop.permute.xlu0 %689
      %691 = vrot.lane.b32.xlu0 %v206, 12
      %v692 = vpop.permute.xlu0 %691
      %693 = vrot.lane.b32.xlu0 %v208, 12
      %v694 = vpop.permute.xlu0 %693
      %695 = vrot.lane.b32.xlu0 %v209, 12
      %v696 = vpop.permute.xlu0 %695
      %697 = vrot.lane.b32.xlu0 %v211, 12
      %v698 = vpop.permute.xlu0 %697
      %699 = vrot.lane.b32.xlu0 %v212, 12
      %v700 = vpop.permute.xlu0 %699
      %701 = vrot.lane.b32.xlu0 %v214, 12
      %v702 = vpop.permute.xlu0 %701
      %703 = vrot.lane.b32.xlu0 %v215, 12
      %v704 = vpop.permute.xlu0 %703
      %705 = vrot.lane.b32.xlu0 %v217, 12
      %v706 = vpop.permute.xlu0 %705
      %707 = vrot.lane.b32.xlu0 %v218, 12
      %v708 = vpop.permute.xlu0 %707
      %709 = vrot.lane.b32.xlu0 %v220, 12
      %v710 = vpop.permute.xlu0 %709
      %711 = vrot.lane.b32.xlu0 %v221, 12
      %v712 = vpop.permute.xlu0 %711
      %713 = vrot.lane.b32.xlu0 %v223, 12
      %v714 = vpop.permute.xlu0 %713
      %715 = vrot.lane.b32.xlu0 %v224, 12
      %v716 = vpop.permute.xlu0 %715
      %717 = vrot.lane.b32.xlu0 %v226, 12
      %v718 = vpop.permute.xlu0 %717
      %719 = vrot.lane.b32.xlu0 %v227, 12
      %v720 = vpop.permute.xlu0 %719
      %721 = vrot.lane.b32.xlu0 %v229, 12
      %v722 = vpop.permute.xlu0 %721
      %723 = vrot.lane.b32.xlu0 %v230, 12
      %v724 = vpop.permute.xlu0 %723
      %725 = vrot.lane.b32.xlu0 %v232, 12
      %v726 = vpop.permute.xlu0 %725
      %727 = vrot.lane.b32.xlu0 %v233, 12
      %v728 = vpop.permute.xlu0 %727
      %729 = vrot.lane.b32.xlu0 %v235, 12
      %v730 = vpop.permute.xlu0 %729
      %731 = vrot.lane.b32.xlu0 %v236, 12
      %v732 = vpop.permute.xlu0 %731
      %733 = vrot.lane.b32.xlu0 %v238, 12
      %v734 = vpop.permute.xlu0 %733
      %735 = vrot.lane.b32.xlu0 %v239, 12
      %v736 = vpop.permute.xlu0 %735
      %737 = vrot.lane.b32.xlu0 %v241, 12
      %v738 = vpop.permute.xlu0 %737
      %739 = vrot.lane.b32.xlu0 %v242, 12
      %v740 = vpop.permute.xlu0 %739
      %741 = vrot.lane.b32.xlu0 %v244, 12
      %v742 = vpop.permute.xlu0 %741
      %743 = vrot.lane.b32.xlu0 %v245, 12
      %v744 = vpop.permute.xlu0 %743
      %745 = vrot.lane.b32.xlu0 %v247, 12
      %v746 = vpop.permute.xlu0 %745
      %747 = vrot.lane.b32.xlu0 %v248, 12
      %v748 = vpop.permute.xlu0 %747
      %749 = vrot.lane.b32.xlu0 %v250, 12
      %v750 = vpop.permute.xlu0 %749
      %751 = vrot.lane.b32.xlu0 %v251, 12
      %v752 = vpop.permute.xlu0 %751
      %v788 = vrot.slane %v250, 1
      %v789 = vrot.slane %v251, 1
      %v790 = vsel %vm307, %v788, %v789
      %v791 = vrot.slane %v252, 1
      %v792 = vsel %vm307, %v789, %v791
      %793 = vrot.lane.b32.xlu0 %v315, 16
      %v794 = vpop.permute.xlu0 %793
      %795 = vrot.lane.b32.xlu0 %v317, 16
      %v796 = vpop.permute.xlu0 %795
      %797 = vrot.lane.b32.xlu0 %v320, 16
      %v798 = vpop.permute.xlu0 %797
      %799 = vrot.lane.b32.xlu0 %v322, 16
      %v800 = vpop.permute.xlu0 %799
      %801 = vrot.lane.b32.xlu0 %v325, 16
      %v802 = vpop.permute.xlu0 %801
      %803 = vrot.lane.b32.xlu0 %v327, 16
      %v804 = vpop.permute.xlu0 %803
      %805 = vrot.lane.b32.xlu0 %v330, 16
      %v806 = vpop.permute.xlu0 %805
      %807 = vrot.lane.b32.xlu0 %v332, 16
      %v808 = vpop.permute.xlu0 %807
      %809 = vrot.lane.b32.xlu0 %v335, 16
      %v810 = vpop.permute.xlu0 %809
      %811 = vrot.lane.b32.xlu0 %v337, 16
      %v812 = vpop.permute.xlu0 %811
      %813 = vrot.lane.b32.xlu0 %v340, 16
      %v814 = vpop.permute.xlu0 %813
      %815 = vrot.lane.b32.xlu0 %v342, 16
      %v816 = vpop.permute.xlu0 %815
      %817 = vrot.lane.b32.xlu0 %v345, 16
      %v818 = vpop.permute.xlu0 %817
      %819 = vrot.lane.b32.xlu0 %v347, 16
      %v820 = vpop.permute.xlu0 %819
      %821 = vrot.lane.b32.xlu0 %v350, 16
      %v822 = vpop.permute.xlu0 %821
      %823 = vrot.lane.b32.xlu0 %v352, 16
      %v824 = vpop.permute.xlu0 %823
      %825 = vrot.lane.b32.xlu0 %v355, 16
      %v826 = vpop.permute.xlu0 %825
      %827 = vrot.lane.b32.xlu0 %v357, 16
      %v828 = vpop.permute.xlu0 %827
      %829 = vrot.lane.b32.xlu0 %v360, 16
      %v830 = vpop.permute.xlu0 %829
      %831 = vrot.lane.b32.xlu0 %v362, 16
      %v832 = vpop.permute.xlu0 %831
      %833 = vrot.lane.b32.xlu0 %v365, 16
      %v834 = vpop.permute.xlu0 %833
      %835 = vrot.lane.b32.xlu0 %v367, 16
      %v836 = vpop.permute.xlu0 %835
      %837 = vrot.lane.b32.xlu0 %v370, 16
      %v838 = vpop.permute.xlu0 %837
      %839 = vrot.lane.b32.xlu0 %v372, 16
      %v840 = vpop.permute.xlu0 %839
      %841 = vrot.lane.b32.xlu0 %v375, 16
      %v842 = vpop.permute.xlu0 %841
      %843 = vrot.lane.b32.xlu0 %v377, 16
      %v844 = vpop.permute.xlu0 %843
      %845 = vrot.lane.b32.xlu0 %v380, 16
      %v846 = vpop.permute.xlu0 %845
      %847 = vrot.lane.b32.xlu0 %v382, 16
      %v848 = vpop.permute.xlu0 %847
      %849 = vrot.lane.b32.xlu0 %v385, 16
      %v850 = vpop.permute.xlu0 %849
      %851 = vrot.lane.b32.xlu0 %v387, 16
      %v852 = vpop.permute.xlu0 %851
      %853 = vrot.lane.b32.xlu0 %v390, 16
      %v854 = vpop.permute.xlu0 %853
      %855 = vrot.lane.b32.xlu0 %v392, 16
      %v856 = vpop.permute.xlu0 %855
      %857 = vrot.lane.b32.xlu0 %v790, 16
      %v858 = vpop.permute.xlu0 %857
      %859 = vrot.lane.b32.xlu0 %v792, 16
      %v860 = vpop.permute.xlu0 %859
      %v895 = vrot.slane %v250, 2
      %v896 = vrot.slane %v251, 2
      %v897 = vsel %vm495, %v895, %v896
      %v898 = vrot.slane %v252, 2
      %v899 = vsel %vm495, %v896, %v898
      %900 = vrot.lane.b32.xlu0 %v503, 20
      %v901 = vpop.permute.xlu0 %900
      %902 = vrot.lane.b32.xlu0 %v505, 20
      %v903 = vpop.permute.xlu0 %902
      %904 = vrot.lane.b32.xlu0 %v508, 20
      %v905 = vpop.permute.xlu0 %904
      %906 = vrot.lane.b32.xlu0 %v510, 20
      %v907 = vpop.permute.xlu0 %906
      %908 = vrot.lane.b32.xlu0 %v513, 20
      %v909 = vpop.permute.xlu0 %908
      %910 = vrot.lane.b32.xlu0 %v515, 20
      %v911 = vpop.permute.xlu0 %910
      %912 = vrot.lane.b32.xlu0 %v518, 20
      %v913 = vpop.permute.xlu0 %912
      %914 = vrot.lane.b32.xlu0 %v520, 20
      %v915 = vpop.permute.xlu0 %914
      %916 = vrot.lane.b32.xlu0 %v523, 20
      %v917 = vpop.permute.xlu0 %916
      %918 = vrot.lane.b32.xlu0 %v525, 20
      %v919 = vpop.permute.xlu0 %918
      %920 = vrot.lane.b32.xlu0 %v528, 20
      %v921 = vpop.permute.xlu0 %920
      %922 = vrot.lane.b32.xlu0 %v530, 20
      %v923 = vpop.permute.xlu0 %922
      %924 = vrot.lane.b32.xlu0 %v533, 20
      %v925 = vpop.permute.xlu0 %924
      %926 = vrot.lane.b32.xlu0 %v535, 20
      %v927 = vpop.permute.xlu0 %926
      %928 = vrot.lane.b32.xlu0 %v538, 20
      %v929 = vpop.permute.xlu0 %928
      %930 = vrot.lane.b32.xlu0 %v540, 20
      %v931 = vpop.permute.xlu0 %930
      %932 = vrot.lane.b32.xlu0 %v543, 20
      %v933 = vpop.permute.xlu0 %932
      %934 = vrot.lane.b32.xlu0 %v545, 20
      %v935 = vpop.permute.xlu0 %934
      %936 = vrot.lane.b32.xlu0 %v548, 20
      %v937 = vpop.permute.xlu0 %936
      %938 = vrot.lane.b32.xlu0 %v550, 20
      %v939 = vpop.permute.xlu0 %938
      %940 = vrot.lane.b32.xlu0 %v553, 20
      %v941 = vpop.permute.xlu0 %940
      %942 = vrot.lane.b32.xlu0 %v555, 20
      %v943 = vpop.permute.xlu0 %942
      %944 = vrot.lane.b32.xlu0 %v558, 20
      %v945 = vpop.permute.xlu0 %944
      %946 = vrot.lane.b32.xlu0 %v560, 20
      %v947 = vpop.permute.xlu0 %946
      %948 = vrot.lane.b32.xlu0 %v563, 20
      %v949 = vpop.permute.xlu0 %948
      %950 = vrot.lane.b32.xlu0 %v565, 20
      %v951 = vpop.permute.xlu0 %950
      %952 = vrot.lane.b32.xlu0 %v568, 20
      %v953 = vpop.permute.xlu0 %952
      %954 = vrot.lane.b32.xlu0 %v570, 20
      %v955 = vpop.permute.xlu0 %954
      %956 = vrot.lane.b32.xlu0 %v573, 20
      %v957 = vpop.permute.xlu0 %956
      %958 = vrot.lane.b32.xlu0 %v575, 20
      %v959 = vpop.permute.xlu0 %958
      %960 = vrot.lane.b32.xlu0 %v578, 20
      %v961 = vpop.permute.xlu0 %960
      %962 = vrot.lane.b32.xlu0 %v580, 20
      %v963 = vpop.permute.xlu0 %962
      %964 = vrot.lane.b32.xlu0 %v897, 20
      %v965 = vpop.permute.xlu0 %964
      %966 = vrot.lane.b32.xlu0 %v899, 20
      %v967 = vpop.permute.xlu0 %966
      %1004 = vrot.lane.b32.xlu0 %v205, 24
      %v1005 = vpop.permute.xlu0 %1004
      %1006 = vrot.lane.b32.xlu0 %v206, 24
      %v1007 = vpop.permute.xlu0 %1006
      %1008 = vrot.lane.b32.xlu0 %v208, 24
      %v1009 = vpop.permute.xlu0 %1008
      %1010 = vrot.lane.b32.xlu0 %v209, 24
      %v1011 = vpop.permute.xlu0 %1010
      %1012 = vrot.lane.b32.xlu0 %v211, 24
      %v1013 = vpop.permute.xlu0 %1012
      %1014 = vrot.lane.b32.xlu0 %v212, 24
      %v1015 = vpop.permute.xlu0 %1014
      %1016 = vrot.lane.b32.xlu0 %v214, 24
      %v1017 = vpop.permute.xlu0 %1016
      %1018 = vrot.lane.b32.xlu0 %v215, 24
      %v1019 = vpop.permute.xlu0 %1018
      %1020 = vrot.lane.b32.xlu0 %v217, 24
      %v1021 = vpop.permute.xlu0 %1020
      %1022 = vrot.lane.b32.xlu0 %v218, 24
      %v1023 = vpop.permute.xlu0 %1022
      %1024 = vrot.lane.b32.xlu0 %v220, 24
      %v1025 = vpop.permute.xlu0 %1024
      %1026 = vrot.lane.b32.xlu0 %v221, 24
      %v1027 = vpop.permute.xlu0 %1026
      %1028 = vrot.lane.b32.xlu0 %v223, 24
      %v1029 = vpop.permute.xlu0 %1028
      %1030 = vrot.lane.b32.xlu0 %v224, 24
      %v1031 = vpop.permute.xlu0 %1030
      %1032 = vrot.lane.b32.xlu0 %v226, 24
      %v1033 = vpop.permute.xlu0 %1032
      %1034 = vrot.lane.b32.xlu0 %v227, 24
      %v1035 = vpop.permute.xlu0 %1034
      %1036 = vrot.lane.b32.xlu0 %v229, 24
      %v1037 = vpop.permute.xlu0 %1036
      %1038 = vrot.lane.b32.xlu0 %v230, 24
      %v1039 = vpop.permute.xlu0 %1038
      %1040 = vrot.lane.b32.xlu0 %v232, 24
      %v1041 = vpop.permute.xlu0 %1040
      %1042 = vrot.lane.b32.xlu0 %v233, 24
      %v1043 = vpop.permute.xlu0 %1042
      %1044 = vrot.lane.b32.xlu0 %v235, 24
      %v1045 = vpop.permute.xlu0 %1044
      %1046 = vrot.lane.b32.xlu0 %v236, 24
      %v1047 = vpop.permute.xlu0 %1046
      %1048 = vrot.lane.b32.xlu0 %v238, 24
      %v1049 = vpop.permute.xlu0 %1048
      %1050 = vrot.lane.b32.xlu0 %v239, 24
      %v1051 = vpop.permute.xlu0 %1050
      %1052 = vrot.lane.b32.xlu0 %v241, 24
      %v1053 = vpop.permute.xlu0 %1052
      %1054 = vrot.lane.b32.xlu0 %v242, 24
      %v1055 = vpop.permute.xlu0 %1054
      %1056 = vrot.lane.b32.xlu0 %v244, 24
      %v1057 = vpop.permute.xlu0 %1056
      %1058 = vrot.lane.b32.xlu0 %v245, 24
      %v1059 = vpop.permute.xlu0 %1058
      %1060 = vrot.lane.b32.xlu0 %v247, 24
      %v1061 = vpop.permute.xlu0 %1060
      %1062 = vrot.lane.b32.xlu0 %v248, 24
      %v1063 = vpop.permute.xlu0 %1062
      %1064 = vrot.lane.b32.xlu0 %v250, 24
      %v1065 = vpop.permute.xlu0 %1064
      %1066 = vrot.lane.b32.xlu0 %v251, 24
      %v1067 = vpop.permute.xlu0 %1066
      %1068 = vrot.lane.b32.xlu0 %v253, 24
      %v1069 = vpop.permute.xlu0 %1068
      %1070 = vrot.lane.b32.xlu0 %v254, 24
      %v1071 = vpop.permute.xlu0 %1070
      %v1107 = vrot.slane %v253, 1
      %v1108 = vrot.slane %v254, 1
      %v1109 = vsel %vm307, %v1107, %v1108
      %v1110 = vrot.slane %v255, 1
      %v1111 = vsel %vm307, %v1108, %v1110
      %1112 = vrot.lane.b32.xlu0 %v320, 28
      %v1113 = vpop.permute.xlu0 %1112
      %1114 = vrot.lane.b32.xlu0 %v322, 28
      %v1115 = vpop.permute.xlu0 %1114
      %1116 = vrot.lane.b32.xlu0 %v325, 28
      %v1117 = vpop.permute.xlu0 %1116
      %1118 = vrot.lane.b32.xlu0 %v327, 28
      %v1119 = vpop.permute.xlu0 %1118
      %1120 = vrot.lane.b32.xlu0 %v330, 28
      %v1121 = vpop.permute.xlu0 %1120
      %1122 = vrot.lane.b32.xlu0 %v332, 28
      %v1123 = vpop.permute.xlu0 %1122
      %1124 = vrot.lane.b32.xlu0 %v335, 28
      %v1125 = vpop.permute.xlu0 %1124
      %1126 = vrot.lane.b32.xlu0 %v337, 28
      %v1127 = vpop.permute.xlu0 %1126
      %1128 = vrot.lane.b32.xlu0 %v340, 28
      %v1129 = vpop.permute.xlu0 %1128
      %1130 = vrot.lane.b32.xlu0 %v342, 28
      %v1131 = vpop.permute.xlu0 %1130
      %1132 = vrot.lane.b32.xlu0 %v345, 28
      %v1133 = vpop.permute.xlu0 %1132
      %1134 = vrot.lane.b32.xlu0 %v347, 28
      %v1135 = vpop.permute.xlu0 %1134
      %1136 = vrot.lane.b32.xlu0 %v350, 28
      %v1137 = vpop.permute.xlu0 %1136
      %1138 = vrot.lane.b32.xlu0 %v352, 28
      %v1139 = vpop.permute.xlu0 %1138
      %1140 = vrot.lane.b32.xlu0 %v355, 28
      %v1141 = vpop.permute.xlu0 %1140
      %1142 = vrot.lane.b32.xlu0 %v357, 28
      %v1143 = vpop.permute.xlu0 %1142
      %1144 = vrot.lane.b32.xlu0 %v360, 28
      %v1145 = vpop.permute.xlu0 %1144
      %1146 = vrot.lane.b32.xlu0 %v362, 28
      %v1147 = vpop.permute.xlu0 %1146
      %1148 = vrot.lane.b32.xlu0 %v365, 28
      %v1149 = vpop.permute.xlu0 %1148
      %1150 = vrot.lane.b32.xlu0 %v367, 28
      %v1151 = vpop.permute.xlu0 %1150
      %1152 = vrot.lane.b32.xlu0 %v370, 28
      %v1153 = vpop.permute.xlu0 %1152
      %1154 = vrot.lane.b32.xlu0 %v372, 28
      %v1155 = vpop.permute.xlu0 %1154
      %1156 = vrot.lane.b32.xlu0 %v375, 28
      %v1157 = vpop.permute.xlu0 %1156
      %1158 = vrot.lane.b32.xlu0 %v377, 28
      %v1159 = vpop.permute.xlu0 %1158
      %1160 = vrot.lane.b32.xlu0 %v380, 28
      %v1161 = vpop.permute.xlu0 %1160
      %1162 = vrot.lane.b32.xlu0 %v382, 28
      %v1163 = vpop.permute.xlu0 %1162
      %1164 = vrot.lane.b32.xlu0 %v385, 28
      %v1165 = vpop.permute.xlu0 %1164
      %1166 = vrot.lane.b32.xlu0 %v387, 28
      %v1167 = vpop.permute.xlu0 %1166
      %1168 = vrot.lane.b32.xlu0 %v390, 28
      %v1169 = vpop.permute.xlu0 %1168
      %1170 = vrot.lane.b32.xlu0 %v392, 28
      %v1171 = vpop.permute.xlu0 %1170
      %1172 = vrot.lane.b32.xlu0 %v790, 28
      %v1173 = vpop.permute.xlu0 %1172
      %1174 = vrot.lane.b32.xlu0 %v792, 28
      %v1175 = vpop.permute.xlu0 %1174
      %1176 = vrot.lane.b32.xlu0 %v1109, 28
      %v1177 = vpop.permute.xlu0 %1176
      %1178 = vrot.lane.b32.xlu0 %v1111, 28
      %v1179 = vpop.permute.xlu0 %1178
      %v1214 = vrot.slane %v253, 2
      %v1215 = vrot.slane %v254, 2
      %v1216 = vsel %vm495, %v1214, %v1215
      %v1217 = vrot.slane %v255, 2
      %v1218 = vsel %vm495, %v1215, %v1217
      %1219 = vrot.lane.b32.xlu0 %v508, 32
      %v1220 = vpop.permute.xlu0 %1219
      %1221 = vrot.lane.b32.xlu0 %v510, 32
      %v1222 = vpop.permute.xlu0 %1221
      %1223 = vrot.lane.b32.xlu0 %v513, 32
      %v1224 = vpop.permute.xlu0 %1223
      %1225 = vrot.lane.b32.xlu0 %v515, 32
      %v1226 = vpop.permute.xlu0 %1225
      %1227 = vrot.lane.b32.xlu0 %v518, 32
      %v1228 = vpop.permute.xlu0 %1227
      %1229 = vrot.lane.b32.xlu0 %v520, 32
      %v1230 = vpop.permute.xlu0 %1229
      %1231 = vrot.lane.b32.xlu0 %v523, 32
      %v1232 = vpop.permute.xlu0 %1231
      %1233 = vrot.lane.b32.xlu0 %v525, 32
      %v1234 = vpop.permute.xlu0 %1233
      %1235 = vrot.lane.b32.xlu0 %v528, 32
      %v1236 = vpop.permute.xlu0 %1235
      %1237 = vrot.lane.b32.xlu0 %v530, 32
      %v1238 = vpop.permute.xlu0 %1237
      %1239 = vrot.lane.b32.xlu0 %v533, 32
      %v1240 = vpop.permute.xlu0 %1239
      %1241 = vrot.lane.b32.xlu0 %v535, 32
      %v1242 = vpop.permute.xlu0 %1241
      %1243 = vrot.lane.b32.xlu0 %v538, 32
      %v1244 = vpop.permute.xlu0 %1243
      %1245 = vrot.lane.b32.xlu0 %v540, 32
      %v1246 = vpop.permute.xlu0 %1245
      %1247 = vrot.lane.b32.xlu0 %v543, 32
      %v1248 = vpop.permute.xlu0 %1247
      %1249 = vrot.lane.b32.xlu0 %v545, 32
      %v1250 = vpop.permute.xlu0 %1249
      %1251 = vrot.lane.b32.xlu0 %v548, 32
      %v1252 = vpop.permute.xlu0 %1251
      %1253 = vrot.lane.b32.xlu0 %v550, 32
      %v1254 = vpop.permute.xlu0 %1253
      %1255 = vrot.lane.b32.xlu0 %v553, 32
      %v1256 = vpop.permute.xlu0 %1255
      %1257 = vrot.lane.b32.xlu0 %v555, 32
      %v1258 = vpop.permute.xlu0 %1257
      %1259 = vrot.lane.b32.xlu0 %v558, 32
      %v1260 = vpop.permute.xlu0 %1259
      %1261 = vrot.lane.b32.xlu0 %v560, 32
      %v1262 = vpop.permute.xlu0 %1261
      %1263 = vrot.lane.b32.xlu0 %v563, 32
      %v1264 = vpop.permute.xlu0 %1263
      %1265 = vrot.lane.b32.xlu0 %v565, 32
      %v1266 = vpop.permute.xlu0 %1265
      %1267 = vrot.lane.b32.xlu0 %v568, 32
      %v1268 = vpop.permute.xlu0 %1267
      %1269 = vrot.lane.b32.xlu0 %v570, 32
      %v1270 = vpop.permute.xlu0 %1269
      %1271 = vrot.lane.b32.xlu0 %v573, 32
      %v1272 = vpop.permute.xlu0 %1271
      %1273 = vrot.lane.b32.xlu0 %v575, 32
      %v1274 = vpop.permute.xlu0 %1273
      %1275 = vrot.lane.b32.xlu0 %v578, 32
      %v1276 = vpop.permute.xlu0 %1275
      %1277 = vrot.lane.b32.xlu0 %v580, 32
      %v1278 = vpop.permute.xlu0 %1277
      %1279 = vrot.lane.b32.xlu0 %v897, 32
      %v1280 = vpop.permute.xlu0 %1279
      %1281 = vrot.lane.b32.xlu0 %v899, 32
      %v1282 = vpop.permute.xlu0 %1281
      %1283 = vrot.lane.b32.xlu0 %v1216, 32
      %v1284 = vpop.permute.xlu0 %1283
      %1285 = vrot.lane.b32.xlu0 %v1218, 32
      %v1286 = vpop.permute.xlu0 %1285
      %vm1321 = vcmask 31744
      %v1322 = vsel %vm1321, %v199, %v394
      %v1323 = vsel %vm1321, %v200, %v396
      %v1324 = vsel %vm1321, %v202, %v398
      %v1325 = vsel %vm1321, %v203, %v400
      %v1326 = vsel %vm1321, %v205, %v402
      %v1327 = vsel %vm1321, %v206, %v404
      %v1328 = vsel %vm1321, %v208, %v406
      %v1329 = vsel %vm1321, %v209, %v408
      %v1330 = vsel %vm1321, %v211, %v410
      %v1331 = vsel %vm1321, %v212, %v412
      %v1332 = vsel %vm1321, %v214, %v414
      %v1333 = vsel %vm1321, %v215, %v416
      %v1334 = vsel %vm1321, %v217, %v418
      %v1335 = vsel %vm1321, %v218, %v420
      %v1336 = vsel %vm1321, %v220, %v422
      %v1337 = vsel %vm1321, %v221, %v424
      %v1338 = vsel %vm1321, %v223, %v426
      %v1339 = vsel %vm1321, %v224, %v428
      %v1340 = vsel %vm1321, %v226, %v430
      %v1341 = vsel %vm1321, %v227, %v432
      %v1342 = vsel %vm1321, %v229, %v434
      %v1343 = vsel %vm1321, %v230, %v436
      %v1344 = vsel %vm1321, %v232, %v438
      %v1345 = vsel %vm1321, %v233, %v440
      %v1346 = vsel %vm1321, %v235, %v442
      %v1347 = vsel %vm1321, %v236, %v444
      %v1348 = vsel %vm1321, %v238, %v446
      %v1349 = vsel %vm1321, %v239, %v448
      %v1350 = vsel %vm1321, %v241, %v450
      %v1351 = vsel %vm1321, %v242, %v452
      %v1352 = vsel %vm1321, %v244, %v454
      %v1353 = vsel %vm1321, %v245, %v456
      %v1354 = vsel %vm1321, %v247, %v458
      %v1355 = vsel %vm1321, %v248, %v460
      %vm1356 = vcmask 64512
      %v1357 = vsel %vm1356, %v1322, %v582
      %v1358 = vsel %vm1356, %v1323, %v584
      %v1359 = vsel %vm1356, %v1324, %v586
      %v1360 = vsel %vm1356, %v1325, %v588
      %v1361 = vsel %vm1356, %v1326, %v590
      %v1362 = vsel %vm1356, %v1327, %v592
      %v1363 = vsel %vm1356, %v1328, %v594
      %v1364 = vsel %vm1356, %v1329, %v596
      %v1365 = vsel %vm1356, %v1330, %v598
      %v1366 = vsel %vm1356, %v1331, %v600
      %v1367 = vsel %vm1356, %v1332, %v602
      %v1368 = vsel %vm1356, %v1333, %v604
      %v1369 = vsel %vm1356, %v1334, %v606
      %v1370 = vsel %vm1356, %v1335, %v608
      %v1371 = vsel %vm1356, %v1336, %v610
      %v1372 = vsel %vm1356, %v1337, %v612
      %v1373 = vsel %vm1356, %v1338, %v614
      %v1374 = vsel %vm1356, %v1339, %v616
      %v1375 = vsel %vm1356, %v1340, %v618
      %v1376 = vsel %vm1356, %v1341, %v620
      %v1377 = vsel %vm1356, %v1342, %v622
      %v1378 = vsel %vm1356, %v1343, %v624
      %v1379 = vsel %vm1356, %v1344, %v626
      %v1380 = vsel %vm1356, %v1345, %v628
      %v1381 = vsel %vm1356, %v1346, %v630
      %v1382 = vsel %vm1356, %v1347, %v632
      %v1383 = vsel %vm1356, %v1348, %v634
      %v1384 = vsel %vm1356, %v1349, %v636
      %v1385 = vsel %vm1356, %v1350, %v638
      %v1386 = vsel %vm1356, %v1351, %v640
      %v1387 = vsel %vm1356, %v1352, %v642
      %v1388 = vsel %vm1356, %v1353, %v644
      %v1389 = vsel %vm1356, %v1354, %v646
      %v1390 = vsel %vm1356, %v1355, %v648
      %vm1391 = vcmask 97280
      %v1392 = vsel %vm1391, %v1357, %v686
      %v1393 = vsel %vm1391, %v1358, %v688
      %v1394 = vsel %vm1391, %v1359, %v690
      %v1395 = vsel %vm1391, %v1360, %v692
      %v1396 = vsel %vm1391, %v1361, %v694
      %v1397 = vsel %vm1391, %v1362, %v696
      %v1398 = vsel %vm1391, %v1363, %v698
      %v1399 = vsel %vm1391, %v1364, %v700
      %v1400 = vsel %vm1391, %v1365, %v702
      %v1401 = vsel %vm1391, %v1366, %v704
      %v1402 = vsel %vm1391, %v1367, %v706
      %v1403 = vsel %vm1391, %v1368, %v708
      %v1404 = vsel %vm1391, %v1369, %v710
      %v1405 = vsel %vm1391, %v1370, %v712
      %v1406 = vsel %vm1391, %v1371, %v714
      %v1407 = vsel %vm1391, %v1372, %v716
      %v1408 = vsel %vm1391, %v1373, %v718
      %v1409 = vsel %vm1391, %v1374, %v720
      %v1410 = vsel %vm1391, %v1375, %v722
      %v1411 = vsel %vm1391, %v1376, %v724
      %v1412 = vsel %vm1391, %v1377, %v726
      %v1413 = vsel %vm1391, %v1378, %v728
      %v1414 = vsel %vm1391, %v1379, %v730
      %v1415 = vsel %vm1391, %v1380, %v732
      %v1416 = vsel %vm1391, %v1381, %v734
      %v1417 = vsel %vm1391, %v1382, %v736
      %v1418 = vsel %vm1391, %v1383, %v738
      %v1419 = vsel %vm1391, %v1384, %v740
      %v1420 = vsel %vm1391, %v1385, %v742
      %v1421 = vsel %vm1391, %v1386, %v744
      %v1422 = vsel %vm1391, %v1387, %v746
      %v1423 = vsel %vm1391, %v1388, %v748
      %v1424 = vsel %vm1391, %v1389, %v750
      %v1425 = vsel %vm1391, %v1390, %v752
      %vm1426 = vcmask 130048
      %v1427 = vsel %vm1426, %v1392, %v794
      %v1428 = vsel %vm1426, %v1393, %v796
      %v1429 = vsel %vm1426, %v1394, %v798
      %v1430 = vsel %vm1426, %v1395, %v800
      %v1431 = vsel %vm1426, %v1396, %v802
      %v1432 = vsel %vm1426, %v1397, %v804
      %v1433 = vsel %vm1426, %v1398, %v806
      %v1434 = vsel %vm1426, %v1399, %v808
      %v1435 = vsel %vm1426, %v1400, %v810
      %v1436 = vsel %vm1426, %v1401, %v812
      %v1437 = vsel %vm1426, %v1402, %v814
      %v1438 = vsel %vm1426, %v1403, %v816
      %v1439 = vsel %vm1426, %v1404, %v818
      %v1440 = vsel %vm1426, %v1405, %v820
      %v1441 = vsel %vm1426, %v1406, %v822
      %v1442 = vsel %vm1426, %v1407, %v824
      %v1443 = vsel %vm1426, %v1408, %v826
      %v1444 = vsel %vm1426, %v1409, %v828
      %v1445 = vsel %vm1426, %v1410, %v830
      %v1446 = vsel %vm1426, %v1411, %v832
      %v1447 = vsel %vm1426, %v1412, %v834
      %v1448 = vsel %vm1426, %v1413, %v836
      %v1449 = vsel %vm1426, %v1414, %v838
      %v1450 = vsel %vm1426, %v1415, %v840
      %v1451 = vsel %vm1426, %v1416, %v842
      %v1452 = vsel %vm1426, %v1417, %v844
      %v1453 = vsel %vm1426, %v1418, %v846
      %v1454 = vsel %vm1426, %v1419, %v848
      %v1455 = vsel %vm1426, %v1420, %v850
      %v1456 = vsel %vm1426, %v1421, %v852
      %v1457 = vsel %vm1426, %v1422, %v854
      %v1458 = vsel %vm1426, %v1423, %v856
      %v1459 = vsel %vm1426, %v1424, %v858
      %v1460 = vsel %vm1426, %v1425, %v860
      %vm1461 = vcmask 162816
      %v1462 = vsel %vm1461, %v1427, %v901
      %v1463 = vsel %vm1461, %v1428, %v903
      %v1464 = vsel %vm1461, %v1429, %v905
      %v1465 = vsel %vm1461, %v1430, %v907
      %v1466 = vsel %vm1461, %v1431, %v909
      %v1467 = vsel %vm1461, %v1432, %v911
      %v1468 = vsel %vm1461, %v1433, %v913
      %v1469 = vsel %vm1461, %v1434, %v915
      %v1470 = vsel %vm1461, %v1435, %v917
      %v1471 = vsel %vm1461, %v1436, %v919
      %v1472 = vsel %vm1461, %v1437, %v921
      %v1473 = vsel %vm1461, %v1438, %v923
      %v1474 = vsel %vm1461, %v1439, %v925
      %v1475 = vsel %vm1461, %v1440, %v927
      %v1476 = vsel %vm1461, %v1441, %v929
      %v1477 = vsel %vm1461, %v1442, %v931
      %v1478 = vsel %vm1461, %v1443, %v933
      %v1479 = vsel %vm1461, %v1444, %v935
      %v1480 = vsel %vm1461, %v1445, %v937
      %v1481 = vsel %vm1461, %v1446, %v939
      %v1482 = vsel %vm1461, %v1447, %v941
      %v1483 = vsel %vm1461, %v1448, %v943
      %v1484 = vsel %vm1461, %v1449, %v945
      %v1485 = vsel %vm1461, %v1450, %v947
      %v1486 = vsel %vm1461, %v1451, %v949
      %v1487 = vsel %vm1461, %v1452, %v951
      %v1488 = vsel %vm1461, %v1453, %v953
      %v1489 = vsel %vm1461, %v1454, %v955
      %v1490 = vsel %vm1461, %v1455, %v957
      %v1491 = vsel %vm1461, %v1456, %v959
      %v1492 = vsel %vm1461, %v1457, %v961
      %v1493 = vsel %vm1461, %v1458, %v963
      %v1494 = vsel %vm1461, %v1459, %v965
      %v1495 = vsel %vm1461, %v1460, %v967
      %vm1496 = vcmask 195584
      %v1497 = vsel %vm1496, %v1462, %v1005
      %v1498 = vsel %vm1496, %v1463, %v1007
      %v1499 = vsel %vm1496, %v1464, %v1009
      %v1500 = vsel %vm1496, %v1465, %v1011
      %v1501 = vsel %vm1496, %v1466, %v1013
      %v1502 = vsel %vm1496, %v1467, %v1015
      %v1503 = vsel %vm1496, %v1468, %v1017
      %v1504 = vsel %vm1496, %v1469, %v1019
      %v1505 = vsel %vm1496, %v1470, %v1021
      %v1506 = vsel %vm1496, %v1471, %v1023
      %v1507 = vsel %vm1496, %v1472, %v1025
      %v1508 = vsel %vm1496, %v1473, %v1027
      %v1509 = vsel %vm1496, %v1474, %v1029
      %v1510 = vsel %vm1496, %v1475, %v1031
      %v1511 = vsel %vm1496, %v1476, %v1033
      %v1512 = vsel %vm1496, %v1477, %v1035
      %v1513 = vsel %vm1496, %v1478, %v1037
      %v1514 = vsel %vm1496, %v1479, %v1039
      %v1515 = vsel %vm1496, %v1480, %v1041
      %v1516 = vsel %vm1496, %v1481, %v1043
      %v1517 = vsel %vm1496, %v1482, %v1045
      %v1518 = vsel %vm1496, %v1483, %v1047
      %v1519 = vsel %vm1496, %v1484, %v1049
      %v1520 = vsel %vm1496, %v1485, %v1051
      %v1521 = vsel %vm1496, %v1486, %v1053
      %v1522 = vsel %vm1496, %v1487, %v1055
      %v1523 = vsel %vm1496, %v1488, %v1057
      %v1524 = vsel %vm1496, %v1489, %v1059
      %v1525 = vsel %vm1496, %v1490, %v1061
      %v1526 = vsel %vm1496, %v1491, %v1063
      %v1527 = vsel %vm1496, %v1492, %v1065
      %v1528 = vsel %vm1496, %v1493, %v1067
      %v1529 = vsel %vm1496, %v1494, %v1069
      %v1530 = vsel %vm1496, %v1495, %v1071
      %vm1531 = vcmask 228352
      %v1532 = vsel %vm1531, %v1497, %v1113
      %v1533 = vsel %vm1531, %v1498, %v1115
      %v1534 = vsel %vm1531, %v1499, %v1117
      %v1535 = vsel %vm1531, %v1500, %v1119
      %v1536 = vsel %vm1531, %v1501, %v1121
      %v1537 = vsel %vm1531, %v1502, %v1123
      %v1538 = vsel %vm1531, %v1503, %v1125
      %v1539 = vsel %vm1531, %v1504, %v1127
      %v1540 = vsel %vm1531, %v1505, %v1129
      %v1541 = vsel %vm1531, %v1506, %v1131
      %v1542 = vsel %vm1531, %v1507, %v1133
      %v1543 = vsel %vm1531, %v1508, %v1135
      %v1544 = vsel %vm1531, %v1509, %v1137
      %v1545 = vsel %vm1531, %v1510, %v1139
      %v1546 = vsel %vm1531, %v1511, %v1141
      %v1547 = vsel %vm1531, %v1512, %v1143
      %v1548 = vsel %vm1531, %v1513, %v1145
      %v1549 = vsel %vm1531, %v1514, %v1147
      %v1550 = vsel %vm1531, %v1515, %v1149
      %v1551 = vsel %vm1531, %v1516, %v1151
      %v1552 = vsel %vm1531, %v1517, %v1153
      %v1553 = vsel %vm1531, %v1518, %v1155
      %v1554 = vsel %vm1531, %v1519, %v1157
      %v1555 = vsel %vm1531, %v1520, %v1159
      %v1556 = vsel %vm1531, %v1521, %v1161
      %v1557 = vsel %vm1531, %v1522, %v1163
      %v1558 = vsel %vm1531, %v1523, %v1165
      %v1559 = vsel %vm1531, %v1524, %v1167
      %v1560 = vsel %vm1531, %v1525, %v1169
      %v1561 = vsel %vm1531, %v1526, %v1171
      %v1562 = vsel %vm1531, %v1527, %v1173
      %v1563 = vsel %vm1531, %v1528, %v1175
      %v1564 = vsel %vm1531, %v1529, %v1177
      %v1565 = vsel %vm1531, %v1530, %v1179
      %vm1566 = vcmask 261120
      %v1567 = vsel %vm1566, %v1532, %v1220
      %v1568 = vsel %vm1566, %v1533, %v1222
      %v1569 = vsel %vm1566, %v1534, %v1224
      %v1570 = vsel %vm1566, %v1535, %v1226
      %v1571 = vsel %vm1566, %v1536, %v1228
      %v1572 = vsel %vm1566, %v1537, %v1230
      %v1573 = vsel %vm1566, %v1538, %v1232
      %v1574 = vsel %vm1566, %v1539, %v1234
      %v1575 = vsel %vm1566, %v1540, %v1236
      %v1576 = vsel %vm1566, %v1541, %v1238
      %v1577 = vsel %vm1566, %v1542, %v1240
      %v1578 = vsel %vm1566, %v1543, %v1242
      %v1579 = vsel %vm1566, %v1544, %v1244
      %v1580 = vsel %vm1566, %v1545, %v1246
      %v1581 = vsel %vm1566, %v1546, %v1248
      %v1582 = vsel %vm1566, %v1547, %v1250
      %v1583 = vsel %vm1566, %v1548, %v1252
      %v1584 = vsel %vm1566, %v1549, %v1254
      %v1585 = vsel %vm1566, %v1550, %v1256
      %v1586 = vsel %vm1566, %v1551, %v1258
      %v1587 = vsel %vm1566, %v1552, %v1260
      %v1588 = vsel %vm1566, %v1553, %v1262
      %v1589 = vsel %vm1566, %v1554, %v1264
      %v1590 = vsel %vm1566, %v1555, %v1266
      %v1591 = vsel %vm1566, %v1556, %v1268
      %v1592 = vsel %vm1566, %v1557, %v1270
      %v1593 = vsel %vm1566, %v1558, %v1272
      %v1594 = vsel %vm1566, %v1559, %v1274
      %v1595 = vsel %vm1566, %v1560, %v1276
      %v1596 = vsel %vm1566, %v1561, %v1278
      %v1597 = vsel %vm1566, %v1562, %v1280
      %v1598 = vsel %vm1566, %v1563, %v1282
      %v1599 = vsel %vm1566, %v1564, %v1284
      %v1600 = vsel %vm1566, %v1565, %v1286
      %v1601 = vld [vmem:[%s1] sm:$0xff]
      %v1602 = vld [vmem:[%s1 + $0x8] sm:$0xff]
      %v1603 = vld [vmem:[%s1 + $0x10] sm:$0xff]
      %v1604 = vld [vmem:[%s1 + $0x18] sm:$0xff]
      %v1605 = vld [vmem:[%s1 + $0x20] sm:$0xf]
      %vm1606 = vcmask 293888
      %v1608 = vsel %vm1606, %v1567, 0
      %v1611 = vsel %vm1606, %v1568, 0
      %v1614 = vsel %vm1606, %v1569, 0
      %v1617 = vsel %vm1606, %v1570, 0
      %v1620 = vsel %vm1606, %v1571, 0
      %v1623 = vsel %vm1606, %v1572, 0
      %v1626 = vsel %vm1606, %v1573, 0
      %v1629 = vsel %vm1606, %v1574, 0
      %v1632 = vsel %vm1606, %v1575, 0
      %v1635 = vsel %vm1606, %v1576, 0
      %v1638 = vsel %vm1606, %v1577, 0
      %v1641 = vsel %vm1606, %v1578, 0
      %v1644 = vsel %vm1606, %v1579, 0
      %v1647 = vsel %vm1606, %v1580, 0
      %v1650 = vsel %vm1606, %v1581, 0
      %v1653 = vsel %vm1606, %v1582, 0
      %v1656 = vsel %vm1606, %v1583, 0
      %v1659 = vsel %vm1606, %v1584, 0
      %v1662 = vsel %vm1606, %v1585, 0
      %v1665 = vsel %vm1606, %v1586, 0
      %v1668 = vsel %vm1606, %v1587, 0
      %v1671 = vsel %vm1606, %v1588, 0
      %v1674 = vsel %vm1606, %v1589, 0
      %v1677 = vsel %vm1606, %v1590, 0
      %v1680 = vsel %vm1606, %v1591, 0
      %v1683 = vsel %vm1606, %v1592, 0
      %v1686 = vsel %vm1606, %v1593, 0
      %v1689 = vsel %vm1606, %v1594, 0
      %v1692 = vsel %vm1606, %v1595, 0
      %v1695 = vsel %vm1606, %v1596, 0
      %v1698 = vsel %vm1606, %v1597, 0
      %v1701 = vsel %vm1606, %v1598, 0
      %v1704 = vsel %vm1606, %v1599, 0
      %v1707 = vsel %vm1606, %v1600, 0
      %vm1709 = vcmask 1043456
      %v1711 = vsel %vm1709, %v1605, 0
      %1713 = vmatprep.subr.mxu0 0.0
      %1714 = vmatpush1.msra.mxu0 0.0
      %1715 = vmatprep.subr.mxu0 0.0
      %1716 = vmatpush1.msra.mxu0 0.0
      %1717 = vmatprep.subr.mxu0 0.0
      %1718 = vmatpush1.msra.mxu0 0.0
      %1719 = vmatprep.subr.mxu0 0.0
      %1720 = vmatpush1.msra.mxu0 0.0
      %1721 = vmatprep.subr.mxu0 0.0
      %1722 = vmatpush1.msra.mxu0 0.0
      %1723 = vmatprep.subr.mxu0 0.0
      %1724 = vmatpush1.msra.mxu0 0.0
      %1725 = vmatprep.subr.mxu0 0.0
      %1726 = vmatpush1.msra.mxu0 0.0
      %1727 = vmatprep.subr.mxu0 0.0
      %1728 = vmatpush1.msra.mxu0 0.0
      %1729 = vmatprep.subr.mxu0 0.0
      %1730 = vmatpush1.msra.mxu0 0.0
      %1731 = vmatprep.subr.mxu0 0.0
      %1732 = vmatpush1.msra.mxu0 0.0
      %1733 = vmatprep.subr.mxu0 0.0
      %1734 = vmatpush1.msra.mxu0 0.0
      %1735 = vmatprep.subr.mxu0 0.0
      %1736 = vmatpush1.msra.mxu0 %v1711
      %1737 = vmatprep.subr.mxu0 0.0
      %1738 = vmatpush1.msra.mxu0 %v1604
      %1739 = vmatprep.subr.mxu0 0.0
      %1740 = vmatpush1.msra.mxu0 %v1603
      %1741 = vmatprep.subr.mxu0 0.0
      %1742 = vmatpush1.msra.mxu0 %v1602
      %1743 = vmatprep.subr.mxu0 0.0
      %1744 = vmatpush1.msra.mxu0 %v1601
      %1745 = vmatprep.subr.mxu0 0.0
      %1746 = vmatpush2.msra.mxu0 0.0
      %1747 = vmatprep.subr.mxu0 0.0
      %1748 = vmatpush2.msra.mxu0 0.0
      %1749 = vmatprep.subr.mxu0 0.0
      %1750 = vmatpush2.msra.mxu0 0.0
      %1751 = vmatprep.subr.mxu0 0.0
      %1752 = vmatpush2.msra.mxu0 0.0
      %1753 = vmatprep.subr.mxu0 0.0
      %1754 = vmatpush2.msra.mxu0 0.0
      %1755 = vmatprep.subr.mxu0 0.0
      %1756 = vmatpush2.msra.mxu0 0.0
      %1757 = vmatprep.subr.mxu0 0.0
      %1758 = vmatpush2.msra.mxu0 0.0
      %1759 = vmatprep.subr.mxu0 0.0
      %1760 = vmatpush2.msra.mxu0 0.0
      %1761 = vmatprep.subr.mxu0 0.0
      %1762 = vmatpush2.msra.mxu0 0.0
      %1763 = vmatprep.subr.mxu0 0.0
      %1764 = vmatpush2.msra.mxu0 0.0
      %1765 = vmatprep.subr.mxu0 0.0
      %1766 = vmatpush2.msra.mxu0 0.0
      %1767 = vmatprep.subr.mxu0 0.0
      %1768 = vmatpush2.msra.mxu0 0.0
      %1769 = vmatprep.subr.mxu0 0.0
      %1770 = vmatpush2.msra.mxu0 0.0
      %1771 = vmatprep.subr.mxu0 0.0
      %1772 = vmatpush2.msra.mxu0 0.0
      %1773 = vmatprep.subr.mxu0 0.0
      %1774 = vmatpush2.msra.mxu0 0.0
      %1775 = vmatprep.subr.mxu0 0.0
      %1776 = vmatpush2.msra.mxu0 0.0
      %1777 = vmatprep.mubr.f32.mxu0 0.0
      %1778 = vmatmul.mubr.f32.gmra.mxu0 %v1608
      %v1779 = vpop.f32.mrf.mxu0
      %v1780 = vadd.f32 0.0, %v1779
      %v1781 = vpop.f32.mrf.mxu0
      %1782 = vmatprep.mubr.f32.mxu0 0.0
      %1783 = vmatmul.mubr.f32.gmra.mxu0 %v1611
      %v1784 = vpop.f32.mrf.mxu0
      %v1785 = vadd.f32 0.0, %v1784
      %v1786 = vpop.f32.mrf.mxu0
      %1787 = vmatprep.mubr.f32.mxu0 0.0
      %1788 = vmatmul.mubr.f32.gmra.mxu0 %v1614
      %v1789 = vpop.f32.mrf.mxu0
      %v1790 = vadd.f32 0.0, %v1789
      %v1791 = vpop.f32.mrf.mxu0
      %1792 = vmatprep.mubr.f32.mxu0 0.0
      %1793 = vmatmul.mubr.f32.gmra.mxu0 %v1617
      %v1794 = vpop.f32.mrf.mxu0
      %v1795 = vadd.f32 0.0, %v1794
      %v1796 = vpop.f32.mrf.mxu0
      %1797 = vmatprep.mubr.f32.mxu0 0.0
      %1798 = vmatmul.mubr.f32.gmra.mxu0 %v1620
      %v1799 = vpop.f32.mrf.mxu0
      %v1800 = vadd.f32 0.0, %v1799
      %v1801 = vpop.f32.mrf.mxu0
      %1802 = vmatprep.mubr.f32.mxu0 0.0
      %1803 = vmatmul.mubr.f32.gmra.mxu0 %v1623
      %v1804 = vpop.f32.mrf.mxu0
      %v1805 = vadd.f32 0.0, %v1804
      %v1806 = vpop.f32.mrf.mxu0
      %1807 = vmatprep.mubr.f32.mxu0 0.0
      %1808 = vmatmul.mubr.f32.gmra.mxu0 %v1626
      %v1809 = vpop.f32.mrf.mxu0
      %v1810 = vadd.f32 0.0, %v1809
      %v1811 = vpop.f32.mrf.mxu0
      %1812 = vmatprep.mubr.f32.mxu0 0.0
      %1813 = vmatmul.mubr.f32.gmra.mxu0 %v1629
      %v1814 = vpop.f32.mrf.mxu0
      %v1815 = vadd.f32 0.0, %v1814
      %v1816 = vpop.f32.mrf.mxu0
      %1817 = vmatprep.mubr.f32.mxu0 0.0
      %1818 = vmatmul.mubr.f32.gmra.mxu0 %v1632
      %v1819 = vpop.f32.mrf.mxu0
      %v1820 = vadd.f32 0.0, %v1819
      %v1821 = vpop.f32.mrf.mxu0
      %1822 = vmatprep.mubr.f32.mxu0 0.0
      %1823 = vmatmul.mubr.f32.gmra.mxu0 %v1635
      %v1824 = vpop.f32.mrf.mxu0
      %v1825 = vadd.f32 0.0, %v1824
      %v1826 = vpop.f32.mrf.mxu0
      %1827 = vmatprep.mubr.f32.mxu0 0.0
      %1828 = vmatmul.mubr.f32.gmra.mxu0 %v1638
      %v1829 = vpop.f32.mrf.mxu0
      %v1830 = vadd.f32 0.0, %v1829
      %v1831 = vpop.f32.mrf.mxu0
      %1832 = vmatprep.mubr.f32.mxu0 0.0
      %1833 = vmatmul.mubr.f32.gmra.mxu0 %v1641
      %v1834 = vpop.f32.mrf.mxu0
      %v1835 = vadd.f32 0.0, %v1834
      %v1836 = vpop.f32.mrf.mxu0
      %1837 = vmatprep.mubr.f32.mxu0 0.0
      %1838 = vmatmul.mubr.f32.gmra.mxu0 %v1644
      %v1839 = vpop.f32.mrf.mxu0
      %v1840 = vadd.f32 0.0, %v1839
      %v1841 = vpop.f32.mrf.mxu0
      %1842 = vmatprep.mubr.f32.mxu0 0.0
      %1843 = vmatmul.mubr.f32.gmra.mxu0 %v1647
      %v1844 = vpop.f32.mrf.mxu0
      %v1845 = vadd.f32 0.0, %v1844
      %v1846 = vpop.f32.mrf.mxu0
      %1847 = vmatprep.mubr.f32.mxu0 0.0
      %1848 = vmatmul.mubr.f32.gmra.mxu0 %v1650
      %v1849 = vpop.f32.mrf.mxu0
      %v1850 = vadd.f32 0.0, %v1849
      %v1851 = vpop.f32.mrf.mxu0
      %1852 = vmatprep.mubr.f32.mxu0 0.0
      %1853 = vmatmul.mubr.f32.gmra.mxu0 %v1653
      %v1854 = vpop.f32.mrf.mxu0
      %v1855 = vadd.f32 0.0, %v1854
      %v1856 = vpop.f32.mrf.mxu0
      %1857 = vmatprep.mubr.f32.mxu0 0.0
      %1858 = vmatmul.mubr.f32.gmra.mxu0 %v1656
      %v1859 = vpop.f32.mrf.mxu0
      %v1860 = vadd.f32 0.0, %v1859
      %v1861 = vpop.f32.mrf.mxu0
      %1862 = vmatprep.mubr.f32.mxu0 0.0
      %1863 = vmatmul.mubr.f32.gmra.mxu0 %v1659
      %v1864 = vpop.f32.mrf.mxu0
      %v1865 = vadd.f32 0.0, %v1864
      %v1866 = vpop.f32.mrf.mxu0
      %1867 = vmatprep.mubr.f32.mxu0 0.0
      %1868 = vmatmul.mubr.f32.gmra.mxu0 %v1662
      %v1869 = vpop.f32.mrf.mxu0
      %v1870 = vadd.f32 0.0, %v1869
      %v1871 = vpop.f32.mrf.mxu0
      %1872 = vmatprep.mubr.f32.mxu0 0.0
      %1873 = vmatmul.mubr.f32.gmra.mxu0 %v1665
      %v1874 = vpop.f32.mrf.mxu0
      %v1875 = vadd.f32 0.0, %v1874
      %v1876 = vpop.f32.mrf.mxu0
      %1877 = vmatprep.mubr.f32.mxu0 0.0
      %1878 = vmatmul.mubr.f32.gmra.mxu0 %v1668
      %v1879 = vpop.f32.mrf.mxu0
      %v1880 = vadd.f32 0.0, %v1879
      %v1881 = vpop.f32.mrf.mxu0
      %1882 = vmatprep.mubr.f32.mxu0 0.0
      %1883 = vmatmul.mubr.f32.gmra.mxu0 %v1671
      %v1884 = vpop.f32.mrf.mxu0
      %v1885 = vadd.f32 0.0, %v1884
      %v1886 = vpop.f32.mrf.mxu0
      %1887 = vmatprep.mubr.f32.mxu0 0.0
      %1888 = vmatmul.mubr.f32.gmra.mxu0 %v1674
      %v1889 = vpop.f32.mrf.mxu0
      %v1890 = vadd.f32 0.0, %v1889
      %v1891 = vpop.f32.mrf.mxu0
      %1892 = vmatprep.mubr.f32.mxu0 0.0
      %1893 = vmatmul.mubr.f32.gmra.mxu0 %v1677
      %v1894 = vpop.f32.mrf.mxu0
      %v1895 = vadd.f32 0.0, %v1894
      %v1896 = vpop.f32.mrf.mxu0
      %1897 = vmatprep.mubr.f32.mxu0 0.0
      %1898 = vmatmul.mubr.f32.gmra.mxu0 %v1680
      %v1899 = vpop.f32.mrf.mxu0
      %v1900 = vadd.f32 0.0, %v1899
      %v1901 = vpop.f32.mrf.mxu0
      %1902 = vmatprep.mubr.f32.mxu0 0.0
      %1903 = vmatmul.mubr.f32.gmra.mxu0 %v1683
      %v1904 = vpop.f32.mrf.mxu0
      %v1905 = vadd.f32 0.0, %v1904
      %v1906 = vpop.f32.mrf.mxu0
      %1907 = vmatprep.mubr.f32.mxu0 0.0
      %1908 = vmatmul.mubr.f32.gmra.mxu0 %v1686
      %v1909 = vpop.f32.mrf.mxu0
      %v1910 = vadd.f32 0.0, %v1909
      %v1911 = vpop.f32.mrf.mxu0
      %1912 = vmatprep.mubr.f32.mxu0 0.0
      %1913 = vmatmul.mubr.f32.gmra.mxu0 %v1689
      %v1914 = vpop.f32.mrf.mxu0
      %v1915 = vadd.f32 0.0, %v1914
      %v1916 = vpop.f32.mrf.mxu0
      %1917 = vmatprep.mubr.f32.mxu0 0.0
      %1918 = vmatmul.mubr.f32.gmra.mxu0 %v1692
      %v1919 = vpop.f32.mrf.mxu0
      %v1920 = vadd.f32 0.0, %v1919
      %v1921 = vpop.f32.mrf.mxu0
      %1922 = vmatprep.mubr.f32.mxu0 0.0
      %1923 = vmatmul.mubr.f32.gmra.mxu0 %v1695
      %v1924 = vpop.f32.mrf.mxu0
      %v1925 = vadd.f32 0.0, %v1924
      %v1926 = vpop.f32.mrf.mxu0
      %1927 = vmatprep.mubr.f32.mxu0 0.0
      %1928 = vmatmul.mubr.f32.gmra.mxu0 %v1698
      %v1929 = vpop.f32.mrf.mxu0
      %v1930 = vadd.f32 0.0, %v1929
      %v1931 = vpop.f32.mrf.mxu0
      %1932 = vmatprep.mubr.f32.mxu0 0.0
      %1933 = vmatmul.mubr.f32.gmra.mxu0 %v1701
      %v1934 = vpop.f32.mrf.mxu0
      %v1935 = vadd.f32 0.0, %v1934
      %v1936 = vpop.f32.mrf.mxu0
      %1937 = vmatprep.mubr.f32.mxu0 0.0
      %1938 = vmatmul.mubr.f32.gmra.mxu0 %v1704
      %v1939 = vpop.f32.mrf.mxu0
      %v1940 = vadd.f32 0.0, %v1939
      %v1941 = vpop.f32.mrf.mxu0
      %1942 = vmatprep.mubr.f32.mxu0 0.0
      %1943 = vmatmul.mubr.f32.gmra.mxu0 %v1707
      %v1944 = vpop.f32.mrf.mxu0
      %v1945 = vadd.f32 0.0, %v1944
      %v1946 = vpop.f32.mrf.mxu0
      %1947 = vdwg.mxu0
      %v1948 = vmul.f32 %v1780, 0.5
      %v1949 = vmul.f32 %v1785, 0.5
      %v1950 = vmul.f32 %v1790, 0.5
      %v1951 = vmul.f32 %v1795, 0.5
      %v1952 = vmul.f32 %v1800, 0.5
      %v1953 = vmul.f32 %v1805, 0.5
      %v1954 = vmul.f32 %v1810, 0.5
      %v1955 = vmul.f32 %v1815, 0.5
      %v1956 = vmul.f32 %v1820, 0.5
      %v1957 = vmul.f32 %v1825, 0.5
      %v1958 = vmul.f32 %v1830, 0.5
      %v1959 = vmul.f32 %v1835, 0.5
      %v1960 = vmul.f32 %v1840, 0.5
      %v1961 = vmul.f32 %v1845, 0.5
      %v1962 = vmul.f32 %v1850, 0.5
      %v1963 = vmul.f32 %v1855, 0.5
      %v1964 = vmul.f32 %v1860, 0.5
      %v1965 = vmul.f32 %v1865, 0.5
      %v1966 = vmul.f32 %v1870, 0.5
      %v1967 = vmul.f32 %v1875, 0.5
      %v1968 = vmul.f32 %v1880, 0.5
      %v1969 = vmul.f32 %v1885, 0.5
      %v1970 = vmul.f32 %v1890, 0.5
      %v1971 = vmul.f32 %v1895, 0.5
      %v1972 = vmul.f32 %v1900, 0.5
      %v1973 = vmul.f32 %v1905, 0.5
      %v1974 = vmul.f32 %v1910, 0.5
      %v1975 = vmul.f32 %v1915, 0.5
      %v1976 = vmul.f32 %v1920, 0.5
      %v1977 = vmul.f32 %v1925, 0.5
      %v1978 = vmul.f32 %v1930, 0.5
      %v1979 = vmul.f32 %v1935, 0.5
      %v1980 = vmul.f32 %v1940, 0.5
      %v1981 = vmul.f32 %v1945, 0.5
      %v1982 = vmul.f32 %v1780, 0.70710677
      %v1983 = vmul.f32 %v1785, 0.70710677
      %v1984 = vmul.f32 %v1790, 0.70710677
      %v1985 = vmul.f32 %v1795, 0.70710677
      %v1986 = vmul.f32 %v1800, 0.70710677
      %v1987 = vmul.f32 %v1805, 0.70710677
      %v1988 = vmul.f32 %v1810, 0.70710677
      %v1989 = vmul.f32 %v1815, 0.70710677
      %v1990 = vmul.f32 %v1820, 0.70710677
      %v1991 = vmul.f32 %v1825, 0.70710677
      %v1992 = vmul.f32 %v1830, 0.70710677
      %v1993 = vmul.f32 %v1835, 0.70710677
      %v1994 = vmul.f32 %v1840, 0.70710677
      %v1995 = vmul.f32 %v1845, 0.70710677
      %v1996 = vmul.f32 %v1850, 0.70710677
      %v1997 = vmul.f32 %v1855, 0.70710677
      %v1998 = vmul.f32 %v1860, 0.70710677
      %v1999 = vmul.f32 %v1865, 0.70710677
      %v2000 = vmul.f32 %v1870, 0.70710677
      %v2001 = vmul.f32 %v1875, 0.70710677
      %v2002 = vmul.f32 %v1880, 0.70710677
      %v2003 = vmul.f32 %v1885, 0.70710677
      %v2004 = vmul.f32 %v1890, 0.70710677
      %v2005 = vmul.f32 %v1895, 0.70710677
      %v2006 = vmul.f32 %v1900, 0.70710677
      %v2007 = vmul.f32 %v1905, 0.70710677
      %v2008 = vmul.f32 %v1910, 0.70710677
      %v2009 = vmul.f32 %v1915, 0.70710677
      %v2010 = vmul.f32 %v1920, 0.70710677
      %v2011 = vmul.f32 %v1925, 0.70710677
      %v2012 = vmul.f32 %v1930, 0.70710677
      %v2013 = vmul.f32 %v1935, 0.70710677
      %v2014 = vmul.f32 %v1940, 0.70710677
      %v2015 = vmul.f32 %v1945, 0.70710677
      %v2016 = vmax.f32 %v1982, -3.832507
      %v2017 = vmax.f32 %v1983, -3.832507
      %v2018 = vmax.f32 %v1984, -3.832507
      %v2019 = vmax.f32 %v1985, -3.832507
      %v2020 = vmax.f32 %v1986, -3.832507
      %v2021 = vmax.f32 %v1987, -3.832507
      %v2022 = vmax.f32 %v1988, -3.832507
      %v2023 = vmax.f32 %v1989, -3.832507
      %v2024 = vmax.f32 %v1990, -3.832507
      %v2025 = vmax.f32 %v1991, -3.832507
      %v2026 = vmax.f32 %v1992, -3.832507
      %v2027 = vmax.f32 %v1993, -3.832507
      %v2028 = vmax.f32 %v1994, -3.832507
      %v2029 = vmax.f32 %v1995, -3.832507
      %v2030 = vmax.f32 %v1996, -3.832507
      %v2031 = vmax.f32 %v1997, -3.832507
      %v2032 = vmax.f32 %v1998, -3.832507
      %v2033 = vmax.f32 %v1999, -3.832507
      %v2034 = vmax.f32 %v2000, -3.832507
      %v2035 = vmax.f32 %v2001, -3.832507
      %v2036 = vmax.f32 %v2002, -3.832507
      %v2037 = vmax.f32 %v2003, -3.832507
      %v2038 = vmax.f32 %v2004, -3.832507
      %v2039 = vmax.f32 %v2005, -3.832507
      %v2040 = vmax.f32 %v2006, -3.832507
      %v2041 = vmax.f32 %v2007, -3.832507
      %v2042 = vmax.f32 %v2008, -3.832507
      %v2043 = vmax.f32 %v2009, -3.832507
      %v2044 = vmax.f32 %v2010, -3.832507
      %v2045 = vmax.f32 %v2011, -3.832507
      %v2046 = vmax.f32 %v2012, -3.832507
      %v2047 = vmax.f32 %v2013, -3.832507
      %v2048 = vmax.f32 %v2014, -3.832507
      %v2049 = vmax.f32 %v2015, -3.832507
      %v2050 = vmin.f32 %v2016, 3.832507
      %v2051 = vmin.f32 %v2017, 3.832507
      %v2052 = vmin.f32 %v2018, 3.832507
      %v2053 = vmin.f32 %v2019, 3.832507
      %v2054 = vmin.f32 %v2020, 3.832507
      %v2055 = vmin.f32 %v2021, 3.832507
      %v2056 = vmin.f32 %v2022, 3.832507
      %v2057 = vmin.f32 %v2023, 3.832507
      %v2058 = vmin.f32 %v2024, 3.832507
      %v2059 = vmin.f32 %v2025, 3.832507
      %v2060 = vmin.f32 %v2026, 3.832507
      %v2061 = vmin.f32 %v2027, 3.832507
      %v2062 = vmin.f32 %v2028, 3.832507
      %v2063 = vmin.f32 %v2029, 3.832507
      %v2064 = vmin.f32 %v2030, 3.832507
      %v2065 = vmin.f32 %v2031, 3.832507
      %v2066 = vmin.f32 %v2032, 3.832507
      %v2067 = vmin.f32 %v2033, 3.832507
      %v2068 = vmin.f32 %v2034, 3.832507
      %v2069 = vmin.f32 %v2035, 3.832507
      %v2070 = vmin.f32 %v2036, 3.832507
      %v2071 = vmin.f32 %v2037, 3.832507
      %v2072 = vmin.f32 %v2038, 3.832507
      %v2073 = vmin.f32 %v2039, 3.832507
      %v2074 = vmin.f32 %v2040, 3.832507
      %v2075 = vmin.f32 %v2041, 3.832507
      %v2076 = vmin.f32 %v2042, 3.832507
      %v2077 = vmin.f32 %v2043, 3.832507
      %v2078 = vmin.f32 %v2044, 3.832507
      %v2079 = vmin.f32 %v2045, 3.832507
      %v2080 = vmin.f32 %v2046, 3.832507
      %v2081 = vmin.f32 %v2047, 3.832507
      %v2082 = vmin.f32 %v2048, 3.832507
      %v2083 = vmin.f32 %v2049, 3.832507
      %v2084 = vmul.f32 %v2050, %v2050
      %v2085 = vmul.f32 %v2051, %v2051
      %v2086 = vmul.f32 %v2052, %v2052
      %v2087 = vmul.f32 %v2053, %v2053
      %v2088 = vmul.f32 %v2054, %v2054
      %v2089 = vmul.f32 %v2055, %v2055
      %v2090 = vmul.f32 %v2056, %v2056
      %v2091 = vmul.f32 %v2057, %v2057
      %v2092 = vmul.f32 %v2058, %v2058
      %v2093 = vmul.f32 %v2059, %v2059
      %v2094 = vmul.f32 %v2060, %v2060
      %v2095 = vmul.f32 %v2061, %v2061
      %v2096 = vmul.f32 %v2062, %v2062
      %v2097 = vmul.f32 %v2063, %v2063
      %v2098 = vmul.f32 %v2064, %v2064
      %v2099 = vmul.f32 %v2065, %v2065
      %v2100 = vmul.f32 %v2066, %v2066
      %v2101 = vmul.f32 %v2067, %v2067
      %v2102 = vmul.f32 %v2068, %v2068
      %v2103 = vmul.f32 %v2069, %v2069
      %v2104 = vmul.f32 %v2070, %v2070
      %v2105 = vmul.f32 %v2071, %v2071
      %v2106 = vmul.f32 %v2072, %v2072
      %v2107 = vmul.f32 %v2073, %v2073
      %v2108 = vmul.f32 %v2074, %v2074
      %v2109 = vmul.f32 %v2075, %v2075
      %v2110 = vmul.f32 %v2076, %v2076
      %v2111 = vmul.f32 %v2077, %v2077
      %v2112 = vmul.f32 %v2078, %v2078
      %v2113 = vmul.f32 %v2079, %v2079
      %v2114 = vmul.f32 %v2080, %v2080
      %v2115 = vmul.f32 %v2081, %v2081
      %v2116 = vmul.f32 %v2082, %v2082
      %v2117 = vmul.f32 %v2083, %v2083
      %v2118 = vmul.f32 %v2084, 0.00022905065
      %v2119 = vmul.f32 %v2085, 0.00022905065
      %v2120 = vmul.f32 %v2086, 0.00022905065
      %v2121 = vmul.f32 %v2087, 0.00022905065
      %v2122 = vmul.f32 %v2088, 0.00022905065
      %v2123 = vmul.f32 %v2089, 0.00022905065
      %v2124 = vmul.f32 %v2090, 0.00022905065
      %v2125 = vmul.f32 %v2091, 0.00022905065
      %v2126 = vmul.f32 %v2092, 0.00022905065
      %v2127 = vmul.f32 %v2093, 0.00022905065
      %v2128 = vmul.f32 %v2094, 0.00022905065
      %v2129 = vmul.f32 %v2095, 0.00022905065
      %v2130 = vmul.f32 %v2096, 0.00022905065
      %v2131 = vmul.f32 %v2097, 0.00022905065
      %v2132 = vmul.f32 %v2098, 0.00022905065
      %v2133 = vmul.f32 %v2099, 0.00022905065
      %v2134 = vmul.f32 %v2100, 0.00022905065
      %v2135 = vmul.f32 %v2101, 0.00022905065
      %v2136 = vmul.f32 %v2102, 0.00022905065
      %v2137 = vmul.f32 %v2103, 0.00022905065
      %v2138 = vmul.f32 %v2104, 0.00022905065
      %v2139 = vmul.f32 %v2105, 0.00022905065
      %v2140 = vmul.f32 %v2106, 0.00022905065
      %v2141 = vmul.f32 %v2107, 0.00022905065
      %v2142 = vmul.f32 %v2108, 0.00022905065
      %v2143 = vmul.f32 %v2109, 0.00022905065
      %v2144 = vmul.f32 %v2110, 0.00022905065
      %v2145 = vmul.f32 %v2111, 0.00022905065
      %v2146 = vmul.f32 %v2112, 0.00022905065
      %v2147 = vmul.f32 %v2113, 0.00022905065
      %v2148 = vmul.f32 %v2114, 0.00022905065
      %v2149 = vmul.f32 %v2115, 0.00022905065
      %v2150 = vmul.f32 %v2116, 0.00022905065
      %v2151 = vmul.f32 %v2117, 0.00022905065
      %v2152 = vadd.f32 %v2118, 0.003408291
      %v2153 = vadd.f32 %v2119, 0.003408291
      %v2154 = vadd.f32 %v2120, 0.003408291
      %v2155 = vadd.f32 %v2121, 0.003408291
      %v2156 = vadd.f32 %v2122, 0.003408291
      %v2157 = vadd.f32 %v2123, 0.003408291
      %v2158 = vadd.f32 %v2124, 0.003408291
      %v2159 = vadd.f32 %v2125, 0.003408291
      %v2160 = vadd.f32 %v2126, 0.003408291
      %v2161 = vadd.f32 %v2127, 0.003408291
      %v2162 = vadd.f32 %v2128, 0.003408291
      %v2163 = vadd.f32 %v2129, 0.003408291
      %v2164 = vadd.f32 %v2130, 0.003408291
      %v2165 = vadd.f32 %v2131, 0.003408291
      %v2166 = vadd.f32 %v2132, 0.003408291
      %v2167 = vadd.f32 %v2133, 0.003408291
      %v2168 = vadd.f32 %v2134, 0.003408291
      %v2169 = vadd.f32 %v2135, 0.003408291
      %v2170 = vadd.f32 %v2136, 0.003408291
      %v2171 = vadd.f32 %v2137, 0.003408291
      %v2172 = vadd.f32 %v2138, 0.003408291
      %v2173 = vadd.f32 %v2139, 0.003408291
      %v2174 = vadd.f32 %v2140, 0.003408291
      %v2175 = vadd.f32 %v2141, 0.003408291
      %v2176 = vadd.f32 %v2142, 0.003408291
      %v2177 = vadd.f32 %v2143, 0.003408291
      %v2178 = vadd.f32 %v2144, 0.003408291
      %v2179 = vadd.f32 %v2145, 0.003408291
      %v2180 = vadd.f32 %v2146, 0.003408291
      %v2181 = vadd.f32 %v2147, 0.003408291
      %v2182 = vadd.f32 %v2148, 0.003408291
      %v2183 = vadd.f32 %v2149, 0.003408291
      %v2184 = vadd.f32 %v2150, 0.003408291
      %v2185 = vadd.f32 %v2151, 0.003408291
      %v2186 = vmul.f32 %v2152, %v2084
      %v2187 = vmul.f32 %v2153, %v2085
      %v2188 = vmul.f32 %v2154, %v2086
      %v2189 = vmul.f32 %v2155, %v2087
      %v2190 = vmul.f32 %v2156, %v2088
      %v2191 = vmul.f32 %v2157, %v2089
      %v2192 = vmul.f32 %v2158, %v2090
      %v2193 = vmul.f32 %v2159, %v2091
      %v2194 = vmul.f32 %v2160, %v2092
      %v2195 = vmul.f32 %v2161, %v2093
      %v2196 = vmul.f32 %v2162, %v2094
      %v2197 = vmul.f32 %v2163, %v2095
      %v2198 = vmul.f32 %v2164, %v2096
      %v2199 = vmul.f32 %v2165, %v2097
      %v2200 = vmul.f32 %v2166, %v2098
      %v2201 = vmul.f32 %v2167, %v2099
      %v2202 = vmul.f32 %v2168, %v2100
      %v2203 = vmul.f32 %v2169, %v2101
      %v2204 = vmul.f32 %v2170, %v2102
      %v2205 = vmul.f32 %v2171, %v2103
      %v2206 = vmul.f32 %v2172, %v2104
      %v2207 = vmul.f32 %v2173, %v2105
      %v2208 = vmul.f32 %v2174, %v2106
      %v2209 = vmul.f32 %v2175, %v2107
      %v2210 = vmul.f32 %v2176, %v2108
      %v2211 = vmul.f32 %v2177, %v2109
      %v2212 = vmul.f32 %v2178, %v2110
      %v2213 = vmul.f32 %v2179, %v2111
      %v2214 = vmul.f32 %v2180, %v2112
      %v2215 = vmul.f32 %v2181, %v2113
      %v2216 = vmul.f32 %v2182, %v2114
      %v2217 = vmul.f32 %v2183, %v2115
      %v2218 = vmul.f32 %v2184, %v2116
      %v2219 = vmul.f32 %v2185, %v2117
      %v2220 = vadd.f32 %v2186, 0.050955694
      %v2221 = vadd.f32 %v2187, 0.050955694
      %v2222 = vadd.f32 %v2188, 0.050955694
      %v2223 = vadd.f32 %v2189, 0.050955694
      %v2224 = vadd.f32 %v2190, 0.050955694
      %v2225 = vadd.f32 %v2191, 0.050955694
      %v2226 = vadd.f32 %v2192, 0.050955694
      %v2227 = vadd.f32 %v2193, 0.050955694
      %v2228 = vadd.f32 %v2194, 0.050955694
      %v2229 = vadd.f32 %v2195, 0.050955694
      %v2230 = vadd.f32 %v2196, 0.050955694
      %v2231 = vadd.f32 %v2197, 0.050955694
      %v2232 = vadd.f32 %v2198, 0.050955694
      %v2233 = vadd.f32 %v2199, 0.050955694
      %v2234 = vadd.f32 %v2200, 0.050955694
      %v2235 = vadd.f32 %v2201, 0.050955694
      %v2236 = vadd.f32 %v2202, 0.050955694
      %v2237 = vadd.f32 %v2203, 0.050955694
      %v2238 = vadd.f32 %v2204, 0.050955694
      %v2239 = vadd.f32 %v2205, 0.050955694
      %v2240 = vadd.f32 %v2206, 0.050955694
      %v2241 = vadd.f32 %v2207, 0.050955694
      %v2242 = vadd.f32 %v2208, 0.050955694
      %v2243 = vadd.f32 %v2209, 0.050955694
      %v2244 = vadd.f32 %v2210, 0.050955694
      %v2245 = vadd.f32 %v2211, 0.050955694
      %v2246 = vadd.f32 %v2212, 0.050955694
      %v2247 = vadd.f32 %v2213, 0.050955694
      %v2248 = vadd.f32 %v2214, 0.050955694
      %v2249 = vadd.f32 %v2215, 0.050955694
      %v2250 = vadd.f32 %v2216, 0.050955694
      %v2251 = vadd.f32 %v2217, 0.050955694
      %v2252 = vadd.f32 %v2218, 0.050955694
      %v2253 = vadd.f32 %v2219, 0.050955694
      %v2254 = vmul.f32 %v2220, %v2084
      %v2255 = vmul.f32 %v2221, %v2085
      %v2256 = vmul.f32 %v2222, %v2086
      %v2257 = vmul.f32 %v2223, %v2087
      %v2258 = vmul.f32 %v2224, %v2088
      %v2259 = vmul.f32 %v2225, %v2089
      %v2260 = vmul.f32 %v2226, %v2090
      %v2261 = vmul.f32 %v2227, %v2091
      %v2262 = vmul.f32 %v2228, %v2092
      %v2263 = vmul.f32 %v2229, %v2093
      %v2264 = vmul.f32 %v2230, %v2094
      %v2265 = vmul.f32 %v2231, %v2095
      %v2266 = vmul.f32 %v2232, %v2096
      %v2267 = vmul.f32 %v2233, %v2097
      %v2268 = vmul.f32 %v2234, %v2098
      %v2269 = vmul.f32 %v2235, %v2099
      %v2270 = vmul.f32 %v2236, %v2100
      %v2271 = vmul.f32 %v2237, %v2101
      %v2272 = vmul.f32 %v2238, %v2102
      %v2273 = vmul.f32 %v2239, %v2103
      %v2274 = vmul.f32 %v2240, %v2104
      %v2275 = vmul.f32 %v2241, %v2105
      %v2276 = vmul.f32 %v2242, %v2106
      %v2277 = vmul.f32 %v2243, %v2107
      %v2278 = vmul.f32 %v2244, %v2108
      %v2279 = vmul.f32 %v2245, %v2109
      %v2280 = vmul.f32 %v2246, %v2110
      %v2281 = vmul.f32 %v2247, %v2111
      %v2282 = vmul.f32 %v2248, %v2112
      %v2283 = vmul.f32 %v2249, %v2113
      %v2284 = vmul.f32 %v2250, %v2114
      %v2285 = vmul.f32 %v2251, %v2115
      %v2286 = vmul.f32 %v2252, %v2116
      %v2287 = vmul.f32 %v2253, %v2117
      %v2288 = vadd.f32 %v2254, 0.18520832
      %v2289 = vadd.f32 %v2255, 0.18520832
      %v2290 = vadd.f32 %v2256, 0.18520832
      %v2291 = vadd.f32 %v2257, 0.18520832
      %v2292 = vadd.f32 %v2258, 0.18520832
      %v2293 = vadd.f32 %v2259, 0.18520832
      %v2294 = vadd.f32 %v2260, 0.18520832
      %v2295 = vadd.f32 %v2261, 0.18520832
      %v2296 = vadd.f32 %v2262, 0.18520832
      %v2297 = vadd.f32 %v2263, 0.18520832
      %v2298 = vadd.f32 %v2264, 0.18520832
      %v2299 = vadd.f32 %v2265, 0.18520832
      %v2300 = vadd.f32 %v2266, 0.18520832
      %v2301 = vadd.f32 %v2267, 0.18520832
      %v2302 = vadd.f32 %v2268, 0.18520832
      %v2303 = vadd.f32 %v2269, 0.18520832
      %v2304 = vadd.f32 %v2270, 0.18520832
      %v2305 = vadd.f32 %v2271, 0.18520832
      %v2306 = vadd.f32 %v2272, 0.18520832
      %v2307 = vadd.f32 %v2273, 0.18520832
      %v2308 = vadd.f32 %v2274, 0.18520832
      %v2309 = vadd.f32 %v2275, 0.18520832
      %v2310 = vadd.f32 %v2276, 0.18520832
      %v2311 = vadd.f32 %v2277, 0.18520832
      %v2312 = vadd.f32 %v2278, 0.18520832
      %v2313 = vadd.f32 %v2279, 0.18520832
      %v2314 = vadd.f32 %v2280, 0.18520832
      %v2315 = vadd.f32 %v2281, 0.18520832
      %v2316 = vadd.f32 %v2282, 0.18520832
      %v2317 = vadd.f32 %v2283, 0.18520832
      %v2318 = vadd.f32 %v2284, 0.18520832
      %v2319 = vadd.f32 %v2285, 0.18520832
      %v2320 = vadd.f32 %v2286, 0.18520832
      %v2321 = vadd.f32 %v2287, 0.18520832
      %v2322 = vmul.f32 %v2288, %v2084
      %v2323 = vmul.f32 %v2289, %v2085
      %v2324 = vmul.f32 %v2290, %v2086
      %v2325 = vmul.f32 %v2291, %v2087
      %v2326 = vmul.f32 %v2292, %v2088
      %v2327 = vmul.f32 %v2293, %v2089
      %v2328 = vmul.f32 %v2294, %v2090
      %v2329 = vmul.f32 %v2295, %v2091
      %v2330 = vmul.f32 %v2296, %v2092
      %v2331 = vmul.f32 %v2297, %v2093
      %v2332 = vmul.f32 %v2298, %v2094
      %v2333 = vmul.f32 %v2299, %v2095
      %v2334 = vmul.f32 %v2300, %v2096
      %v2335 = vmul.f32 %v2301, %v2097
      %v2336 = vmul.f32 %v2302, %v2098
      %v2337 = vmul.f32 %v2303, %v2099
      %v2338 = vmul.f32 %v2304, %v2100
      %v2339 = vmul.f32 %v2305, %v2101
      %v2340 = vmul.f32 %v2306, %v2102
      %v2341 = vmul.f32 %v2307, %v2103
      %v2342 = vmul.f32 %v2308, %v2104
      %v2343 = vmul.f32 %v2309, %v2105
      %v2344 = vmul.f32 %v2310, %v2106
      %v2345 = vmul.f32 %v2311, %v2107
      %v2346 = vmul.f32 %v2312, %v2108
      %v2347 = vmul.f32 %v2313, %v2109
      %v2348 = vmul.f32 %v2314, %v2110
      %v2349 = vmul.f32 %v2315, %v2111
      %v2350 = vmul.f32 %v2316, %v2112
      %v2351 = vmul.f32 %v2317, %v2113
      %v2352 = vmul.f32 %v2318, %v2114
      %v2353 = vmul.f32 %v2319, %v2115
      %v2354 = vmul.f32 %v2320, %v2116
      %v2355 = vmul.f32 %v2321, %v2117
      %v2356 = vadd.f32 %v2322, 1.1283791
      %v2357 = vadd.f32 %v2323, 1.1283791
      %v2358 = vadd.f32 %v2324, 1.1283791
      %v2359 = vadd.f32 %v2325, 1.1283791
      %v2360 = vadd.f32 %v2326, 1.1283791
      %v2361 = vadd.f32 %v2327, 1.1283791
      %v2362 = vadd.f32 %v2328, 1.1283791
      %v2363 = vadd.f32 %v2329, 1.1283791
      %v2364 = vadd.f32 %v2330, 1.1283791
      %v2365 = vadd.f32 %v2331, 1.1283791
      %v2366 = vadd.f32 %v2332, 1.1283791
      %v2367 = vadd.f32 %v2333, 1.1283791
      %v2368 = vadd.f32 %v2334, 1.1283791
      %v2369 = vadd.f32 %v2335, 1.1283791
      %v2370 = vadd.f32 %v2336, 1.1283791
      %v2371 = vadd.f32 %v2337, 1.1283791
      %v2372 = vadd.f32 %v2338, 1.1283791
      %v2373 = vadd.f32 %v2339, 1.1283791
      %v2374 = vadd.f32 %v2340, 1.1283791
      %v2375 = vadd.f32 %v2341, 1.1283791
      %v2376 = vadd.f32 %v2342, 1.1283791
      %v2377 = vadd.f32 %v2343, 1.1283791
      %v2378 = vadd.f32 %v2344, 1.1283791
      %v2379 = vadd.f32 %v2345, 1.1283791
      %v2380 = vadd.f32 %v2346, 1.1283791
      %v2381 = vadd.f32 %v2347, 1.1283791
      %v2382 = vadd.f32 %v2348, 1.1283791
      %v2383 = vadd.f32 %v2349, 1.1283791
      %v2384 = vadd.f32 %v2350, 1.1283791
      %v2385 = vadd.f32 %v2351, 1.1283791
      %v2386 = vadd.f32 %v2352, 1.1283791
      %v2387 = vadd.f32 %v2353, 1.1283791
      %v2388 = vadd.f32 %v2354, 1.1283791
      %v2389 = vadd.f32 %v2355, 1.1283791
      %v2390 = vmul.f32 %v2084, -1.1791603e-07
      %v2391 = vmul.f32 %v2085, -1.1791603e-07
      %v2392 = vmul.f32 %v2086, -1.1791603e-07
      %v2393 = vmul.f32 %v2087, -1.1791603e-07
      %v2394 = vmul.f32 %v2088, -1.1791603e-07
      %v2395 = vmul.f32 %v2089, -1.1791603e-07
      %v2396 = vmul.f32 %v2090, -1.1791603e-07
      %v2397 = vmul.f32 %v2091, -1.1791603e-07
      %v2398 = vmul.f32 %v2092, -1.1791603e-07
      %v2399 = vmul.f32 %v2093, -1.1791603e-07
      %v2400 = vmul.f32 %v2094, -1.1791603e-07
      %v2401 = vmul.f32 %v2095, -1.1791603e-07
      %v2402 = vmul.f32 %v2096, -1.1791603e-07
      %v2403 = vmul.f32 %v2097, -1.1791603e-07
      %v2404 = vmul.f32 %v2098, -1.1791603e-07
      %v2405 = vmul.f32 %v2099, -1.1791603e-07
      %v2406 = vmul.f32 %v2100, -1.1791603e-07
      %v2407 = vmul.f32 %v2101, -1.1791603e-07
      %v2408 = vmul.f32 %v2102, -1.1791603e-07
      %v2409 = vmul.f32 %v2103, -1.1791603e-07
      %v2410 = vmul.f32 %v2104, -1.1791603e-07
      %v2411 = vmul.f32 %v2105, -1.1791603e-07
      %v2412 = vmul.f32 %v2106, -1.1791603e-07
      %v2413 = vmul.f32 %v2107, -1.1791603e-07
      %v2414 = vmul.f32 %v2108, -1.1791603e-07
      %v2415 = vmul.f32 %v2109, -1.1791603e-07
      %v2416 = vmul.f32 %v2110, -1.1791603e-07
      %v2417 = vmul.f32 %v2111, -1.1791603e-07
      %v2418 = vmul.f32 %v2112, -1.1791603e-07
      %v2419 = vmul.f32 %v2113, -1.1791603e-07
      %v2420 = vmul.f32 %v2114, -1.1791603e-07
      %v2421 = vmul.f32 %v2115, -1.1791603e-07
      %v2422 = vmul.f32 %v2116, -1.1791603e-07
      %v2423 = vmul.f32 %v2117, -1.1791603e-07
      %v2424 = vadd.f32 %v2390, 2.3547966e-05
      %v2425 = vadd.f32 %v2391, 2.3547966e-05
      %v2426 = vadd.f32 %v2392, 2.3547966e-05
      %v2427 = vadd.f32 %v2393, 2.3547966e-05
      %v2428 = vadd.f32 %v2394, 2.3547966e-05
      %v2429 = vadd.f32 %v2395, 2.3547966e-05
      %v2430 = vadd.f32 %v2396, 2.3547966e-05
      %v2431 = vadd.f32 %v2397, 2.3547966e-05
      %v2432 = vadd.f32 %v2398, 2.3547966e-05
      %v2433 = vadd.f32 %v2399, 2.3547966e-05
      %v2434 = vadd.f32 %v2400, 2.3547966e-05
      %v2435 = vadd.f32 %v2401, 2.3547966e-05
      %v2436 = vadd.f32 %v2402, 2.3547966e-05
      %v2437 = vadd.f32 %v2403, 2.3547966e-05
      %v2438 = vadd.f32 %v2404, 2.3547966e-05
      %v2439 = vadd.f32 %v2405, 2.3547966e-05
      %v2440 = vadd.f32 %v2406, 2.3547966e-05
      %v2441 = vadd.f32 %v2407, 2.3547966e-05
      %v2442 = vadd.f32 %v2408, 2.3547966e-05
      %v2443 = vadd.f32 %v2409, 2.3547966e-05
      %v2444 = vadd.f32 %v2410, 2.3547966e-05
      %v2445 = vadd.f32 %v2411, 2.3547966e-05
      %v2446 = vadd.f32 %v2412, 2.3547966e-05
      %v2447 = vadd.f32 %v2413, 2.3547966e-05
      %v2448 = vadd.f32 %v2414, 2.3547966e-05
      %v2449 = vadd.f32 %v2415, 2.3547966e-05
      %v2450 = vadd.f32 %v2416, 2.3547966e-05
      %v2451 = vadd.f32 %v2417, 2.3547966e-05
      %v2452 = vadd.f32 %v2418, 2.3547966e-05
      %v2453 = vadd.f32 %v2419, 2.3547966e-05
      %v2454 = vadd.f32 %v2420, 2.3547966e-05
      %v2455 = vadd.f32 %v2421, 2.3547966e-05
      %v2456 = vadd.f32 %v2422, 2.3547966e-05
      %v2457 = vadd.f32 %v2423, 2.3547966e-05
      %v2458 = vmul.f32 %v2424, %v2084
      %v2459 = vmul.f32 %v2425, %v2085
      %v2460 = vmul.f32 %v2426, %v2086
      %v2461 = vmul.f32 %v2427, %v2087
      %v2462 = vmul.f32 %v2428, %v2088
      %v2463 = vmul.f32 %v2429, %v2089
      %v2464 = vmul.f32 %v2430, %v2090
      %v2465 = vmul.f32 %v2431, %v2091
      %v2466 = vmul.f32 %v2432, %v2092
      %v2467 = vmul.f32 %v2433, %v2093
      %v2468 = vmul.f32 %v2434, %v2094
      %v2469 = vmul.f32 %v2435, %v2095
      %v2470 = vmul.f32 %v2436, %v2096
      %v2471 = vmul.f32 %v2437, %v2097
      %v2472 = vmul.f32 %v2438, %v2098
      %v2473 = vmul.f32 %v2439, %v2099
      %v2474 = vmul.f32 %v2440, %v2100
      %v2475 = vmul.f32 %v2441, %v2101
      %v2476 = vmul.f32 %v2442, %v2102
      %v2477 = vmul.f32 %v2443, %v2103
      %v2478 = vmul.f32 %v2444, %v2104
      %v2479 = vmul.f32 %v2445, %v2105
      %v2480 = vmul.f32 %v2446, %v2106
      %v2481 = vmul.f32 %v2447, %v2107
      %v2482 = vmul.f32 %v2448, %v2108
      %v2483 = vmul.f32 %v2449, %v2109
      %v2484 = vmul.f32 %v2450, %v2110
      %v2485 = vmul.f32 %v2451, %v2111
      %v2486 = vmul.f32 %v2452, %v2112
      %v2487 = vmul.f32 %v2453, %v2113
      %v2488 = vmul.f32 %v2454, %v2114
      %v2489 = vmul.f32 %v2455, %v2115
      %v2490 = vmul.f32 %v2456, %v2116
      %v2491 = vmul.f32 %v2457, %v2117
      %v2492 = vadd.f32 %v2458, 0.0010179626
      %v2493 = vadd.f32 %v2459, 0.0010179626
      %v2494 = vadd.f32 %v2460, 0.0010179626
      %v2495 = vadd.f32 %v2461, 0.0010179626
      %v2496 = vadd.f32 %v2462, 0.0010179626
      %v2497 = vadd.f32 %v2463, 0.0010179626
      %v2498 = vadd.f32 %v2464, 0.0010179626
      %v2499 = vadd.f32 %v2465, 0.0010179626
      %v2500 = vadd.f32 %v2466, 0.0010179626
      %v2501 = vadd.f32 %v2467, 0.0010179626
      %v2502 = vadd.f32 %v2468, 0.0010179626
      %v2503 = vadd.f32 %v2469, 0.0010179626
      %v2504 = vadd.f32 %v2470, 0.0010179626
      %v2505 = vadd.f32 %v2471, 0.0010179626
      %v2506 = vadd.f32 %v2472, 0.0010179626
      %v2507 = vadd.f32 %v2473, 0.0010179626
      %v2508 = vadd.f32 %v2474, 0.0010179626
      %v2509 = vadd.f32 %v2475, 0.0010179626
      %v2510 = vadd.f32 %v2476, 0.0010179626
      %v2511 = vadd.f32 %v2477, 0.0010179626
      %v2512 = vadd.f32 %v2478, 0.0010179626
      %v2513 = vadd.f32 %v2479, 0.0010179626
      %v2514 = vadd.f32 %v2480, 0.0010179626
      %v2515 = vadd.f32 %v2481, 0.0010179626
      %v2516 = vadd.f32 %v2482, 0.0010179626
      %v2517 = vadd.f32 %v2483, 0.0010179626
      %v2518 = vadd.f32 %v2484, 0.0010179626
      %v2519 = vadd.f32 %v2485, 0.0010179626
      %v2520 = vadd.f32 %v2486, 0.0010179626
      %v2521 = vadd.f32 %v2487, 0.0010179626
      %v2522 = vadd.f32 %v2488, 0.0010179626
      %v2523 = vadd.f32 %v2489, 0.0010179626
      %v2524 = vadd.f32 %v2490, 0.0010179626
      %v2525 = vadd.f32 %v2491, 0.0010179626
      %v2526 = vmul.f32 %v2492, %v2084
      %v2527 = vmul.f32 %v2493, %v2085
      %v2528 = vmul.f32 %v2494, %v2086
      %v2529 = vmul.f32 %v2495, %v2087
      %v2530 = vmul.f32 %v2496, %v2088
      %v2531 = vmul.f32 %v2497, %v2089
      %v2532 = vmul.f32 %v2498, %v2090
      %v2533 = vmul.f32 %v2499, %v2091
      %v2534 = vmul.f32 %v2500, %v2092
      %v2535 = vmul.f32 %v2501, %v2093
      %v2536 = vmul.f32 %v2502, %v2094
      %v2537 = vmul.f32 %v2503, %v2095
      %v2538 = vmul.f32 %v2504, %v2096
      %v2539 = vmul.f32 %v2505, %v2097
      %v2540 = vmul.f32 %v2506, %v2098
      %v2541 = vmul.f32 %v2507, %v2099
      %v2542 = vmul.f32 %v2508, %v2100
      %v2543 = vmul.f32 %v2509, %v2101
      %v2544 = vmul.f32 %v2510, %v2102
      %v2545 = vmul.f32 %v2511, %v2103
      %v2546 = vmul.f32 %v2512, %v2104
      %v2547 = vmul.f32 %v2513, %v2105
      %v2548 = vmul.f32 %v2514, %v2106
      %v2549 = vmul.f32 %v2515, %v2107
      %v2550 = vmul.f32 %v2516, %v2108
      %v2551 = vmul.f32 %v2517, %v2109
      %v2552 = vmul.f32 %v2518, %v2110
      %v2553 = vmul.f32 %v2519, %v2111
      %v2554 = vmul.f32 %v2520, %v2112
      %v2555 = vmul.f32 %v2521, %v2113
      %v2556 = vmul.f32 %v2522, %v2114
      %v2557 = vmul.f32 %v2523, %v2115
      %v2558 = vmul.f32 %v2524, %v2116
      %v2559 = vmul.f32 %v2525, %v2117
      %v2560 = vadd.f32 %v2526, 0.01407047
      %v2561 = vadd.f32 %v2527, 0.01407047
      %v2562 = vadd.f32 %v2528, 0.01407047
      %v2563 = vadd.f32 %v2529, 0.01407047
      %v2564 = vadd.f32 %v2530, 0.01407047
      %v2565 = vadd.f32 %v2531, 0.01407047
      %v2566 = vadd.f32 %v2532, 0.01407047
      %v2567 = vadd.f32 %v2533, 0.01407047
      %v2568 = vadd.f32 %v2534, 0.01407047
      %v2569 = vadd.f32 %v2535, 0.01407047
      %v2570 = vadd.f32 %v2536, 0.01407047
      %v2571 = vadd.f32 %v2537, 0.01407047
      %v2572 = vadd.f32 %v2538, 0.01407047
      %v2573 = vadd.f32 %v2539, 0.01407047
      %v2574 = vadd.f32 %v2540, 0.01407047
      %v2575 = vadd.f32 %v2541, 0.01407047
      %v2576 = vadd.f32 %v2542, 0.01407047
      %v2577 = vadd.f32 %v2543, 0.01407047
      %v2578 = vadd.f32 %v2544, 0.01407047
      %v2579 = vadd.f32 %v2545, 0.01407047
      %v2580 = vadd.f32 %v2546, 0.01407047
      %v2581 = vadd.f32 %v2547, 0.01407047
      %v2582 = vadd.f32 %v2548, 0.01407047
      %v2583 = vadd.f32 %v2549, 0.01407047
      %v2584 = vadd.f32 %v2550, 0.01407047
      %v2585 = vadd.f32 %v2551, 0.01407047
      %v2586 = vadd.f32 %v2552, 0.01407047
      %v2587 = vadd.f32 %v2553, 0.01407047
      %v2588 = vadd.f32 %v2554, 0.01407047
      %v2589 = vadd.f32 %v2555, 0.01407047
      %v2590 = vadd.f32 %v2556, 0.01407047
      %v2591 = vadd.f32 %v2557, 0.01407047
      %v2592 = vadd.f32 %v2558, 0.01407047
      %v2593 = vadd.f32 %v2559, 0.01407047
      %v2594 = vmul.f32 %v2560, %v2084
      %v2595 = vmul.f32 %v2561, %v2085
      %v2596 = vmul.f32 %v2562, %v2086
      %v2597 = vmul.f32 %v2563, %v2087
      %v2598 = vmul.f32 %v2564, %v2088
      %v2599 = vmul.f32 %v2565, %v2089
      %v2600 = vmul.f32 %v2566, %v2090
      %v2601 = vmul.f32 %v2567, %v2091
      %v2602 = vmul.f32 %v2568, %v2092
      %v2603 = vmul.f32 %v2569, %v2093
      %v2604 = vmul.f32 %v2570, %v2094
      %v2605 = vmul.f32 %v2571, %v2095
      %v2606 = vmul.f32 %v2572, %v2096
      %v2607 = vmul.f32 %v2573, %v2097
      %v2608 = vmul.f32 %v2574, %v2098
      %v2609 = vmul.f32 %v2575, %v2099
      %v2610 = vmul.f32 %v2576, %v2100
      %v2611 = vmul.f32 %v2577, %v2101
      %v2612 = vmul.f32 %v2578, %v2102
      %v2613 = vmul.f32 %v2579, %v2103
      %v2614 = vmul.f32 %v2580, %v2104
      %v2615 = vmul.f32 %v2581, %v2105
      %v2616 = vmul.f32 %v2582, %v2106
      %v2617 = vmul.f32 %v2583, %v2107
      %v2618 = vmul.f32 %v2584, %v2108
      %v2619 = vmul.f32 %v2585, %v2109
      %v2620 = vmul.f32 %v2586, %v2110
      %v2621 = vmul.f32 %v2587, %v2111
      %v2622 = vmul.f32 %v2588, %v2112
      %v2623 = vmul.f32 %v2589, %v2113
      %v2624 = vmul.f32 %v2590, %v2114
      %v2625 = vmul.f32 %v2591, %v2115
      %v2626 = vmul.f32 %v2592, %v2116
      %v2627 = vmul.f32 %v2593, %v2117
      %v2628 = vadd.f32 %v2594, 0.11098505
      %v2629 = vadd.f32 %v2595, 0.11098505
      %v2630 = vadd.f32 %v2596, 0.11098505
      %v2631 = vadd.f32 %v2597, 0.11098505
      %v2632 = vadd.f32 %v2598, 0.11098505
      %v2633 = vadd.f32 %v2599, 0.11098505
      %v2634 = vadd.f32 %v2600, 0.11098505
      %v2635 = vadd.f32 %v2601, 0.11098505
      %v2636 = vadd.f32 %v2602, 0.11098505
      %v2637 = vadd.f32 %v2603, 0.11098505
      %v2638 = vadd.f32 %v2604, 0.11098505
      %v2639 = vadd.f32 %v2605, 0.11098505
      %v2640 = vadd.f32 %v2606, 0.11098505
      %v2641 = vadd.f32 %v2607, 0.11098505
      %v2642 = vadd.f32 %v2608, 0.11098505
      %v2643 = vadd.f32 %v2609, 0.11098505
      %v2644 = vadd.f32 %v2610, 0.11098505
      %v2645 = vadd.f32 %v2611, 0.11098505
      %v2646 = vadd.f32 %v2612, 0.11098505
      %v2647 = vadd.f32 %v2613, 0.11098505
      %v2648 = vadd.f32 %v2614, 0.11098505
      %v2649 = vadd.f32 %v2615, 0.11098505
      %v2650 = vadd.f32 %v2616, 0.11098505
      %v2651 = vadd.f32 %v2617, 0.11098505
      %v2652 = vadd.f32 %v2618, 0.11098505
      %v2653 = vadd.f32 %v2619, 0.11098505
      %v2654 = vadd.f32 %v2620, 0.11098505
      %v2655 = vadd.f32 %v2621, 0.11098505
      %v2656 = vadd.f32 %v2622, 0.11098505
      %v2657 = vadd.f32 %v2623, 0.11098505
      %v2658 = vadd.f32 %v2624, 0.11098505
      %v2659 = vadd.f32 %v2625, 0.11098505
      %v2660 = vadd.f32 %v2626, 0.11098505
      %v2661 = vadd.f32 %v2627, 0.11098505
      %v2662 = vmul.f32 %v2628, %v2084
      %v2663 = vmul.f32 %v2629, %v2085
      %v2664 = vmul.f32 %v2630, %v2086
      %v2665 = vmul.f32 %v2631, %v2087
      %v2666 = vmul.f32 %v2632, %v2088
      %v2667 = vmul.f32 %v2633, %v2089
      %v2668 = vmul.f32 %v2634, %v2090
      %v2669 = vmul.f32 %v2635, %v2091
      %v2670 = vmul.f32 %v2636, %v2092
      %v2671 = vmul.f32 %v2637, %v2093
      %v2672 = vmul.f32 %v2638, %v2094
      %v2673 = vmul.f32 %v2639, %v2095
      %v2674 = vmul.f32 %v2640, %v2096
      %v2675 = vmul.f32 %v2641, %v2097
      %v2676 = vmul.f32 %v2642, %v2098
      %v2677 = vmul.f32 %v2643, %v2099
      %v2678 = vmul.f32 %v2644, %v2100
      %v2679 = vmul.f32 %v2645, %v2101
      %v2680 = vmul.f32 %v2646, %v2102
      %v2681 = vmul.f32 %v2647, %v2103
      %v2682 = vmul.f32 %v2648, %v2104
      %v2683 = vmul.f32 %v2649, %v2105
      %v2684 = vmul.f32 %v2650, %v2106
      %v2685 = vmul.f32 %v2651, %v2107
      %v2686 = vmul.f32 %v2652, %v2108
      %v2687 = vmul.f32 %v2653, %v2109
      %v2688 = vmul.f32 %v2654, %v2110
      %v2689 = vmul.f32 %v2655, %v2111
      %v2690 = vmul.f32 %v2656, %v2112
      %v2691 = vmul.f32 %v2657, %v2113
      %v2692 = vmul.f32 %v2658, %v2114
      %v2693 = vmul.f32 %v2659, %v2115
      %v2694 = vmul.f32 %v2660, %v2116
      %v2695 = vmul.f32 %v2661, %v2117
      %v2696 = vadd.f32 %v2662, 0.49746925
      %v2697 = vadd.f32 %v2663, 0.49746925
      %v2698 = vadd.f32 %v2664, 0.49746925
      %v2699 = vadd.f32 %v2665, 0.49746925
      %v2700 = vadd.f32 %v2666, 0.49746925
      %v2701 = vadd.f32 %v2667, 0.49746925
      %v2702 = vadd.f32 %v2668, 0.49746925
      %v2703 = vadd.f32 %v2669, 0.49746925
      %v2704 = vadd.f32 %v2670, 0.49746925
      %v2705 = vadd.f32 %v2671, 0.49746925
      %v2706 = vadd.f32 %v2672, 0.49746925
      %v2707 = vadd.f32 %v2673, 0.49746925
      %v2708 = vadd.f32 %v2674, 0.49746925
      %v2709 = vadd.f32 %v2675, 0.49746925
      %v2710 = vadd.f32 %v2676, 0.49746925
      %v2711 = vadd.f32 %v2677, 0.49746925
      %v2712 = vadd.f32 %v2678, 0.49746925
      %v2713 = vadd.f32 %v2679, 0.49746925
      %v2714 = vadd.f32 %v2680, 0.49746925
      %v2715 = vadd.f32 %v2681, 0.49746925
      %v2716 = vadd.f32 %v2682, 0.49746925
      %v2717 = vadd.f32 %v2683, 0.49746925
      %v2718 = vadd.f32 %v2684, 0.49746925
      %v2719 = vadd.f32 %v2685, 0.49746925
      %v2720 = vadd.f32 %v2686, 0.49746925
      %v2721 = vadd.f32 %v2687, 0.49746925
      %v2722 = vadd.f32 %v2688, 0.49746925
      %v2723 = vadd.f32 %v2689, 0.49746925
      %v2724 = vadd.f32 %v2690, 0.49746925
      %v2725 = vadd.f32 %v2691, 0.49746925
      %v2726 = vadd.f32 %v2692, 0.49746925
      %v2727 = vadd.f32 %v2693, 0.49746925
      %v2728 = vadd.f32 %v2694, 0.49746925
      %v2729 = vadd.f32 %v2695, 0.49746925
      %v2730 = vmul.f32 %v2696, %v2084
      %v2731 = vmul.f32 %v2697, %v2085
      %v2732 = vmul.f32 %v2698, %v2086
      %v2733 = vmul.f32 %v2699, %v2087
      %v2734 = vmul.f32 %v2700, %v2088
      %v2735 = vmul.f32 %v2701, %v2089
      %v2736 = vmul.f32 %v2702, %v2090
      %v2737 = vmul.f32 %v2703, %v2091
      %v2738 = vmul.f32 %v2704, %v2092
      %v2739 = vmul.f32 %v2705, %v2093
      %v2740 = vmul.f32 %v2706, %v2094
      %v2741 = vmul.f32 %v2707, %v2095
      %v2742 = vmul.f32 %v2708, %v2096
      %v2743 = vmul.f32 %v2709, %v2097
      %v2744 = vmul.f32 %v2710, %v2098
      %v2745 = vmul.f32 %v2711, %v2099
      %v2746 = vmul.f32 %v2712, %v2100
      %v2747 = vmul.f32 %v2713, %v2101
      %v2748 = vmul.f32 %v2714, %v2102
      %v2749 = vmul.f32 %v2715, %v2103
      %v2750 = vmul.f32 %v2716, %v2104
      %v2751 = vmul.f32 %v2717, %v2105
      %v2752 = vmul.f32 %v2718, %v2106
      %v2753 = vmul.f32 %v2719, %v2107
      %v2754 = vmul.f32 %v2720, %v2108
      %v2755 = vmul.f32 %v2721, %v2109
      %v2756 = vmul.f32 %v2722, %v2110
      %v2757 = vmul.f32 %v2723, %v2111
      %v2758 = vmul.f32 %v2724, %v2112
      %v2759 = vmul.f32 %v2725, %v2113
      %v2760 = vmul.f32 %v2726, %v2114
      %v2761 = vmul.f32 %v2727, %v2115
      %v2762 = vmul.f32 %v2728, %v2116
      %v2763 = vmul.f32 %v2729, %v2117
      %v2764 = vadd.f32 %v2730, 1.0
      %v2765 = vadd.f32 %v2731, 1.0
      %v2766 = vadd.f32 %v2732, 1.0
      %v2767 = vadd.f32 %v2733, 1.0
      %v2768 = vadd.f32 %v2734, 1.0
      %v2769 = vadd.f32 %v2735, 1.0
      %v2770 = vadd.f32 %v2736, 1.0
      %v2771 = vadd.f32 %v2737, 1.0
      %v2772 = vadd.f32 %v2738, 1.0
      %v2773 = vadd.f32 %v2739, 1.0
      %v2774 = vadd.f32 %v2740, 1.0
      %v2775 = vadd.f32 %v2741, 1.0
      %v2776 = vadd.f32 %v2742, 1.0
      %v2777 = vadd.f32 %v2743, 1.0
      %v2778 = vadd.f32 %v2744, 1.0
      %v2779 = vadd.f32 %v2745, 1.0
      %v2780 = vadd.f32 %v2746, 1.0
      %v2781 = vadd.f32 %v2747, 1.0
      %v2782 = vadd.f32 %v2748, 1.0
      %v2783 = vadd.f32 %v2749, 1.0
      %v2784 = vadd.f32 %v2750, 1.0
      %v2785 = vadd.f32 %v2751, 1.0
      %v2786 = vadd.f32 %v2752, 1.0
      %v2787 = vadd.f32 %v2753, 1.0
      %v2788 = vadd.f32 %v2754, 1.0
      %v2789 = vadd.f32 %v2755, 1.0
      %v2790 = vadd.f32 %v2756, 1.0
      %v2791 = vadd.f32 %v2757, 1.0
      %v2792 = vadd.f32 %v2758, 1.0
      %v2793 = vadd.f32 %v2759, 1.0
      %v2794 = vadd.f32 %v2760, 1.0
      %v2795 = vadd.f32 %v2761, 1.0
      %v2796 = vadd.f32 %v2762, 1.0
      %v2797 = vadd.f32 %v2763, 1.0
      %v2798 = vmul.f32 %v2050, %v2356
      %v2799 = vmul.f32 %v2051, %v2357
      %v2800 = vmul.f32 %v2052, %v2358
      %v2801 = vmul.f32 %v2053, %v2359
      %v2802 = vmul.f32 %v2054, %v2360
      %v2803 = vmul.f32 %v2055, %v2361
      %v2804 = vmul.f32 %v2056, %v2362
      %v2805 = vmul.f32 %v2057, %v2363
      %v2806 = vmul.f32 %v2058, %v2364
      %v2807 = vmul.f32 %v2059, %v2365
      %v2808 = vmul.f32 %v2060, %v2366
      %v2809 = vmul.f32 %v2061, %v2367
      %v2810 = vmul.f32 %v2062, %v2368
      %v2811 = vmul.f32 %v2063, %v2369
      %v2812 = vmul.f32 %v2064, %v2370
      %v2813 = vmul.f32 %v2065, %v2371
      %v2814 = vmul.f32 %v2066, %v2372
      %v2815 = vmul.f32 %v2067, %v2373
      %v2816 = vmul.f32 %v2068, %v2374
      %v2817 = vmul.f32 %v2069, %v2375
      %v2818 = vmul.f32 %v2070, %v2376
      %v2819 = vmul.f32 %v2071, %v2377
      %v2820 = vmul.f32 %v2072, %v2378
      %v2821 = vmul.f32 %v2073, %v2379
      %v2822 = vmul.f32 %v2074, %v2380
      %v2823 = vmul.f32 %v2075, %v2381
      %v2824 = vmul.f32 %v2076, %v2382
      %v2825 = vmul.f32 %v2077, %v2383
      %v2826 = vmul.f32 %v2078, %v2384
      %v2827 = vmul.f32 %v2079, %v2385
      %v2828 = vmul.f32 %v2080, %v2386
      %v2829 = vmul.f32 %v2081, %v2387
      %v2830 = vmul.f32 %v2082, %v2388
      %v2831 = vmul.f32 %v2083, %v2389
      %v2832 = vrcp.pop %v2764
      %v2833 = vrcp.pop %v2765
      %v2834 = vrcp.pop %v2766
      %v2835 = vrcp.pop %v2767
      %v2836 = vrcp.pop %v2768
      %v2837 = vrcp.pop %v2769
      %v2838 = vrcp.pop %v2770
      %v2839 = vrcp.pop %v2771
      %v2840 = vrcp.pop %v2772
      %v2841 = vrcp.pop %v2773
      %v2842 = vrcp.pop %v2774
      %v2843 = vrcp.pop %v2775
      %v2844 = vrcp.pop %v2776
      %v2845 = vrcp.pop %v2777
      %v2846 = vrcp.pop %v2778
      %v2847 = vrcp.pop %v2779
      %v2848 = vrcp.pop %v2780
      %v2849 = vrcp.pop %v2781
      %v2850 = vrcp.pop %v2782
      %v2851 = vrcp.pop %v2783
      %v2852 = vrcp.pop %v2784
      %v2853 = vrcp.pop %v2785
      %v2854 = vrcp.pop %v2786
      %v2855 = vrcp.pop %v2787
      %v2856 = vrcp.pop %v2788
      %v2857 = vrcp.pop %v2789
      %v2858 = vrcp.pop %v2790
      %v2859 = vrcp.pop %v2791
      %v2860 = vrcp.pop %v2792
      %v2861 = vrcp.pop %v2793
      %v2862 = vrcp.pop %v2794
      %v2863 = vrcp.pop %v2795
      %v2864 = vrcp.pop %v2796
      %v2865 = vrcp.pop %v2797
      %v2866 = vmul.f32 %v2798, %v2832
      %v2867 = vmul.f32 %v2799, %v2833
      %v2868 = vmul.f32 %v2800, %v2834
      %v2869 = vmul.f32 %v2801, %v2835
      %v2870 = vmul.f32 %v2802, %v2836
      %v2871 = vmul.f32 %v2803, %v2837
      %v2872 = vmul.f32 %v2804, %v2838
      %v2873 = vmul.f32 %v2805, %v2839
      %v2874 = vmul.f32 %v2806, %v2840
      %v2875 = vmul.f32 %v2807, %v2841
      %v2876 = vmul.f32 %v2808, %v2842
      %v2877 = vmul.f32 %v2809, %v2843
      %v2878 = vmul.f32 %v2810, %v2844
      %v2879 = vmul.f32 %v2811, %v2845
      %v2880 = vmul.f32 %v2812, %v2846
      %v2881 = vmul.f32 %v2813, %v2847
      %v2882 = vmul.f32 %v2814, %v2848
      %v2883 = vmul.f32 %v2815, %v2849
      %v2884 = vmul.f32 %v2816, %v2850
      %v2885 = vmul.f32 %v2817, %v2851
      %v2886 = vmul.f32 %v2818, %v2852
      %v2887 = vmul.f32 %v2819, %v2853
      %v2888 = vmul.f32 %v2820, %v2854
      %v2889 = vmul.f32 %v2821, %v2855
      %v2890 = vmul.f32 %v2822, %v2856
      %v2891 = vmul.f32 %v2823, %v2857
      %v2892 = vmul.f32 %v2824, %v2858
      %v2893 = vmul.f32 %v2825, %v2859
      %v2894 = vmul.f32 %v2826, %v2860
      %v2895 = vmul.f32 %v2827, %v2861
      %v2896 = vmul.f32 %v2828, %v2862
      %v2897 = vmul.f32 %v2829, %v2863
      %v2898 = vmul.f32 %v2830, %v2864
      %v2899 = vmul.f32 %v2831, %v2865
      %v2900 = vadd.f32 %v2866, 1.0
      %v2901 = vadd.f32 %v2867, 1.0
      %v2902 = vadd.f32 %v2868, 1.0
      %v2903 = vadd.f32 %v2869, 1.0
      %v2904 = vadd.f32 %v2870, 1.0
      %v2905 = vadd.f32 %v2871, 1.0
      %v2906 = vadd.f32 %v2872, 1.0
      %v2907 = vadd.f32 %v2873, 1.0
      %v2908 = vadd.f32 %v2874, 1.0
      %v2909 = vadd.f32 %v2875, 1.0
      %v2910 = vadd.f32 %v2876, 1.0
      %v2911 = vadd.f32 %v2877, 1.0
      %v2912 = vadd.f32 %v2878, 1.0
      %v2913 = vadd.f32 %v2879, 1.0
      %v2914 = vadd.f32 %v2880, 1.0
      %v2915 = vadd.f32 %v2881, 1.0
      %v2916 = vadd.f32 %v2882, 1.0
      %v2917 = vadd.f32 %v2883, 1.0
      %v2918 = vadd.f32 %v2884, 1.0
      %v2919 = vadd.f32 %v2885, 1.0
      %v2920 = vadd.f32 %v2886, 1.0
      %v2921 = vadd.f32 %v2887, 1.0
      %v2922 = vadd.f32 %v2888, 1.0
      %v2923 = vadd.f32 %v2889, 1.0
      %v2924 = vadd.f32 %v2890, 1.0
      %v2925 = vadd.f32 %v2891, 1.0
      %v2926 = vadd.f32 %v2892, 1.0
      %v2927 = vadd.f32 %v2893, 1.0
      %v2928 = vadd.f32 %v2894, 1.0
      %v2929 = vadd.f32 %v2895, 1.0
      %v2930 = vadd.f32 %v2896, 1.0
      %v2931 = vadd.f32 %v2897, 1.0
      %v2932 = vadd.f32 %v2898, 1.0
      %v2933 = vadd.f32 %v2899, 1.0
      %v2934 = vmul.f32 %v1948, %v2900
      %v2935 = vmul.f32 %v1949, %v2901
      %v2936 = vmul.f32 %v1950, %v2902
      %v2937 = vmul.f32 %v1951, %v2903
      %v2938 = vmul.f32 %v1952, %v2904
      %v2939 = vmul.f32 %v1953, %v2905
      %v2940 = vmul.f32 %v1954, %v2906
      %v2941 = vmul.f32 %v1955, %v2907
      %v2942 = vmul.f32 %v1956, %v2908
      %v2943 = vmul.f32 %v1957, %v2909
      %v2944 = vmul.f32 %v1958, %v2910
      %v2945 = vmul.f32 %v1959, %v2911
      %v2946 = vmul.f32 %v1960, %v2912
      %v2947 = vmul.f32 %v1961, %v2913
      %v2948 = vmul.f32 %v1962, %v2914
      %v2949 = vmul.f32 %v1963, %v2915
      %v2950 = vmul.f32 %v1964, %v2916
      %v2951 = vmul.f32 %v1965, %v2917
      %v2952 = vmul.f32 %v1966, %v2918
      %v2953 = vmul.f32 %v1967, %v2919
      %v2954 = vmul.f32 %v1968, %v2920
      %v2955 = vmul.f32 %v1969, %v2921
      %v2956 = vmul.f32 %v1970, %v2922
      %v2957 = vmul.f32 %v1971, %v2923
      %v2958 = vmul.f32 %v1972, %v2924
      %v2959 = vmul.f32 %v1973, %v2925
      %v2960 = vmul.f32 %v1974, %v2926
      %v2961 = vmul.f32 %v1975, %v2927
      %v2962 = vmul.f32 %v1976, %v2928
      %v2963 = vmul.f32 %v1977, %v2929
      %v2964 = vmul.f32 %v1978, %v2930
      %v2965 = vmul.f32 %v1979, %v2931
      %v2966 = vmul.f32 %v1980, %v2932
      %v2967 = vmul.f32 %v1981, %v2933
      %s2968 = sadd.s32 %s196, 16
      %p2969 = scmp.lt.s32.totalorder %s2968, 16
      %s2970 = scalar_select %p2969, 1, 0
      %v2971 = vstv %s2970
      %vm2972 = vcmp.eq.s32.totalorder %v2971, 1
      %v2973 = vsel 1, %v2934, 0.0
      %v2974 = vsel 1, %v2935, 0.0
      %v2975 = vsel 1, %v2936, 0.0
      %v2976 = vsel 1, %v2937, 0.0
      %v2977 = vsel 1, %v2938, 0.0
      %v2978 = vsel 1, %v2939, 0.0
      %v2979 = vsel 1, %v2940, 0.0
      %v2980 = vsel 1, %v2941, 0.0
      %v2981 = vsel 1, %v2942, 0.0
      %v2982 = vsel 1, %v2943, 0.0
      %v2983 = vsel 1, %v2944, 0.0
      %v2984 = vsel 1, %v2945, 0.0
      %v2985 = vsel 1, %v2946, 0.0
      %v2986 = vsel 1, %v2947, 0.0
      %v2987 = vsel 1, %v2948, 0.0
      %v2988 = vsel 1, %v2949, 0.0
      %v2989 = vsel 1, %v2950, 0.0
      %v2990 = vsel 1, %v2951, 0.0
      %v2991 = vsel 1, %v2952, 0.0
      %v2992 = vsel 1, %v2953, 0.0
      %v2993 = vsel 1, %v2954, 0.0
      %v2994 = vsel 1, %v2955, 0.0
      %v2995 = vsel 1, %v2956, 0.0
      %v2996 = vsel 1, %v2957, 0.0
      %v2997 = vsel 1, %v2958, 0.0
      %v2998 = vsel 1, %v2959, 0.0
      %v2999 = vsel 1, %v2960, 0.0
      %v3000 = vsel 1, %v2961, 0.0
      %v3001 = vsel 1, %v2962, 0.0
      %v3002 = vsel 1, %v2963, 0.0
      %v3003 = vsel 1, %v2964, 0.0
      %v3004 = vsel 1, %v2965, 0.0
      %v3005 = vsel %vm2972, %v2966, 0.0
      %v3006 = vsel %vm2972, %v2967, 0.0
      %v3041 = vrot.slane %v2973, 1
      %v3042 = vrot.slane %v2974, 1
      %v3043 = vsel %vm307, %v3041, %v3042
      %v3044 = vrot.slane %v2975, 1
      %v3045 = vrot.slane %v2976, 1
      %v3046 = vsel %vm307, %v3044, %v3045
      %v3047 = vrot.slane %v2977, 1
      %v3048 = vrot.slane %v2978, 1
      %v3049 = vsel %vm307, %v3047, %v3048
      %v3050 = vrot.slane %v2979, 1
      %v3051 = vrot.slane %v2980, 1
      %v3052 = vsel %vm307, %v3050, %v3051
      %v3053 = vrot.slane %v2981, 1
      %v3054 = vrot.slane %v2982, 1
      %v3055 = vsel %vm307, %v3053, %v3054
      %v3056 = vrot.slane %v2983, 1
      %v3057 = vrot.slane %v2984, 1
      %v3058 = vsel %vm307, %v3056, %v3057
      %v3059 = vrot.slane %v2985, 1
      %v3060 = vrot.slane %v2986, 1
      %v3061 = vsel %vm307, %v3059, %v3060
      %v3062 = vrot.slane %v2987, 1
      %v3063 = vrot.slane %v2988, 1
      %v3064 = vsel %vm307, %v3062, %v3063
      %v3065 = vrot.slane %v2989, 1
      %v3066 = vrot.slane %v2990, 1
      %v3067 = vsel %vm307, %v3065, %v3066
      %v3068 = vrot.slane %v2991, 1
      %v3069 = vrot.slane %v2992, 1
      %v3070 = vsel %vm307, %v3068, %v3069
      %v3071 = vrot.slane %v2993, 1
      %v3072 = vrot.slane %v2994, 1
      %v3073 = vsel %vm307, %v3071, %v3072
      %v3074 = vrot.slane %v2995, 1
      %v3075 = vrot.slane %v2996, 1
      %v3076 = vsel %vm307, %v3074, %v3075
      %v3077 = vrot.slane %v2997, 1
      %v3078 = vrot.slane %v2998, 1
      %v3079 = vsel %vm307, %v3077, %v3078
      %v3080 = vrot.slane %v2999, 1
      %v3081 = vrot.slane %v3000, 1
      %v3082 = vsel %vm307, %v3080, %v3081
      %v3083 = vrot.slane %v3001, 1
      %v3084 = vrot.slane %v3002, 1
      %v3085 = vsel %vm307, %v3083, %v3084
      %v3086 = vrot.slane %v3003, 1
      %v3087 = vrot.slane %v3004, 1
      %v3088 = vsel %vm307, %v3086, %v3087
      %v3089 = vrot.slane %v3005, 1
      %v3090 = vrot.slane %v3006, 1
      %v3091 = vsel %vm307, %v3089, %v3090
      %v3109 = vsel %vm307, %v3042, 0.0
      %v3110 = vsel %vm307, %v3045, 0.0
      %v3111 = vsel %vm307, %v3048, 0.0
      %v3112 = vsel %vm307, %v3051, 0.0
      %v3113 = vsel %vm307, %v3054, 0.0
      %v3114 = vsel %vm307, %v3057, 0.0
      %v3115 = vsel %vm307, %v3060, 0.0
      %v3116 = vsel %vm307, %v3063, 0.0
      %v3117 = vsel %vm307, %v3066, 0.0
      %v3118 = vsel %vm307, %v3069, 0.0
      %v3119 = vsel %vm307, %v3072, 0.0
      %v3120 = vsel %vm307, %v3075, 0.0
      %v3121 = vsel %vm307, %v3078, 0.0
      %v3122 = vsel %vm307, %v3081, 0.0
      %v3123 = vsel %vm307, %v3084, 0.0
      %v3124 = vsel %vm307, %v3087, 0.0
      %v3125 = vsel %vm307, %v3090, 0.0
      %3142 = vrot.lane.b32.xlu0 %v3043, 8
      %v3143 = vpop.permute.xlu0 %3142
      %3144 = vrot.lane.b32.xlu0 %v3109, 8
      %v3145 = vpop.permute.xlu0 %3144
      %3146 = vrot.lane.b32.xlu0 %v3046, 8
      %v3147 = vpop.permute.xlu0 %3146
      %3148 = vrot.lane.b32.xlu0 %v3110, 8
      %v3149 = vpop.permute.xlu0 %3148
      %3150 = vrot.lane.b32.xlu0 %v3049, 8
      %v3151 = vpop.permute.xlu0 %3150
      %3152 = vrot.lane.b32.xlu0 %v3111, 8
      %v3153 = vpop.permute.xlu0 %3152
      %3154 = vrot.lane.b32.xlu0 %v3052, 8
      %v3155 = vpop.permute.xlu0 %3154
      %3156 = vrot.lane.b32.xlu0 %v3112, 8
      %v3157 = vpop.permute.xlu0 %3156
      %3158 = vrot.lane.b32.xlu0 %v3055, 8
      %v3159 = vpop.permute.xlu0 %3158
      %3160 = vrot.lane.b32.xlu0 %v3113, 8
      %v3161 = vpop.permute.xlu0 %3160
      %3162 = vrot.lane.b32.xlu0 %v3058, 8
      %v3163 = vpop.permute.xlu0 %3162
      %3164 = vrot.lane.b32.xlu0 %v3114, 8
      %v3165 = vpop.permute.xlu0 %3164
      %3166 = vrot.lane.b32.xlu0 %v3061, 8
      %v3167 = vpop.permute.xlu0 %3166
      %3168 = vrot.lane.b32.xlu0 %v3115, 8
      %v3169 = vpop.permute.xlu0 %3168
      %3170 = vrot.lane.b32.xlu0 %v3064, 8
      %v3171 = vpop.permute.xlu0 %3170
      %3172 = vrot.lane.b32.xlu0 %v3116, 8
      %v3173 = vpop.permute.xlu0 %3172
      %3174 = vrot.lane.b32.xlu0 %v3067, 8
      %v3175 = vpop.permute.xlu0 %3174
      %3176 = vrot.lane.b32.xlu0 %v3117, 8
      %v3177 = vpop.permute.xlu0 %3176
      %3178 = vrot.lane.b32.xlu0 %v3070, 8
      %v3179 = vpop.permute.xlu0 %3178
      %3180 = vrot.lane.b32.xlu0 %v3118, 8
      %v3181 = vpop.permute.xlu0 %3180
      %3182 = vrot.lane.b32.xlu0 %v3073, 8
      %v3183 = vpop.permute.xlu0 %3182
      %3184 = vrot.lane.b32.xlu0 %v3119, 8
      %v3185 = vpop.permute.xlu0 %3184
      %3186 = vrot.lane.b32.xlu0 %v3076, 8
      %v3187 = vpop.permute.xlu0 %3186
      %3188 = vrot.lane.b32.xlu0 %v3120, 8
      %v3189 = vpop.permute.xlu0 %3188
      %3190 = vrot.lane.b32.xlu0 %v3079, 8
      %v3191 = vpop.permute.xlu0 %3190
      %3192 = vrot.lane.b32.xlu0 %v3121, 8
      %v3193 = vpop.permute.xlu0 %3192
      %3194 = vrot.lane.b32.xlu0 %v3082, 8
      %v3195 = vpop.permute.xlu0 %3194
      %3196 = vrot.lane.b32.xlu0 %v3122, 8
      %v3197 = vpop.permute.xlu0 %3196
      %3198 = vrot.lane.b32.xlu0 %v3085, 8
      %v3199 = vpop.permute.xlu0 %3198
      %3200 = vrot.lane.b32.xlu0 %v3123, 8
      %v3201 = vpop.permute.xlu0 %3200
      %3202 = vrot.lane.b32.xlu0 %v3088, 8
      %v3203 = vpop.permute.xlu0 %3202
      %3204 = vrot.lane.b32.xlu0 %v3124, 8
      %v3205 = vpop.permute.xlu0 %3204
      %3238 = vrot.lane.b32.xlu0 %v2975, 16
      %v3239 = vpop.permute.xlu0 %3238
      %3240 = vrot.lane.b32.xlu0 %v2976, 16
      %v3241 = vpop.permute.xlu0 %3240
      %3242 = vrot.lane.b32.xlu0 %v2977, 16
      %v3243 = vpop.permute.xlu0 %3242
      %3244 = vrot.lane.b32.xlu0 %v2978, 16
      %v3245 = vpop.permute.xlu0 %3244
      %3246 = vrot.lane.b32.xlu0 %v2979, 16
      %v3247 = vpop.permute.xlu0 %3246
      %3248 = vrot.lane.b32.xlu0 %v2980, 16
      %v3249 = vpop.permute.xlu0 %3248
      %3250 = vrot.lane.b32.xlu0 %v2981, 16
      %v3251 = vpop.permute.xlu0 %3250
      %3252 = vrot.lane.b32.xlu0 %v2982, 16
      %v3253 = vpop.permute.xlu0 %3252
      %3254 = vrot.lane.b32.xlu0 %v2983, 16
      %v3255 = vpop.permute.xlu0 %3254
      %3256 = vrot.lane.b32.xlu0 %v2984, 16
      %v3257 = vpop.permute.xlu0 %3256
      %3258 = vrot.lane.b32.xlu0 %v2985, 16
      %v3259 = vpop.permute.xlu0 %3258
      %3260 = vrot.lane.b32.xlu0 %v2986, 16
      %v3261 = vpop.permute.xlu0 %3260
      %3262 = vrot.lane.b32.xlu0 %v2987, 16
      %v3263 = vpop.permute.xlu0 %3262
      %3264 = vrot.lane.b32.xlu0 %v2988, 16
      %v3265 = vpop.permute.xlu0 %3264
      %3266 = vrot.lane.b32.xlu0 %v2989, 16
      %v3267 = vpop.permute.xlu0 %3266
      %3268 = vrot.lane.b32.xlu0 %v2990, 16
      %v3269 = vpop.permute.xlu0 %3268
      %3270 = vrot.lane.b32.xlu0 %v2991, 16
      %v3271 = vpop.permute.xlu0 %3270
      %3272 = vrot.lane.b32.xlu0 %v2992, 16
      %v3273 = vpop.permute.xlu0 %3272
      %3274 = vrot.lane.b32.xlu0 %v2993, 16
      %v3275 = vpop.permute.xlu0 %3274
      %3276 = vrot.lane.b32.xlu0 %v2994, 16
      %v3277 = vpop.permute.xlu0 %3276
      %3278 = vrot.lane.b32.xlu0 %v2995, 16
      %v3279 = vpop.permute.xlu0 %3278
      %3280 = vrot.lane.b32.xlu0 %v2996, 16
      %v3281 = vpop.permute.xlu0 %3280
      %3282 = vrot.lane.b32.xlu0 %v2997, 16
      %v3283 = vpop.permute.xlu0 %3282
      %3284 = vrot.lane.b32.xlu0 %v2998, 16
      %v3285 = vpop.permute.xlu0 %3284
      %3286 = vrot.lane.b32.xlu0 %v2999, 16
      %v3287 = vpop.permute.xlu0 %3286
      %3288 = vrot.lane.b32.xlu0 %v3000, 16
      %v3289 = vpop.permute.xlu0 %3288
      %3290 = vrot.lane.b32.xlu0 %v3001, 16
      %v3291 = vpop.permute.xlu0 %3290
      %3292 = vrot.lane.b32.xlu0 %v3002, 16
      %v3293 = vpop.permute.xlu0 %3292
      %3294 = vrot.lane.b32.xlu0 %v3003, 16
      %v3295 = vpop.permute.xlu0 %3294
      %3296 = vrot.lane.b32.xlu0 %v3004, 16
      %v3297 = vpop.permute.xlu0 %3296
      %3298 = vrot.lane.b32.xlu0 %v3005, 16
      %v3299 = vpop.permute.xlu0 %3298
      %3300 = vrot.lane.b32.xlu0 %v3006, 16
      %v3301 = vpop.permute.xlu0 %3300
      %3335 = vrot.lane.b32.xlu0 %v3046, 24
      %v3336 = vpop.permute.xlu0 %3335
      %3337 = vrot.lane.b32.xlu0 %v3110, 24
      %v3338 = vpop.permute.xlu0 %3337
      %3339 = vrot.lane.b32.xlu0 %v3049, 24
      %v3340 = vpop.permute.xlu0 %3339
      %3341 = vrot.lane.b32.xlu0 %v3111, 24
      %v3342 = vpop.permute.xlu0 %3341
      %3343 = vrot.lane.b32.xlu0 %v3052, 24
      %v3344 = vpop.permute.xlu0 %3343
      %3345 = vrot.lane.b32.xlu0 %v3112, 24
      %v3346 = vpop.permute.xlu0 %3345
      %3347 = vrot.lane.b32.xlu0 %v3055, 24
      %v3348 = vpop.permute.xlu0 %3347
      %3349 = vrot.lane.b32.xlu0 %v3113, 24
      %v3350 = vpop.permute.xlu0 %3349
      %3351 = vrot.lane.b32.xlu0 %v3058, 24
      %v3352 = vpop.permute.xlu0 %3351
      %3353 = vrot.lane.b32.xlu0 %v3114, 24
      %v3354 = vpop.permute.xlu0 %3353
      %3355 = vrot.lane.b32.xlu0 %v3061, 24
      %v3356 = vpop.permute.xlu0 %3355
      %3357 = vrot.lane.b32.xlu0 %v3115, 24
      %v3358 = vpop.permute.xlu0 %3357
      %3359 = vrot.lane.b32.xlu0 %v3064, 24
      %v3360 = vpop.permute.xlu0 %3359
      %3361 = vrot.lane.b32.xlu0 %v3116, 24
      %v3362 = vpop.permute.xlu0 %3361
      %3363 = vrot.lane.b32.xlu0 %v3067, 24
      %v3364 = vpop.permute.xlu0 %3363
      %3365 = vrot.lane.b32.xlu0 %v3117, 24
      %v3366 = vpop.permute.xlu0 %3365
      %3367 = vrot.lane.b32.xlu0 %v3070, 24
      %v3368 = vpop.permute.xlu0 %3367
      %3369 = vrot.lane.b32.xlu0 %v3118, 24
      %v3370 = vpop.permute.xlu0 %3369
      %3371 = vrot.lane.b32.xlu0 %v3073, 24
      %v3372 = vpop.permute.xlu0 %3371
      %3373 = vrot.lane.b32.xlu0 %v3119, 24
      %v3374 = vpop.permute.xlu0 %3373
      %3375 = vrot.lane.b32.xlu0 %v3076, 24
      %v3376 = vpop.permute.xlu0 %3375
      %3377 = vrot.lane.b32.xlu0 %v3120, 24
      %v3378 = vpop.permute.xlu0 %3377
      %3379 = vrot.lane.b32.xlu0 %v3079, 24
      %v3380 = vpop.permute.xlu0 %3379
      %3381 = vrot.lane.b32.xlu0 %v3121, 24
      %v3382 = vpop.permute.xlu0 %3381
      %3383 = vrot.lane.b32.xlu0 %v3082, 24
      %v3384 = vpop.permute.xlu0 %3383
      %3385 = vrot.lane.b32.xlu0 %v3122, 24
      %v3386 = vpop.permute.xlu0 %3385
      %3387 = vrot.lane.b32.xlu0 %v3085, 24
      %v3388 = vpop.permute.xlu0 %3387
      %3389 = vrot.lane.b32.xlu0 %v3123, 24
      %v3390 = vpop.permute.xlu0 %3389
      %3391 = vrot.lane.b32.xlu0 %v3088, 24
      %v3392 = vpop.permute.xlu0 %3391
      %3393 = vrot.lane.b32.xlu0 %v3124, 24
      %v3394 = vpop.permute.xlu0 %3393
      %3395 = vrot.lane.b32.xlu0 %v3091, 24
      %v3396 = vpop.permute.xlu0 %3395
      %3397 = vrot.lane.b32.xlu0 %v3125, 24
      %v3398 = vpop.permute.xlu0 %3397
      %v3431 = vsel %vm1356, %v2973, %v3143
      %v3432 = vsel %vm1356, %v2974, %v3145
      %v3433 = vsel %vm1356, %v2975, %v3147
      %v3434 = vsel %vm1356, %v2976, %v3149
      %v3435 = vsel %vm1356, %v2977, %v3151
      %v3436 = vsel %vm1356, %v2978, %v3153
      %v3437 = vsel %vm1356, %v2979, %v3155
      %v3438 = vsel %vm1356, %v2980, %v3157
      %v3439 = vsel %vm1356, %v2981, %v3159
      %v3440 = vsel %vm1356, %v2982, %v3161
      %v3441 = vsel %vm1356, %v2983, %v3163
      %v3442 = vsel %vm1356, %v2984, %v3165
      %v3443 = vsel %vm1356, %v2985, %v3167
      %v3444 = vsel %vm1356, %v2986, %v3169
      %v3445 = vsel %vm1356, %v2987, %v3171
      %v3446 = vsel %vm1356, %v2988, %v3173
      %v3447 = vsel %vm1356, %v2989, %v3175
      %v3448 = vsel %vm1356, %v2990, %v3177
      %v3449 = vsel %vm1356, %v2991, %v3179
      %v3450 = vsel %vm1356, %v2992, %v3181
      %v3451 = vsel %vm1356, %v2993, %v3183
      %v3452 = vsel %vm1356, %v2994, %v3185
      %v3453 = vsel %vm1356, %v2995, %v3187
      %v3454 = vsel %vm1356, %v2996, %v3189
      %v3455 = vsel %vm1356, %v2997, %v3191
      %v3456 = vsel %vm1356, %v2998, %v3193
      %v3457 = vsel %vm1356, %v2999, %v3195
      %v3458 = vsel %vm1356, %v3000, %v3197
      %v3459 = vsel %vm1356, %v3001, %v3199
      %v3460 = vsel %vm1356, %v3002, %v3201
      %v3461 = vsel %vm1356, %v3003, %v3203
      %v3462 = vsel %vm1356, %v3004, %v3205
      %v3463 = vsel %vm1426, %v3431, %v3239
      %v3464 = vsel %vm1426, %v3432, %v3241
      %v3465 = vsel %vm1426, %v3433, %v3243
      %v3466 = vsel %vm1426, %v3434, %v3245
      %v3467 = vsel %vm1426, %v3435, %v3247
      %v3468 = vsel %vm1426, %v3436, %v3249
      %v3469 = vsel %vm1426, %v3437, %v3251
      %v3470 = vsel %vm1426, %v3438, %v3253
      %v3471 = vsel %vm1426, %v3439, %v3255
      %v3472 = vsel %vm1426, %v3440, %v3257
      %v3473 = vsel %vm1426, %v3441, %v3259
      %v3474 = vsel %vm1426, %v3442, %v3261
      %v3475 = vsel %vm1426, %v3443, %v3263
      %v3476 = vsel %vm1426, %v3444, %v3265
      %v3477 = vsel %vm1426, %v3445, %v3267
      %v3478 = vsel %vm1426, %v3446, %v3269
      %v3479 = vsel %vm1426, %v3447, %v3271
      %v3480 = vsel %vm1426, %v3448, %v3273
      %v3481 = vsel %vm1426, %v3449, %v3275
      %v3482 = vsel %vm1426, %v3450, %v3277
      %v3483 = vsel %vm1426, %v3451, %v3279
      %v3484 = vsel %vm1426, %v3452, %v3281
      %v3485 = vsel %vm1426, %v3453, %v3283
      %v3486 = vsel %vm1426, %v3454, %v3285
      %v3487 = vsel %vm1426, %v3455, %v3287
      %v3488 = vsel %vm1426, %v3456, %v3289
      %v3489 = vsel %vm1426, %v3457, %v3291
      %v3490 = vsel %vm1426, %v3458, %v3293
      %v3491 = vsel %vm1426, %v3459, %v3295
      %v3492 = vsel %vm1426, %v3460, %v3297
      %v3493 = vsel %vm1426, %v3461, %v3299
      %v3494 = vsel %vm1426, %v3462, %v3301
      %v3495 = vsel %vm1496, %v3463, %v3336
      %v3496 = vsel %vm1496, %v3464, %v3338
      %v3497 = vsel %vm1496, %v3465, %v3340
      %v3498 = vsel %vm1496, %v3466, %v3342
      %v3499 = vsel %vm1496, %v3467, %v3344
      %v3500 = vsel %vm1496, %v3468, %v3346
      %v3501 = vsel %vm1496, %v3469, %v3348
      %v3502 = vsel %vm1496, %v3470, %v3350
      %v3503 = vsel %vm1496, %v3471, %v3352
      %v3504 = vsel %vm1496, %v3472, %v3354
      %v3505 = vsel %vm1496, %v3473, %v3356
      %v3506 = vsel %vm1496, %v3474, %v3358
      %v3507 = vsel %vm1496, %v3475, %v3360
      %v3508 = vsel %vm1496, %v3476, %v3362
      %v3509 = vsel %vm1496, %v3477, %v3364
      %v3510 = vsel %vm1496, %v3478, %v3366
      %v3511 = vsel %vm1496, %v3479, %v3368
      %v3512 = vsel %vm1496, %v3480, %v3370
      %v3513 = vsel %vm1496, %v3481, %v3372
      %v3514 = vsel %vm1496, %v3482, %v3374
      %v3515 = vsel %vm1496, %v3483, %v3376
      %v3516 = vsel %vm1496, %v3484, %v3378
      %v3517 = vsel %vm1496, %v3485, %v3380
      %v3518 = vsel %vm1496, %v3486, %v3382
      %v3519 = vsel %vm1496, %v3487, %v3384
      %v3520 = vsel %vm1496, %v3488, %v3386
      %v3521 = vsel %vm1496, %v3489, %v3388
      %v3522 = vsel %vm1496, %v3490, %v3390
      %v3523 = vsel %vm1496, %v3491, %v3392
      %v3524 = vsel %vm1496, %v3492, %v3394
      %v3525 = vsel %vm1496, %v3493, %v3396
      %v3526 = vsel %vm1496, %v3494, %v3398
      %v3527 = vld [vmem:[%s2] sm:$0xff]
      %v3528 = vld [vmem:[%s2 + $0x8] sm:$0xff]
      %v3529 = vld [vmem:[%s2 + $0x10] sm:$0xff]
      %v3530 = vld [vmem:[%s2 + $0x18] sm:$0xff]
      %v3532 = vsel %vm1566, %v3495, 0
      %v3535 = vsel %vm1566, %v3496, 0
      %v3538 = vsel %vm1566, %v3497, 0
      %v3541 = vsel %vm1566, %v3498, 0
      %v3544 = vsel %vm1566, %v3499, 0
      %v3547 = vsel %vm1566, %v3500, 0
      %v3550 = vsel %vm1566, %v3501, 0
      %v3553 = vsel %vm1566, %v3502, 0
      %v3556 = vsel %vm1566, %v3503, 0
      %v3559 = vsel %vm1566, %v3504, 0
      %v3562 = vsel %vm1566, %v3505, 0
      %v3565 = vsel %vm1566, %v3506, 0
      %v3568 = vsel %vm1566, %v3507, 0
      %v3571 = vsel %vm1566, %v3508, 0
      %v3574 = vsel %vm1566, %v3509, 0
      %v3577 = vsel %vm1566, %v3510, 0
      %v3580 = vsel %vm1566, %v3511, 0
      %v3583 = vsel %vm1566, %v3512, 0
      %v3586 = vsel %vm1566, %v3513, 0
      %v3589 = vsel %vm1566, %v3514, 0
      %v3592 = vsel %vm1566, %v3515, 0
      %v3595 = vsel %vm1566, %v3516, 0
      %v3598 = vsel %vm1566, %v3517, 0
      %v3601 = vsel %vm1566, %v3518, 0
      %v3604 = vsel %vm1566, %v3519, 0
      %v3607 = vsel %vm1566, %v3520, 0
      %v3610 = vsel %vm1566, %v3521, 0
      %v3613 = vsel %vm1566, %v3522, 0
      %v3616 = vsel %vm1566, %v3523, 0
      %v3619 = vsel %vm1566, %v3524, 0
      %v3622 = vsel %vm1566, %v3525, 0
      %v3625 = vsel %vm1566, %v3526, 0
      %3627 = vmatprep.subr.mxu0 0.0
      %3628 = vmatpush1.msra.mxu0 0.0
      %3629 = vmatprep.subr.mxu0 0.0
      %3630 = vmatpush1.msra.mxu0 0.0
      %3631 = vmatprep.subr.mxu0 0.0
      %3632 = vmatpush1.msra.mxu0 0.0
      %3633 = vmatprep.subr.mxu0 0.0
      %3634 = vmatpush1.msra.mxu0 0.0
      %3635 = vmatprep.subr.mxu0 0.0
      %3636 = vmatpush1.msra.mxu0 0.0
      %3637 = vmatprep.subr.mxu0 0.0
      %3638 = vmatpush1.msra.mxu0 0.0
      %3639 = vmatprep.subr.mxu0 0.0
      %3640 = vmatpush1.msra.mxu0 0.0
      %3641 = vmatprep.subr.mxu0 0.0
      %3642 = vmatpush1.msra.mxu0 0.0
      %3643 = vmatprep.subr.mxu0 0.0
      %3644 = vmatpush1.msra.mxu0 0.0
      %3645 = vmatprep.subr.mxu0 0.0
      %3646 = vmatpush1.msra.mxu0 0.0
      %3647 = vmatprep.subr.mxu0 0.0
      %3648 = vmatpush1.msra.mxu0 0.0
      %3649 = vmatprep.subr.mxu0 0.0
      %3650 = vmatpush1.msra.mxu0 0.0
      %3651 = vmatprep.subr.mxu0 0.0
      %3652 = vmatpush1.msra.mxu0 %v3530
      %3653 = vmatprep.subr.mxu0 0.0
      %3654 = vmatpush1.msra.mxu0 %v3529
      %3655 = vmatprep.subr.mxu0 0.0
      %3656 = vmatpush1.msra.mxu0 %v3528
      %3657 = vmatprep.subr.mxu0 0.0
      %3658 = vmatpush1.msra.mxu0 %v3527
      %3659 = vmatprep.subr.mxu0 0.0
      %3660 = vmatpush2.msra.mxu0 0.0
      %3661 = vmatprep.subr.mxu0 0.0
      %3662 = vmatpush2.msra.mxu0 0.0
      %3663 = vmatprep.subr.mxu0 0.0
      %3664 = vmatpush2.msra.mxu0 0.0
      %3665 = vmatprep.subr.mxu0 0.0
      %3666 = vmatpush2.msra.mxu0 0.0
      %3667 = vmatprep.subr.mxu0 0.0
      %3668 = vmatpush2.msra.mxu0 0.0
      %3669 = vmatprep.subr.mxu0 0.0
      %3670 = vmatpush2.msra.mxu0 0.0
      %3671 = vmatprep.subr.mxu0 0.0
      %3672 = vmatpush2.msra.mxu0 0.0
      %3673 = vmatprep.subr.mxu0 0.0
      %3674 = vmatpush2.msra.mxu0 0.0
      %3675 = vmatprep.subr.mxu0 0.0
      %3676 = vmatpush2.msra.mxu0 0.0
      %3677 = vmatprep.subr.mxu0 0.0
      %3678 = vmatpush2.msra.mxu0 0.0
      %3679 = vmatprep.subr.mxu0 0.0
      %3680 = vmatpush2.msra.mxu0 0.0
      %3681 = vmatprep.subr.mxu0 0.0
      %3682 = vmatpush2.msra.mxu0 0.0
      %3683 = vmatprep.subr.mxu0 0.0
      %3684 = vmatpush2.msra.mxu0 0.0
      %3685 = vmatprep.subr.mxu0 0.0
      %3686 = vmatpush2.msra.mxu0 0.0
      %3687 = vmatprep.subr.mxu0 0.0
      %3688 = vmatpush2.msra.mxu0 0.0
      %3689 = vmatprep.subr.mxu0 0.0
      %3690 = vmatpush2.msra.mxu0 0.0
      %3691 = vmatprep.mubr.f32.mxu0 0.0
      %3692 = vmatmul.mubr.f32.gmra.mxu0 %v3532
      %v3693 = vpop.f32.mrf.mxu0
      %v3694 = vadd.f32 0.0, %v3693
      %v3695 = vpop.f32.mrf.mxu0
      %3696 = vmatprep.mubr.f32.mxu0 0.0
      %3697 = vmatmul.mubr.f32.gmra.mxu0 %v3535
      %v3698 = vpop.f32.mrf.mxu0
      %v3699 = vadd.f32 0.0, %v3698
      %v3700 = vpop.f32.mrf.mxu0
      %3701 = vmatprep.mubr.f32.mxu0 0.0
      %3702 = vmatmul.mubr.f32.gmra.mxu0 %v3538
      %v3703 = vpop.f32.mrf.mxu0
      %v3704 = vadd.f32 0.0, %v3703
      %v3705 = vpop.f32.mrf.mxu0
      %3706 = vmatprep.mubr.f32.mxu0 0.0
      %3707 = vmatmul.mubr.f32.gmra.mxu0 %v3541
      %v3708 = vpop.f32.mrf.mxu0
      %v3709 = vadd.f32 0.0, %v3708
      %v3710 = vpop.f32.mrf.mxu0
      %3711 = vmatprep.mubr.f32.mxu0 0.0
      %3712 = vmatmul.mubr.f32.gmra.mxu0 %v3544
      %v3713 = vpop.f32.mrf.mxu0
      %v3714 = vadd.f32 0.0, %v3713
      %v3715 = vpop.f32.mrf.mxu0
      %3716 = vmatprep.mubr.f32.mxu0 0.0
      %3717 = vmatmul.mubr.f32.gmra.mxu0 %v3547
      %v3718 = vpop.f32.mrf.mxu0
      %v3719 = vadd.f32 0.0, %v3718
      %v3720 = vpop.f32.mrf.mxu0
      %3721 = vmatprep.mubr.f32.mxu0 0.0
      %3722 = vmatmul.mubr.f32.gmra.mxu0 %v3550
      %v3723 = vpop.f32.mrf.mxu0
      %v3724 = vadd.f32 0.0, %v3723
      %v3725 = vpop.f32.mrf.mxu0
      %3726 = vmatprep.mubr.f32.mxu0 0.0
      %3727 = vmatmul.mubr.f32.gmra.mxu0 %v3553
      %v3728 = vpop.f32.mrf.mxu0
      %v3729 = vadd.f32 0.0, %v3728
      %v3730 = vpop.f32.mrf.mxu0
      %3731 = vmatprep.mubr.f32.mxu0 0.0
      %3732 = vmatmul.mubr.f32.gmra.mxu0 %v3556
      %v3733 = vpop.f32.mrf.mxu0
      %v3734 = vadd.f32 0.0, %v3733
      %v3735 = vpop.f32.mrf.mxu0
      %3736 = vmatprep.mubr.f32.mxu0 0.0
      %3737 = vmatmul.mubr.f32.gmra.mxu0 %v3559
      %v3738 = vpop.f32.mrf.mxu0
      %v3739 = vadd.f32 0.0, %v3738
      %v3740 = vpop.f32.mrf.mxu0
      %3741 = vmatprep.mubr.f32.mxu0 0.0
      %3742 = vmatmul.mubr.f32.gmra.mxu0 %v3562
      %v3743 = vpop.f32.mrf.mxu0
      %v3744 = vadd.f32 0.0, %v3743
      %v3745 = vpop.f32.mrf.mxu0
      %3746 = vmatprep.mubr.f32.mxu0 0.0
      %3747 = vmatmul.mubr.f32.gmra.mxu0 %v3565
      %v3748 = vpop.f32.mrf.mxu0
      %v3749 = vadd.f32 0.0, %v3748
      %v3750 = vpop.f32.mrf.mxu0
      %3751 = vmatprep.mubr.f32.mxu0 0.0
      %3752 = vmatmul.mubr.f32.gmra.mxu0 %v3568
      %v3753 = vpop.f32.mrf.mxu0
      %v3754 = vadd.f32 0.0, %v3753
      %v3755 = vpop.f32.mrf.mxu0
      %3756 = vmatprep.mubr.f32.mxu0 0.0
      %3757 = vmatmul.mubr.f32.gmra.mxu0 %v3571
      %v3758 = vpop.f32.mrf.mxu0
      %v3759 = vadd.f32 0.0, %v3758
      %v3760 = vpop.f32.mrf.mxu0
      %3761 = vmatprep.mubr.f32.mxu0 0.0
      %3762 = vmatmul.mubr.f32.gmra.mxu0 %v3574
      %v3763 = vpop.f32.mrf.mxu0
      %v3764 = vadd.f32 0.0, %v3763
      %v3765 = vpop.f32.mrf.mxu0
      %3766 = vmatprep.mubr.f32.mxu0 0.0
      %3767 = vmatmul.mubr.f32.gmra.mxu0 %v3577
      %v3768 = vpop.f32.mrf.mxu0
      %v3769 = vadd.f32 0.0, %v3768
      %v3770 = vpop.f32.mrf.mxu0
      %3771 = vmatprep.mubr.f32.mxu0 0.0
      %3772 = vmatmul.mubr.f32.gmra.mxu0 %v3580
      %v3773 = vpop.f32.mrf.mxu0
      %v3774 = vadd.f32 0.0, %v3773
      %v3775 = vpop.f32.mrf.mxu0
      %3776 = vmatprep.mubr.f32.mxu0 0.0
      %3777 = vmatmul.mubr.f32.gmra.mxu0 %v3583
      %v3778 = vpop.f32.mrf.mxu0
      %v3779 = vadd.f32 0.0, %v3778
      %v3780 = vpop.f32.mrf.mxu0
      %3781 = vmatprep.mubr.f32.mxu0 0.0
      %3782 = vmatmul.mubr.f32.gmra.mxu0 %v3586
      %v3783 = vpop.f32.mrf.mxu0
      %v3784 = vadd.f32 0.0, %v3783
      %v3785 = vpop.f32.mrf.mxu0
      %3786 = vmatprep.mubr.f32.mxu0 0.0
      %3787 = vmatmul.mubr.f32.gmra.mxu0 %v3589
      %v3788 = vpop.f32.mrf.mxu0
      %v3789 = vadd.f32 0.0, %v3788
      %v3790 = vpop.f32.mrf.mxu0
      %3791 = vmatprep.mubr.f32.mxu0 0.0
      %3792 = vmatmul.mubr.f32.gmra.mxu0 %v3592
      %v3793 = vpop.f32.mrf.mxu0
      %v3794 = vadd.f32 0.0, %v3793
      %v3795 = vpop.f32.mrf.mxu0
      %3796 = vmatprep.mubr.f32.mxu0 0.0
      %3797 = vmatmul.mubr.f32.gmra.mxu0 %v3595
      %v3798 = vpop.f32.mrf.mxu0
      %v3799 = vadd.f32 0.0, %v3798
      %v3800 = vpop.f32.mrf.mxu0
      %3801 = vmatprep.mubr.f32.mxu0 0.0
      %3802 = vmatmul.mubr.f32.gmra.mxu0 %v3598
      %v3803 = vpop.f32.mrf.mxu0
      %v3804 = vadd.f32 0.0, %v3803
      %v3805 = vpop.f32.mrf.mxu0
      %3806 = vmatprep.mubr.f32.mxu0 0.0
      %3807 = vmatmul.mubr.f32.gmra.mxu0 %v3601
      %v3808 = vpop.f32.mrf.mxu0
      %v3809 = vadd.f32 0.0, %v3808
      %v3810 = vpop.f32.mrf.mxu0
      %3811 = vmatprep.mubr.f32.mxu0 0.0
      %3812 = vmatmul.mubr.f32.gmra.mxu0 %v3604
      %v3813 = vpop.f32.mrf.mxu0
      %v3814 = vadd.f32 0.0, %v3813
      %v3815 = vpop.f32.mrf.mxu0
      %3816 = vmatprep.mubr.f32.mxu0 0.0
      %3817 = vmatmul.mubr.f32.gmra.mxu0 %v3607
      %v3818 = vpop.f32.mrf.mxu0
      %v3819 = vadd.f32 0.0, %v3818
      %v3820 = vpop.f32.mrf.mxu0
      %3821 = vmatprep.mubr.f32.mxu0 0.0
      %3822 = vmatmul.mubr.f32.gmra.mxu0 %v3610
      %v3823 = vpop.f32.mrf.mxu0
      %v3824 = vadd.f32 0.0, %v3823
      %v3825 = vpop.f32.mrf.mxu0
      %3826 = vmatprep.mubr.f32.mxu0 0.0
      %3827 = vmatmul.mubr.f32.gmra.mxu0 %v3613
      %v3828 = vpop.f32.mrf.mxu0
      %v3829 = vadd.f32 0.0, %v3828
      %v3830 = vpop.f32.mrf.mxu0
      %3831 = vmatprep.mubr.f32.mxu0 0.0
      %3832 = vmatmul.mubr.f32.gmra.mxu0 %v3616
      %v3833 = vpop.f32.mrf.mxu0
      %v3834 = vadd.f32 0.0, %v3833
      %v3835 = vpop.f32.mrf.mxu0
      %3836 = vmatprep.mubr.f32.mxu0 0.0
      %3837 = vmatmul.mubr.f32.gmra.mxu0 %v3619
      %v3838 = vpop.f32.mrf.mxu0
      %v3839 = vadd.f32 0.0, %v3838
      %v3840 = vpop.f32.mrf.mxu0
      %3841 = vmatprep.mubr.f32.mxu0 0.0
      %3842 = vmatmul.mubr.f32.gmra.mxu0 %v3622
      %v3843 = vpop.f32.mrf.mxu0
      %v3844 = vadd.f32 0.0, %v3843
      %v3845 = vpop.f32.mrf.mxu0
      %3846 = vmatprep.mubr.f32.mxu0 0.0
      %3847 = vmatmul.mubr.f32.gmra.mxu0 %v3625
      %v3848 = vpop.f32.mrf.mxu0
      %v3849 = vadd.f32 0.0, %v3848
      %v3850 = vpop.f32.mrf.mxu0
      %3851 = vdwg.mxu0
      %v3852 = vmul.f32 %v3694, 0.5
      %v3853 = vmul.f32 %v3699, 0.5
      %v3854 = vmul.f32 %v3704, 0.5
      %v3855 = vmul.f32 %v3709, 0.5
      %v3856 = vmul.f32 %v3714, 0.5
      %v3857 = vmul.f32 %v3719, 0.5
      %v3858 = vmul.f32 %v3724, 0.5
      %v3859 = vmul.f32 %v3729, 0.5
      %v3860 = vmul.f32 %v3734, 0.5
      %v3861 = vmul.f32 %v3739, 0.5
      %v3862 = vmul.f32 %v3744, 0.5
      %v3863 = vmul.f32 %v3749, 0.5
      %v3864 = vmul.f32 %v3754, 0.5
      %v3865 = vmul.f32 %v3759, 0.5
      %v3866 = vmul.f32 %v3764, 0.5
      %v3867 = vmul.f32 %v3769, 0.5
      %v3868 = vmul.f32 %v3774, 0.5
      %v3869 = vmul.f32 %v3779, 0.5
      %v3870 = vmul.f32 %v3784, 0.5
      %v3871 = vmul.f32 %v3789, 0.5
      %v3872 = vmul.f32 %v3794, 0.5
      %v3873 = vmul.f32 %v3799, 0.5
      %v3874 = vmul.f32 %v3804, 0.5
      %v3875 = vmul.f32 %v3809, 0.5
      %v3876 = vmul.f32 %v3814, 0.5
      %v3877 = vmul.f32 %v3819, 0.5
      %v3878 = vmul.f32 %v3824, 0.5
      %v3879 = vmul.f32 %v3829, 0.5
      %v3880 = vmul.f32 %v3834, 0.5
      %v3881 = vmul.f32 %v3839, 0.5
      %v3882 = vmul.f32 %v3844, 0.5
      %v3883 = vmul.f32 %v3849, 0.5
      %v3884 = vmul.f32 %v3694, 0.70710677
      %v3885 = vmul.f32 %v3699, 0.70710677
      %v3886 = vmul.f32 %v3704, 0.70710677
      %v3887 = vmul.f32 %v3709, 0.70710677
      %v3888 = vmul.f32 %v3714, 0.70710677
      %v3889 = vmul.f32 %v3719, 0.70710677
      %v3890 = vmul.f32 %v3724, 0.70710677
      %v3891 = vmul.f32 %v3729, 0.70710677
      %v3892 = vmul.f32 %v3734, 0.70710677
      %v3893 = vmul.f32 %v3739, 0.70710677
      %v3894 = vmul.f32 %v3744, 0.70710677
      %v3895 = vmul.f32 %v3749, 0.70710677
      %v3896 = vmul.f32 %v3754, 0.70710677
      %v3897 = vmul.f32 %v3759, 0.70710677
      %v3898 = vmul.f32 %v3764, 0.70710677
      %v3899 = vmul.f32 %v3769, 0.70710677
      %v3900 = vmul.f32 %v3774, 0.70710677
      %v3901 = vmul.f32 %v3779, 0.70710677
      %v3902 = vmul.f32 %v3784, 0.70710677
      %v3903 = vmul.f32 %v3789, 0.70710677
      %v3904 = vmul.f32 %v3794, 0.70710677
      %v3905 = vmul.f32 %v3799, 0.70710677
      %v3906 = vmul.f32 %v3804, 0.70710677
      %v3907 = vmul.f32 %v3809, 0.70710677
      %v3908 = vmul.f32 %v3814, 0.70710677
      %v3909 = vmul.f32 %v3819, 0.70710677
      %v3910 = vmul.f32 %v3824, 0.70710677
      %v3911 = vmul.f32 %v3829, 0.70710677
      %v3912 = vmul.f32 %v3834, 0.70710677
      %v3913 = vmul.f32 %v3839, 0.70710677
      %v3914 = vmul.f32 %v3844, 0.70710677
      %v3915 = vmul.f32 %v3849, 0.70710677
      %v3916 = vmax.f32 %v3884, -3.832507
      %v3917 = vmax.f32 %v3885, -3.832507
      %v3918 = vmax.f32 %v3886, -3.832507
      %v3919 = vmax.f32 %v3887, -3.832507
      %v3920 = vmax.f32 %v3888, -3.832507
      %v3921 = vmax.f32 %v3889, -3.832507
      %v3922 = vmax.f32 %v3890, -3.832507
      %v3923 = vmax.f32 %v3891, -3.832507
      %v3924 = vmax.f32 %v3892, -3.832507
      %v3925 = vmax.f32 %v3893, -3.832507
      %v3926 = vmax.f32 %v3894, -3.832507
      %v3927 = vmax.f32 %v3895, -3.832507
      %v3928 = vmax.f32 %v3896, -3.832507
      %v3929 = vmax.f32 %v3897, -3.832507
      %v3930 = vmax.f32 %v3898, -3.832507
      %v3931 = vmax.f32 %v3899, -3.832507
      %v3932 = vmax.f32 %v3900, -3.832507
      %v3933 = vmax.f32 %v3901, -3.832507
      %v3934 = vmax.f32 %v3902, -3.832507
      %v3935 = vmax.f32 %v3903, -3.832507
      %v3936 = vmax.f32 %v3904, -3.832507
      %v3937 = vmax.f32 %v3905, -3.832507
      %v3938 = vmax.f32 %v3906, -3.832507
      %v3939 = vmax.f32 %v3907, -3.832507
      %v3940 = vmax.f32 %v3908, -3.832507
      %v3941 = vmax.f32 %v3909, -3.832507
      %v3942 = vmax.f32 %v3910, -3.832507
      %v3943 = vmax.f32 %v3911, -3.832507
      %v3944 = vmax.f32 %v3912, -3.832507
      %v3945 = vmax.f32 %v3913, -3.832507
      %v3946 = vmax.f32 %v3914, -3.832507
      %v3947 = vmax.f32 %v3915, -3.832507
      %v3948 = vmin.f32 %v3916, 3.832507
      %v3949 = vmin.f32 %v3917, 3.832507
      %v3950 = vmin.f32 %v3918, 3.832507
      %v3951 = vmin.f32 %v3919, 3.832507
      %v3952 = vmin.f32 %v3920, 3.832507
      %v3953 = vmin.f32 %v3921, 3.832507
      %v3954 = vmin.f32 %v3922, 3.832507
      %v3955 = vmin.f32 %v3923, 3.832507
      %v3956 = vmin.f32 %v3924, 3.832507
      %v3957 = vmin.f32 %v3925, 3.832507
      %v3958 = vmin.f32 %v3926, 3.832507
      %v3959 = vmin.f32 %v3927, 3.832507
      %v3960 = vmin.f32 %v3928, 3.832507
      %v3961 = vmin.f32 %v3929, 3.832507
      %v3962 = vmin.f32 %v3930, 3.832507
      %v3963 = vmin.f32 %v3931, 3.832507
      %v3964 = vmin.f32 %v3932, 3.832507
      %v3965 = vmin.f32 %v3933, 3.832507
      %v3966 = vmin.f32 %v3934, 3.832507
      %v3967 = vmin.f32 %v3935, 3.832507
      %v3968 = vmin.f32 %v3936, 3.832507
      %v3969 = vmin.f32 %v3937, 3.832507
      %v3970 = vmin.f32 %v3938, 3.832507
      %v3971 = vmin.f32 %v3939, 3.832507
      %v3972 = vmin.f32 %v3940, 3.832507
      %v3973 = vmin.f32 %v3941, 3.832507
      %v3974 = vmin.f32 %v3942, 3.832507
      %v3975 = vmin.f32 %v3943, 3.832507
      %v3976 = vmin.f32 %v3944, 3.832507
      %v3977 = vmin.f32 %v3945, 3.832507
      %v3978 = vmin.f32 %v3946, 3.832507
      %v3979 = vmin.f32 %v3947, 3.832507
      %v3980 = vmul.f32 %v3948, %v3948
      %v3981 = vmul.f32 %v3949, %v3949
      %v3982 = vmul.f32 %v3950, %v3950
      %v3983 = vmul.f32 %v3951, %v3951
      %v3984 = vmul.f32 %v3952, %v3952
      %v3985 = vmul.f32 %v3953, %v3953
      %v3986 = vmul.f32 %v3954, %v3954
      %v3987 = vmul.f32 %v3955, %v3955
      %v3988 = vmul.f32 %v3956, %v3956
      %v3989 = vmul.f32 %v3957, %v3957
      %v3990 = vmul.f32 %v3958, %v3958
      %v3991 = vmul.f32 %v3959, %v3959
      %v3992 = vmul.f32 %v3960, %v3960
      %v3993 = vmul.f32 %v3961, %v3961
      %v3994 = vmul.f32 %v3962, %v3962
      %v3995 = vmul.f32 %v3963, %v3963
      %v3996 = vmul.f32 %v3964, %v3964
      %v3997 = vmul.f32 %v3965, %v3965
      %v3998 = vmul.f32 %v3966, %v3966
      %v3999 = vmul.f32 %v3967, %v3967
      %v4000 = vmul.f32 %v3968, %v3968
      %v4001 = vmul.f32 %v3969, %v3969
      %v4002 = vmul.f32 %v3970, %v3970
      %v4003 = vmul.f32 %v3971, %v3971
      %v4004 = vmul.f32 %v3972, %v3972
      %v4005 = vmul.f32 %v3973, %v3973
      %v4006 = vmul.f32 %v3974, %v3974
      %v4007 = vmul.f32 %v3975, %v3975
      %v4008 = vmul.f32 %v3976, %v3976
      %v4009 = vmul.f32 %v3977, %v3977
      %v4010 = vmul.f32 %v3978, %v3978
      %v4011 = vmul.f32 %v3979, %v3979
      %v4012 = vmul.f32 %v3980, 0.00022905065
      %v4013 = vmul.f32 %v3981, 0.00022905065
      %v4014 = vmul.f32 %v3982, 0.00022905065
      %v4015 = vmul.f32 %v3983, 0.00022905065
      %v4016 = vmul.f32 %v3984, 0.00022905065
      %v4017 = vmul.f32 %v3985, 0.00022905065
      %v4018 = vmul.f32 %v3986, 0.00022905065
      %v4019 = vmul.f32 %v3987, 0.00022905065
      %v4020 = vmul.f32 %v3988, 0.00022905065
      %v4021 = vmul.f32 %v3989, 0.00022905065
      %v4022 = vmul.f32 %v3990, 0.00022905065
      %v4023 = vmul.f32 %v3991, 0.00022905065
      %v4024 = vmul.f32 %v3992, 0.00022905065
      %v4025 = vmul.f32 %v3993, 0.00022905065
      %v4026 = vmul.f32 %v3994, 0.00022905065
      %v4027 = vmul.f32 %v3995, 0.00022905065
      %v4028 = vmul.f32 %v3996, 0.00022905065
      %v4029 = vmul.f32 %v3997, 0.00022905065
      %v4030 = vmul.f32 %v3998, 0.00022905065
      %v4031 = vmul.f32 %v3999, 0.00022905065
      %v4032 = vmul.f32 %v4000, 0.00022905065
      %v4033 = vmul.f32 %v4001, 0.00022905065
      %v4034 = vmul.f32 %v4002, 0.00022905065
      %v4035 = vmul.f32 %v4003, 0.00022905065
      %v4036 = vmul.f32 %v4004, 0.00022905065
      %v4037 = vmul.f32 %v4005, 0.00022905065
      %v4038 = vmul.f32 %v4006, 0.00022905065
      %v4039 = vmul.f32 %v4007, 0.00022905065
      %v4040 = vmul.f32 %v4008, 0.00022905065
      %v4041 = vmul.f32 %v4009, 0.00022905065
      %v4042 = vmul.f32 %v4010, 0.00022905065
      %v4043 = vmul.f32 %v4011, 0.00022905065
      %v4044 = vadd.f32 %v4012, 0.003408291
      %v4045 = vadd.f32 %v4013, 0.003408291
      %v4046 = vadd.f32 %v4014, 0.003408291
      %v4047 = vadd.f32 %v4015, 0.003408291
      %v4048 = vadd.f32 %v4016, 0.003408291
      %v4049 = vadd.f32 %v4017, 0.003408291
      %v4050 = vadd.f32 %v4018, 0.003408291
      %v4051 = vadd.f32 %v4019, 0.003408291
      %v4052 = vadd.f32 %v4020, 0.003408291
      %v4053 = vadd.f32 %v4021, 0.003408291
      %v4054 = vadd.f32 %v4022, 0.003408291
      %v4055 = vadd.f32 %v4023, 0.003408291
      %v4056 = vadd.f32 %v4024, 0.003408291
      %v4057 = vadd.f32 %v4025, 0.003408291
      %v4058 = vadd.f32 %v4026, 0.003408291
      %v4059 = vadd.f32 %v4027, 0.003408291
      %v4060 = vadd.f32 %v4028, 0.003408291
      %v4061 = vadd.f32 %v4029, 0.003408291
      %v4062 = vadd.f32 %v4030, 0.003408291
      %v4063 = vadd.f32 %v4031, 0.003408291
      %v4064 = vadd.f32 %v4032, 0.003408291
      %v4065 = vadd.f32 %v4033, 0.003408291
      %v4066 = vadd.f32 %v4034, 0.003408291
      %v4067 = vadd.f32 %v4035, 0.003408291
      %v4068 = vadd.f32 %v4036, 0.003408291
      %v4069 = vadd.f32 %v4037, 0.003408291
      %v4070 = vadd.f32 %v4038, 0.003408291
      %v4071 = vadd.f32 %v4039, 0.003408291
      %v4072 = vadd.f32 %v4040, 0.003408291
      %v4073 = vadd.f32 %v4041, 0.003408291
      %v4074 = vadd.f32 %v4042, 0.003408291
      %v4075 = vadd.f32 %v4043, 0.003408291
      %v4076 = vmul.f32 %v4044, %v3980
      %v4077 = vmul.f32 %v4045, %v3981
      %v4078 = vmul.f32 %v4046, %v3982
      %v4079 = vmul.f32 %v4047, %v3983
      %v4080 = vmul.f32 %v4048, %v3984
      %v4081 = vmul.f32 %v4049, %v3985
      %v4082 = vmul.f32 %v4050, %v3986
      %v4083 = vmul.f32 %v4051, %v3987
      %v4084 = vmul.f32 %v4052, %v3988
      %v4085 = vmul.f32 %v4053, %v3989
      %v4086 = vmul.f32 %v4054, %v3990
      %v4087 = vmul.f32 %v4055, %v3991
      %v4088 = vmul.f32 %v4056, %v3992
      %v4089 = vmul.f32 %v4057, %v3993
      %v4090 = vmul.f32 %v4058, %v3994
      %v4091 = vmul.f32 %v4059, %v3995
      %v4092 = vmul.f32 %v4060, %v3996
      %v4093 = vmul.f32 %v4061, %v3997
      %v4094 = vmul.f32 %v4062, %v3998
      %v4095 = vmul.f32 %v4063, %v3999
      %v4096 = vmul.f32 %v4064, %v4000
      %v4097 = vmul.f32 %v4065, %v4001
      %v4098 = vmul.f32 %v4066, %v4002
      %v4099 = vmul.f32 %v4067, %v4003
      %v4100 = vmul.f32 %v4068, %v4004
      %v4101 = vmul.f32 %v4069, %v4005
      %v4102 = vmul.f32 %v4070, %v4006
      %v4103 = vmul.f32 %v4071, %v4007
      %v4104 = vmul.f32 %v4072, %v4008
      %v4105 = vmul.f32 %v4073, %v4009
      %v4106 = vmul.f32 %v4074, %v4010
      %v4107 = vmul.f32 %v4075, %v4011
      %v4108 = vadd.f32 %v4076, 0.050955694
      %v4109 = vadd.f32 %v4077, 0.050955694
      %v4110 = vadd.f32 %v4078, 0.050955694
      %v4111 = vadd.f32 %v4079, 0.050955694
      %v4112 = vadd.f32 %v4080, 0.050955694
      %v4113 = vadd.f32 %v4081, 0.050955694
      %v4114 = vadd.f32 %v4082, 0.050955694
      %v4115 = vadd.f32 %v4083, 0.050955694
      %v4116 = vadd.f32 %v4084, 0.050955694
      %v4117 = vadd.f32 %v4085, 0.050955694
      %v4118 = vadd.f32 %v4086, 0.050955694
      %v4119 = vadd.f32 %v4087, 0.050955694
      %v4120 = vadd.f32 %v4088, 0.050955694
      %v4121 = vadd.f32 %v4089, 0.050955694
      %v4122 = vadd.f32 %v4090, 0.050955694
      %v4123 = vadd.f32 %v4091, 0.050955694
      %v4124 = vadd.f32 %v4092, 0.050955694
      %v4125 = vadd.f32 %v4093, 0.050955694
      %v4126 = vadd.f32 %v4094, 0.050955694
      %v4127 = vadd.f32 %v4095, 0.050955694
      %v4128 = vadd.f32 %v4096, 0.050955694
      %v4129 = vadd.f32 %v4097, 0.050955694
      %v4130 = vadd.f32 %v4098, 0.050955694
      %v4131 = vadd.f32 %v4099, 0.050955694
      %v4132 = vadd.f32 %v4100, 0.050955694
      %v4133 = vadd.f32 %v4101, 0.050955694
      %v4134 = vadd.f32 %v4102, 0.050955694
      %v4135 = vadd.f32 %v4103, 0.050955694
      %v4136 = vadd.f32 %v4104, 0.050955694
      %v4137 = vadd.f32 %v4105, 0.050955694
      %v4138 = vadd.f32 %v4106, 0.050955694
      %v4139 = vadd.f32 %v4107, 0.050955694
      %v4140 = vmul.f32 %v4108, %v3980
      %v4141 = vmul.f32 %v4109, %v3981
      %v4142 = vmul.f32 %v4110, %v3982
      %v4143 = vmul.f32 %v4111, %v3983
      %v4144 = vmul.f32 %v4112, %v3984
      %v4145 = vmul.f32 %v4113, %v3985
      %v4146 = vmul.f32 %v4114, %v3986
      %v4147 = vmul.f32 %v4115, %v3987
      %v4148 = vmul.f32 %v4116, %v3988
      %v4149 = vmul.f32 %v4117, %v3989
      %v4150 = vmul.f32 %v4118, %v3990
      %v4151 = vmul.f32 %v4119, %v3991
      %v4152 = vmul.f32 %v4120, %v3992
      %v4153 = vmul.f32 %v4121, %v3993
      %v4154 = vmul.f32 %v4122, %v3994
      %v4155 = vmul.f32 %v4123, %v3995
      %v4156 = vmul.f32 %v4124, %v3996
      %v4157 = vmul.f32 %v4125, %v3997
      %v4158 = vmul.f32 %v4126, %v3998
      %v4159 = vmul.f32 %v4127, %v3999
      %v4160 = vmul.f32 %v4128, %v4000
      %v4161 = vmul.f32 %v4129, %v4001
      %v4162 = vmul.f32 %v4130, %v4002
      %v4163 = vmul.f32 %v4131, %v4003
      %v4164 = vmul.f32 %v4132, %v4004
      %v4165 = vmul.f32 %v4133, %v4005
      %v4166 = vmul.f32 %v4134, %v4006
      %v4167 = vmul.f32 %v4135, %v4007
      %v4168 = vmul.f32 %v4136, %v4008
      %v4169 = vmul.f32 %v4137, %v4009
      %v4170 = vmul.f32 %v4138, %v4010
      %v4171 = vmul.f32 %v4139, %v4011
      %v4172 = vadd.f32 %v4140, 0.18520832
      %v4173 = vadd.f32 %v4141, 0.18520832
      %v4174 = vadd.f32 %v4142, 0.18520832
      %v4175 = vadd.f32 %v4143, 0.18520832
      %v4176 = vadd.f32 %v4144, 0.18520832
      %v4177 = vadd.f32 %v4145, 0.18520832
      %v4178 = vadd.f32 %v4146, 0.18520832
      %v4179 = vadd.f32 %v4147, 0.18520832
      %v4180 = vadd.f32 %v4148, 0.18520832
      %v4181 = vadd.f32 %v4149, 0.18520832
      %v4182 = vadd.f32 %v4150, 0.18520832
      %v4183 = vadd.f32 %v4151, 0.18520832
      %v4184 = vadd.f32 %v4152, 0.18520832
      %v4185 = vadd.f32 %v4153, 0.18520832
      %v4186 = vadd.f32 %v4154, 0.18520832
      %v4187 = vadd.f32 %v4155, 0.18520832
      %v4188 = vadd.f32 %v4156, 0.18520832
      %v4189 = vadd.f32 %v4157, 0.18520832
      %v4190 = vadd.f32 %v4158, 0.18520832
      %v4191 = vadd.f32 %v4159, 0.18520832
      %v4192 = vadd.f32 %v4160, 0.18520832
      %v4193 = vadd.f32 %v4161, 0.18520832
      %v4194 = vadd.f32 %v4162, 0.18520832
      %v4195 = vadd.f32 %v4163, 0.18520832
      %v4196 = vadd.f32 %v4164, 0.18520832
      %v4197 = vadd.f32 %v4165, 0.18520832
      %v4198 = vadd.f32 %v4166, 0.18520832
      %v4199 = vadd.f32 %v4167, 0.18520832
      %v4200 = vadd.f32 %v4168, 0.18520832
      %v4201 = vadd.f32 %v4169, 0.18520832
      %v4202 = vadd.f32 %v4170, 0.18520832
      %v4203 = vadd.f32 %v4171, 0.18520832
      %v4204 = vmul.f32 %v4172, %v3980
      %v4205 = vmul.f32 %v4173, %v3981
      %v4206 = vmul.f32 %v4174, %v3982
      %v4207 = vmul.f32 %v4175, %v3983
      %v4208 = vmul.f32 %v4176, %v3984
      %v4209 = vmul.f32 %v4177, %v3985
      %v4210 = vmul.f32 %v4178, %v3986
      %v4211 = vmul.f32 %v4179, %v3987
      %v4212 = vmul.f32 %v4180, %v3988
      %v4213 = vmul.f32 %v4181, %v3989
      %v4214 = vmul.f32 %v4182, %v3990
      %v4215 = vmul.f32 %v4183, %v3991
      %v4216 = vmul.f32 %v4184, %v3992
      %v4217 = vmul.f32 %v4185, %v3993
      %v4218 = vmul.f32 %v4186, %v3994
      %v4219 = vmul.f32 %v4187, %v3995
      %v4220 = vmul.f32 %v4188, %v3996
      %v4221 = vmul.f32 %v4189, %v3997
      %v4222 = vmul.f32 %v4190, %v3998
      %v4223 = vmul.f32 %v4191, %v3999
      %v4224 = vmul.f32 %v4192, %v4000
      %v4225 = vmul.f32 %v4193, %v4001
      %v4226 = vmul.f32 %v4194, %v4002
      %v4227 = vmul.f32 %v4195, %v4003
      %v4228 = vmul.f32 %v4196, %v4004
      %v4229 = vmul.f32 %v4197, %v4005
      %v4230 = vmul.f32 %v4198, %v4006
      %v4231 = vmul.f32 %v4199, %v4007
      %v4232 = vmul.f32 %v4200, %v4008
      %v4233 = vmul.f32 %v4201, %v4009
      %v4234 = vmul.f32 %v4202, %v4010
      %v4235 = vmul.f32 %v4203, %v4011
      %v4236 = vadd.f32 %v4204, 1.1283791
      %v4237 = vadd.f32 %v4205, 1.1283791
      %v4238 = vadd.f32 %v4206, 1.1283791
      %v4239 = vadd.f32 %v4207, 1.1283791
      %v4240 = vadd.f32 %v4208, 1.1283791
      %v4241 = vadd.f32 %v4209, 1.1283791
      %v4242 = vadd.f32 %v4210, 1.1283791
      %v4243 = vadd.f32 %v4211, 1.1283791
      %v4244 = vadd.f32 %v4212, 1.1283791
      %v4245 = vadd.f32 %v4213, 1.1283791
      %v4246 = vadd.f32 %v4214, 1.1283791
      %v4247 = vadd.f32 %v4215, 1.1283791
      %v4248 = vadd.f32 %v4216, 1.1283791
      %v4249 = vadd.f32 %v4217, 1.1283791
      %v4250 = vadd.f32 %v4218, 1.1283791
      %v4251 = vadd.f32 %v4219, 1.1283791
      %v4252 = vadd.f32 %v4220, 1.1283791
      %v4253 = vadd.f32 %v4221, 1.1283791
      %v4254 = vadd.f32 %v4222, 1.1283791
      %v4255 = vadd.f32 %v4223, 1.1283791
      %v4256 = vadd.f32 %v4224, 1.1283791
      %v4257 = vadd.f32 %v4225, 1.1283791
      %v4258 = vadd.f32 %v4226, 1.1283791
      %v4259 = vadd.f32 %v4227, 1.1283791
      %v4260 = vadd.f32 %v4228, 1.1283791
      %v4261 = vadd.f32 %v4229, 1.1283791
      %v4262 = vadd.f32 %v4230, 1.1283791
      %v4263 = vadd.f32 %v4231, 1.1283791
      %v4264 = vadd.f32 %v4232, 1.1283791
      %v4265 = vadd.f32 %v4233, 1.1283791
      %v4266 = vadd.f32 %v4234, 1.1283791
      %v4267 = vadd.f32 %v4235, 1.1283791
      %v4268 = vmul.f32 %v3980, -1.1791603e-07
      %v4269 = vmul.f32 %v3981, -1.1791603e-07
      %v4270 = vmul.f32 %v3982, -1.1791603e-07
      %v4271 = vmul.f32 %v3983, -1.1791603e-07
      %v4272 = vmul.f32 %v3984, -1.1791603e-07
      %v4273 = vmul.f32 %v3985, -1.1791603e-07
      %v4274 = vmul.f32 %v3986, -1.1791603e-07
      %v4275 = vmul.f32 %v3987, -1.1791603e-07
      %v4276 = vmul.f32 %v3988, -1.1791603e-07
      %v4277 = vmul.f32 %v3989, -1.1791603e-07
      %v4278 = vmul.f32 %v3990, -1.1791603e-07
      %v4279 = vmul.f32 %v3991, -1.1791603e-07
      %v4280 = vmul.f32 %v3992, -1.1791603e-07
      %v4281 = vmul.f32 %v3993, -1.1791603e-07
      %v4282 = vmul.f32 %v3994, -1.1791603e-07
      %v4283 = vmul.f32 %v3995, -1.1791603e-07
      %v4284 = vmul.f32 %v3996, -1.1791603e-07
      %v4285 = vmul.f32 %v3997, -1.1791603e-07
      %v4286 = vmul.f32 %v3998, -1.1791603e-07
      %v4287 = vmul.f32 %v3999, -1.1791603e-07
      %v4288 = vmul.f32 %v4000, -1.1791603e-07
      %v4289 = vmul.f32 %v4001, -1.1791603e-07
      %v4290 = vmul.f32 %v4002, -1.1791603e-07
      %v4291 = vmul.f32 %v4003, -1.1791603e-07
      %v4292 = vmul.f32 %v4004, -1.1791603e-07
      %v4293 = vmul.f32 %v4005, -1.1791603e-07
      %v4294 = vmul.f32 %v4006, -1.1791603e-07
      %v4295 = vmul.f32 %v4007, -1.1791603e-07
      %v4296 = vmul.f32 %v4008, -1.1791603e-07
      %v4297 = vmul.f32 %v4009, -1.1791603e-07
      %v4298 = vmul.f32 %v4010, -1.1791603e-07
      %v4299 = vmul.f32 %v4011, -1.1791603e-07
      %v4300 = vadd.f32 %v4268, 2.3547966e-05
      %v4301 = vadd.f32 %v4269, 2.3547966e-05
      %v4302 = vadd.f32 %v4270, 2.3547966e-05
      %v4303 = vadd.f32 %v4271, 2.3547966e-05
      %v4304 = vadd.f32 %v4272, 2.3547966e-05
      %v4305 = vadd.f32 %v4273, 2.3547966e-05
      %v4306 = vadd.f32 %v4274, 2.3547966e-05
      %v4307 = vadd.f32 %v4275, 2.3547966e-05
      %v4308 = vadd.f32 %v4276, 2.3547966e-05
      %v4309 = vadd.f32 %v4277, 2.3547966e-05
      %v4310 = vadd.f32 %v4278, 2.3547966e-05
      %v4311 = vadd.f32 %v4279, 2.3547966e-05
      %v4312 = vadd.f32 %v4280, 2.3547966e-05
      %v4313 = vadd.f32 %v4281, 2.3547966e-05
      %v4314 = vadd.f32 %v4282, 2.3547966e-05
      %v4315 = vadd.f32 %v4283, 2.3547966e-05
      %v4316 = vadd.f32 %v4284, 2.3547966e-05
      %v4317 = vadd.f32 %v4285, 2.3547966e-05
      %v4318 = vadd.f32 %v4286, 2.3547966e-05
      %v4319 = vadd.f32 %v4287, 2.3547966e-05
      %v4320 = vadd.f32 %v4288, 2.3547966e-05
      %v4321 = vadd.f32 %v4289, 2.3547966e-05
      %v4322 = vadd.f32 %v4290, 2.3547966e-05
      %v4323 = vadd.f32 %v4291, 2.3547966e-05
      %v4324 = vadd.f32 %v4292, 2.3547966e-05
      %v4325 = vadd.f32 %v4293, 2.3547966e-05
      %v4326 = vadd.f32 %v4294, 2.3547966e-05
      %v4327 = vadd.f32 %v4295, 2.3547966e-05
      %v4328 = vadd.f32 %v4296, 2.3547966e-05
      %v4329 = vadd.f32 %v4297, 2.3547966e-05
      %v4330 = vadd.f32 %v4298, 2.3547966e-05
      %v4331 = vadd.f32 %v4299, 2.3547966e-05
      %v4332 = vmul.f32 %v4300, %v3980
      %v4333 = vmul.f32 %v4301, %v3981
      %v4334 = vmul.f32 %v4302, %v3982
      %v4335 = vmul.f32 %v4303, %v3983
      %v4336 = vmul.f32 %v4304, %v3984
      %v4337 = vmul.f32 %v4305, %v3985
      %v4338 = vmul.f32 %v4306, %v3986
      %v4339 = vmul.f32 %v4307, %v3987
      %v4340 = vmul.f32 %v4308, %v3988
      %v4341 = vmul.f32 %v4309, %v3989
      %v4342 = vmul.f32 %v4310, %v3990
      %v4343 = vmul.f32 %v4311, %v3991
      %v4344 = vmul.f32 %v4312, %v3992
      %v4345 = vmul.f32 %v4313, %v3993
      %v4346 = vmul.f32 %v4314, %v3994
      %v4347 = vmul.f32 %v4315, %v3995
      %v4348 = vmul.f32 %v4316, %v3996
      %v4349 = vmul.f32 %v4317, %v3997
      %v4350 = vmul.f32 %v4318, %v3998
      %v4351 = vmul.f32 %v4319, %v3999
      %v4352 = vmul.f32 %v4320, %v4000
      %v4353 = vmul.f32 %v4321, %v4001
      %v4354 = vmul.f32 %v4322, %v4002
      %v4355 = vmul.f32 %v4323, %v4003
      %v4356 = vmul.f32 %v4324, %v4004
      %v4357 = vmul.f32 %v4325, %v4005
      %v4358 = vmul.f32 %v4326, %v4006
      %v4359 = vmul.f32 %v4327, %v4007
      %v4360 = vmul.f32 %v4328, %v4008
      %v4361 = vmul.f32 %v4329, %v4009
      %v4362 = vmul.f32 %v4330, %v4010
      %v4363 = vmul.f32 %v4331, %v4011
      %v4364 = vadd.f32 %v4332, 0.0010179626
      %v4365 = vadd.f32 %v4333, 0.0010179626
      %v4366 = vadd.f32 %v4334, 0.0010179626
      %v4367 = vadd.f32 %v4335, 0.0010179626
      %v4368 = vadd.f32 %v4336, 0.0010179626
      %v4369 = vadd.f32 %v4337, 0.0010179626
      %v4370 = vadd.f32 %v4338, 0.0010179626
      %v4371 = vadd.f32 %v4339, 0.0010179626
      %v4372 = vadd.f32 %v4340, 0.0010179626
      %v4373 = vadd.f32 %v4341, 0.0010179626
      %v4374 = vadd.f32 %v4342, 0.0010179626
      %v4375 = vadd.f32 %v4343, 0.0010179626
      %v4376 = vadd.f32 %v4344, 0.0010179626
      %v4377 = vadd.f32 %v4345, 0.0010179626
      %v4378 = vadd.f32 %v4346, 0.0010179626
      %v4379 = vadd.f32 %v4347, 0.0010179626
      %v4380 = vadd.f32 %v4348, 0.0010179626
      %v4381 = vadd.f32 %v4349, 0.0010179626
      %v4382 = vadd.f32 %v4350, 0.0010179626
      %v4383 = vadd.f32 %v4351, 0.0010179626
      %v4384 = vadd.f32 %v4352, 0.0010179626
      %v4385 = vadd.f32 %v4353, 0.0010179626
      %v4386 = vadd.f32 %v4354, 0.0010179626
      %v4387 = vadd.f32 %v4355, 0.0010179626
      %v4388 = vadd.f32 %v4356, 0.0010179626
      %v4389 = vadd.f32 %v4357, 0.0010179626
      %v4390 = vadd.f32 %v4358, 0.0010179626
      %v4391 = vadd.f32 %v4359, 0.0010179626
      %v4392 = vadd.f32 %v4360, 0.0010179626
      %v4393 = vadd.f32 %v4361, 0.0010179626
      %v4394 = vadd.f32 %v4362, 0.0010179626
      %v4395 = vadd.f32 %v4363, 0.0010179626
      %v4396 = vmul.f32 %v4364, %v3980
      %v4397 = vmul.f32 %v4365, %v3981
      %v4398 = vmul.f32 %v4366, %v3982
      %v4399 = vmul.f32 %v4367, %v3983
      %v4400 = vmul.f32 %v4368, %v3984
      %v4401 = vmul.f32 %v4369, %v3985
      %v4402 = vmul.f32 %v4370, %v3986
      %v4403 = vmul.f32 %v4371, %v3987
      %v4404 = vmul.f32 %v4372, %v3988
      %v4405 = vmul.f32 %v4373, %v3989
      %v4406 = vmul.f32 %v4374, %v3990
      %v4407 = vmul.f32 %v4375, %v3991
      %v4408 = vmul.f32 %v4376, %v3992
      %v4409 = vmul.f32 %v4377, %v3993
      %v4410 = vmul.f32 %v4378, %v3994
      %v4411 = vmul.f32 %v4379, %v3995
      %v4412 = vmul.f32 %v4380, %v3996
      %v4413 = vmul.f32 %v4381, %v3997
      %v4414 = vmul.f32 %v4382, %v3998
      %v4415 = vmul.f32 %v4383, %v3999
      %v4416 = vmul.f32 %v4384, %v4000
      %v4417 = vmul.f32 %v4385, %v4001
      %v4418 = vmul.f32 %v4386, %v4002
      %v4419 = vmul.f32 %v4387, %v4003
      %v4420 = vmul.f32 %v4388, %v4004
      %v4421 = vmul.f32 %v4389, %v4005
      %v4422 = vmul.f32 %v4390, %v4006
      %v4423 = vmul.f32 %v4391, %v4007
      %v4424 = vmul.f32 %v4392, %v4008
      %v4425 = vmul.f32 %v4393, %v4009
      %v4426 = vmul.f32 %v4394, %v4010
      %v4427 = vmul.f32 %v4395, %v4011
      %v4428 = vadd.f32 %v4396, 0.01407047
      %v4429 = vadd.f32 %v4397, 0.01407047
      %v4430 = vadd.f32 %v4398, 0.01407047
      %v4431 = vadd.f32 %v4399, 0.01407047
      %v4432 = vadd.f32 %v4400, 0.01407047
      %v4433 = vadd.f32 %v4401, 0.01407047
      %v4434 = vadd.f32 %v4402, 0.01407047
      %v4435 = vadd.f32 %v4403, 0.01407047
      %v4436 = vadd.f32 %v4404, 0.01407047
      %v4437 = vadd.f32 %v4405, 0.01407047
      %v4438 = vadd.f32 %v4406, 0.01407047
      %v4439 = vadd.f32 %v4407, 0.01407047
      %v4440 = vadd.f32 %v4408, 0.01407047
      %v4441 = vadd.f32 %v4409, 0.01407047
      %v4442 = vadd.f32 %v4410, 0.01407047
      %v4443 = vadd.f32 %v4411, 0.01407047
      %v4444 = vadd.f32 %v4412, 0.01407047
      %v4445 = vadd.f32 %v4413, 0.01407047
      %v4446 = vadd.f32 %v4414, 0.01407047
      %v4447 = vadd.f32 %v4415, 0.01407047
      %v4448 = vadd.f32 %v4416, 0.01407047
      %v4449 = vadd.f32 %v4417, 0.01407047
      %v4450 = vadd.f32 %v4418, 0.01407047
      %v4451 = vadd.f32 %v4419, 0.01407047
      %v4452 = vadd.f32 %v4420, 0.01407047
      %v4453 = vadd.f32 %v4421, 0.01407047
      %v4454 = vadd.f32 %v4422, 0.01407047
      %v4455 = vadd.f32 %v4423, 0.01407047
      %v4456 = vadd.f32 %v4424, 0.01407047
      %v4457 = vadd.f32 %v4425, 0.01407047
      %v4458 = vadd.f32 %v4426, 0.01407047
      %v4459 = vadd.f32 %v4427, 0.01407047
      %v4460 = vmul.f32 %v4428, %v3980
      %v4461 = vmul.f32 %v4429, %v3981
      %v4462 = vmul.f32 %v4430, %v3982
      %v4463 = vmul.f32 %v4431, %v3983
      %v4464 = vmul.f32 %v4432, %v3984
      %v4465 = vmul.f32 %v4433, %v3985
      %v4466 = vmul.f32 %v4434, %v3986
      %v4467 = vmul.f32 %v4435, %v3987
      %v4468 = vmul.f32 %v4436, %v3988
      %v4469 = vmul.f32 %v4437, %v3989
      %v4470 = vmul.f32 %v4438, %v3990
      %v4471 = vmul.f32 %v4439, %v3991
      %v4472 = vmul.f32 %v4440, %v3992
      %v4473 = vmul.f32 %v4441, %v3993
      %v4474 = vmul.f32 %v4442, %v3994
      %v4475 = vmul.f32 %v4443, %v3995
      %v4476 = vmul.f32 %v4444, %v3996
      %v4477 = vmul.f32 %v4445, %v3997
      %v4478 = vmul.f32 %v4446, %v3998
      %v4479 = vmul.f32 %v4447, %v3999
      %v4480 = vmul.f32 %v4448, %v4000
      %v4481 = vmul.f32 %v4449, %v4001
      %v4482 = vmul.f32 %v4450, %v4002
      %v4483 = vmul.f32 %v4451, %v4003
      %v4484 = vmul.f32 %v4452, %v4004
      %v4485 = vmul.f32 %v4453, %v4005
      %v4486 = vmul.f32 %v4454, %v4006
      %v4487 = vmul.f32 %v4455, %v4007
      %v4488 = vmul.f32 %v4456, %v4008
      %v4489 = vmul.f32 %v4457, %v4009
      %v4490 = vmul.f32 %v4458, %v4010
      %v4491 = vmul.f32 %v4459, %v4011
      %v4492 = vadd.f32 %v4460, 0.11098505
      %v4493 = vadd.f32 %v4461, 0.11098505
      %v4494 = vadd.f32 %v4462, 0.11098505
      %v4495 = vadd.f32 %v4463, 0.11098505
      %v4496 = vadd.f32 %v4464, 0.11098505
      %v4497 = vadd.f32 %v4465, 0.11098505
      %v4498 = vadd.f32 %v4466, 0.11098505
      %v4499 = vadd.f32 %v4467, 0.11098505
      %v4500 = vadd.f32 %v4468, 0.11098505
      %v4501 = vadd.f32 %v4469, 0.11098505
      %v4502 = vadd.f32 %v4470, 0.11098505
      %v4503 = vadd.f32 %v4471, 0.11098505
      %v4504 = vadd.f32 %v4472, 0.11098505
      %v4505 = vadd.f32 %v4473, 0.11098505
      %v4506 = vadd.f32 %v4474, 0.11098505
      %v4507 = vadd.f32 %v4475, 0.11098505
      %v4508 = vadd.f32 %v4476, 0.11098505
      %v4509 = vadd.f32 %v4477, 0.11098505
      %v4510 = vadd.f32 %v4478, 0.11098505
      %v4511 = vadd.f32 %v4479, 0.11098505
      %v4512 = vadd.f32 %v4480, 0.11098505
      %v4513 = vadd.f32 %v4481, 0.11098505
      %v4514 = vadd.f32 %v4482, 0.11098505
      %v4515 = vadd.f32 %v4483, 0.11098505
      %v4516 = vadd.f32 %v4484, 0.11098505
      %v4517 = vadd.f32 %v4485, 0.11098505
      %v4518 = vadd.f32 %v4486, 0.11098505
      %v4519 = vadd.f32 %v4487, 0.11098505
      %v4520 = vadd.f32 %v4488, 0.11098505
      %v4521 = vadd.f32 %v4489, 0.11098505
      %v4522 = vadd.f32 %v4490, 0.11098505
      %v4523 = vadd.f32 %v4491, 0.11098505
      %v4524 = vmul.f32 %v4492, %v3980
      %v4525 = vmul.f32 %v4493, %v3981
      %v4526 = vmul.f32 %v4494, %v3982
      %v4527 = vmul.f32 %v4495, %v3983
      %v4528 = vmul.f32 %v4496, %v3984
      %v4529 = vmul.f32 %v4497, %v3985
      %v4530 = vmul.f32 %v4498, %v3986
      %v4531 = vmul.f32 %v4499, %v3987
      %v4532 = vmul.f32 %v4500, %v3988
      %v4533 = vmul.f32 %v4501, %v3989
      %v4534 = vmul.f32 %v4502, %v3990
      %v4535 = vmul.f32 %v4503, %v3991
      %v4536 = vmul.f32 %v4504, %v3992
      %v4537 = vmul.f32 %v4505, %v3993
      %v4538 = vmul.f32 %v4506, %v3994
      %v4539 = vmul.f32 %v4507, %v3995
      %v4540 = vmul.f32 %v4508, %v3996
      %v4541 = vmul.f32 %v4509, %v3997
      %v4542 = vmul.f32 %v4510, %v3998
      %v4543 = vmul.f32 %v4511, %v3999
      %v4544 = vmul.f32 %v4512, %v4000
      %v4545 = vmul.f32 %v4513, %v4001
      %v4546 = vmul.f32 %v4514, %v4002
      %v4547 = vmul.f32 %v4515, %v4003
      %v4548 = vmul.f32 %v4516, %v4004
      %v4549 = vmul.f32 %v4517, %v4005
      %v4550 = vmul.f32 %v4518, %v4006
      %v4551 = vmul.f32 %v4519, %v4007
      %v4552 = vmul.f32 %v4520, %v4008
      %v4553 = vmul.f32 %v4521, %v4009
      %v4554 = vmul.f32 %v4522, %v4010
      %v4555 = vmul.f32 %v4523, %v4011
      %v4556 = vadd.f32 %v4524, 0.49746925
      %v4557 = vadd.f32 %v4525, 0.49746925
      %v4558 = vadd.f32 %v4526, 0.49746925
      %v4559 = vadd.f32 %v4527, 0.49746925
      %v4560 = vadd.f32 %v4528, 0.49746925
      %v4561 = vadd.f32 %v4529, 0.49746925
      %v4562 = vadd.f32 %v4530, 0.49746925
      %v4563 = vadd.f32 %v4531, 0.49746925
      %v4564 = vadd.f32 %v4532, 0.49746925
      %v4565 = vadd.f32 %v4533, 0.49746925
      %v4566 = vadd.f32 %v4534, 0.49746925
      %v4567 = vadd.f32 %v4535, 0.49746925
      %v4568 = vadd.f32 %v4536, 0.49746925
      %v4569 = vadd.f32 %v4537, 0.49746925
      %v4570 = vadd.f32 %v4538, 0.49746925
      %v4571 = vadd.f32 %v4539, 0.49746925
      %v4572 = vadd.f32 %v4540, 0.49746925
      %v4573 = vadd.f32 %v4541, 0.49746925
      %v4574 = vadd.f32 %v4542, 0.49746925
      %v4575 = vadd.f32 %v4543, 0.49746925
      %v4576 = vadd.f32 %v4544, 0.49746925
      %v4577 = vadd.f32 %v4545, 0.49746925
      %v4578 = vadd.f32 %v4546, 0.49746925
      %v4579 = vadd.f32 %v4547, 0.49746925
      %v4580 = vadd.f32 %v4548, 0.49746925
      %v4581 = vadd.f32 %v4549, 0.49746925
      %v4582 = vadd.f32 %v4550, 0.49746925
      %v4583 = vadd.f32 %v4551, 0.49746925
      %v4584 = vadd.f32 %v4552, 0.49746925
      %v4585 = vadd.f32 %v4553, 0.49746925
      %v4586 = vadd.f32 %v4554, 0.49746925
      %v4587 = vadd.f32 %v4555, 0.49746925
      %v4588 = vmul.f32 %v4556, %v3980
      %v4589 = vmul.f32 %v4557, %v3981
      %v4590 = vmul.f32 %v4558, %v3982
      %v4591 = vmul.f32 %v4559, %v3983
      %v4592 = vmul.f32 %v4560, %v3984
      %v4593 = vmul.f32 %v4561, %v3985
      %v4594 = vmul.f32 %v4562, %v3986
      %v4595 = vmul.f32 %v4563, %v3987
      %v4596 = vmul.f32 %v4564, %v3988
      %v4597 = vmul.f32 %v4565, %v3989
      %v4598 = vmul.f32 %v4566, %v3990
      %v4599 = vmul.f32 %v4567, %v3991
      %v4600 = vmul.f32 %v4568, %v3992
      %v4601 = vmul.f32 %v4569, %v3993
      %v4602 = vmul.f32 %v4570, %v3994
      %v4603 = vmul.f32 %v4571, %v3995
      %v4604 = vmul.f32 %v4572, %v3996
      %v4605 = vmul.f32 %v4573, %v3997
      %v4606 = vmul.f32 %v4574, %v3998
      %v4607 = vmul.f32 %v4575, %v3999
      %v4608 = vmul.f32 %v4576, %v4000
      %v4609 = vmul.f32 %v4577, %v4001
      %v4610 = vmul.f32 %v4578, %v4002
      %v4611 = vmul.f32 %v4579, %v4003
      %v4612 = vmul.f32 %v4580, %v4004
      %v4613 = vmul.f32 %v4581, %v4005
      %v4614 = vmul.f32 %v4582, %v4006
      %v4615 = vmul.f32 %v4583, %v4007
      %v4616 = vmul.f32 %v4584, %v4008
      %v4617 = vmul.f32 %v4585, %v4009
      %v4618 = vmul.f32 %v4586, %v4010
      %v4619 = vmul.f32 %v4587, %v4011
      %v4620 = vadd.f32 %v4588, 1.0
      %v4621 = vadd.f32 %v4589, 1.0
      %v4622 = vadd.f32 %v4590, 1.0
      %v4623 = vadd.f32 %v4591, 1.0
      %v4624 = vadd.f32 %v4592, 1.0
      %v4625 = vadd.f32 %v4593, 1.0
      %v4626 = vadd.f32 %v4594, 1.0
      %v4627 = vadd.f32 %v4595, 1.0
      %v4628 = vadd.f32 %v4596, 1.0
      %v4629 = vadd.f32 %v4597, 1.0
      %v4630 = vadd.f32 %v4598, 1.0
      %v4631 = vadd.f32 %v4599, 1.0
      %v4632 = vadd.f32 %v4600, 1.0
      %v4633 = vadd.f32 %v4601, 1.0
      %v4634 = vadd.f32 %v4602, 1.0
      %v4635 = vadd.f32 %v4603, 1.0
      %v4636 = vadd.f32 %v4604, 1.0
      %v4637 = vadd.f32 %v4605, 1.0
      %v4638 = vadd.f32 %v4606, 1.0
      %v4639 = vadd.f32 %v4607, 1.0
      %v4640 = vadd.f32 %v4608, 1.0
      %v4641 = vadd.f32 %v4609, 1.0
      %v4642 = vadd.f32 %v4610, 1.0
      %v4643 = vadd.f32 %v4611, 1.0
      %v4644 = vadd.f32 %v4612, 1.0
      %v4645 = vadd.f32 %v4613, 1.0
      %v4646 = vadd.f32 %v4614, 1.0
      %v4647 = vadd.f32 %v4615, 1.0
      %v4648 = vadd.f32 %v4616, 1.0
      %v4649 = vadd.f32 %v4617, 1.0
      %v4650 = vadd.f32 %v4618, 1.0
      %v4651 = vadd.f32 %v4619, 1.0
      %v4652 = vmul.f32 %v3948, %v4236
      %v4653 = vmul.f32 %v3949, %v4237
      %v4654 = vmul.f32 %v3950, %v4238
      %v4655 = vmul.f32 %v3951, %v4239
      %v4656 = vmul.f32 %v3952, %v4240
      %v4657 = vmul.f32 %v3953, %v4241
      %v4658 = vmul.f32 %v3954, %v4242
      %v4659 = vmul.f32 %v3955, %v4243
      %v4660 = vmul.f32 %v3956, %v4244
      %v4661 = vmul.f32 %v3957, %v4245
      %v4662 = vmul.f32 %v3958, %v4246
      %v4663 = vmul.f32 %v3959, %v4247
      %v4664 = vmul.f32 %v3960, %v4248
      %v4665 = vmul.f32 %v3961, %v4249
      %v4666 = vmul.f32 %v3962, %v4250
      %v4667 = vmul.f32 %v3963, %v4251
      %v4668 = vmul.f32 %v3964, %v4252
      %v4669 = vmul.f32 %v3965, %v4253
      %v4670 = vmul.f32 %v3966, %v4254
      %v4671 = vmul.f32 %v3967, %v4255
      %v4672 = vmul.f32 %v3968, %v4256
      %v4673 = vmul.f32 %v3969, %v4257
      %v4674 = vmul.f32 %v3970, %v4258
      %v4675 = vmul.f32 %v3971, %v4259
      %v4676 = vmul.f32 %v3972, %v4260
      %v4677 = vmul.f32 %v3973, %v4261
      %v4678 = vmul.f32 %v3974, %v4262
      %v4679 = vmul.f32 %v3975, %v4263
      %v4680 = vmul.f32 %v3976, %v4264
      %v4681 = vmul.f32 %v3977, %v4265
      %v4682 = vmul.f32 %v3978, %v4266
      %v4683 = vmul.f32 %v3979, %v4267
      %v4684 = vrcp.pop %v4620
      %v4685 = vrcp.pop %v4621
      %v4686 = vrcp.pop %v4622
      %v4687 = vrcp.pop %v4623
      %v4688 = vrcp.pop %v4624
      %v4689 = vrcp.pop %v4625
      %v4690 = vrcp.pop %v4626
      %v4691 = vrcp.pop %v4627
      %v4692 = vrcp.pop %v4628
      %v4693 = vrcp.pop %v4629
      %v4694 = vrcp.pop %v4630
      %v4695 = vrcp.pop %v4631
      %v4696 = vrcp.pop %v4632
      %v4697 = vrcp.pop %v4633
      %v4698 = vrcp.pop %v4634
      %v4699 = vrcp.pop %v4635
      %v4700 = vrcp.pop %v4636
      %v4701 = vrcp.pop %v4637
      %v4702 = vrcp.pop %v4638
      %v4703 = vrcp.pop %v4639
      %v4704 = vrcp.pop %v4640
      %v4705 = vrcp.pop %v4641
      %v4706 = vrcp.pop %v4642
      %v4707 = vrcp.pop %v4643
      %v4708 = vrcp.pop %v4644
      %v4709 = vrcp.pop %v4645
      %v4710 = vrcp.pop %v4646
      %v4711 = vrcp.pop %v4647
      %v4712 = vrcp.pop %v4648
      %v4713 = vrcp.pop %v4649
      %v4714 = vrcp.pop %v4650
      %v4715 = vrcp.pop %v4651
      %v4716 = vmul.f32 %v4652, %v4684
      %v4717 = vmul.f32 %v4653, %v4685
      %v4718 = vmul.f32 %v4654, %v4686
      %v4719 = vmul.f32 %v4655, %v4687
      %v4720 = vmul.f32 %v4656, %v4688
      %v4721 = vmul.f32 %v4657, %v4689
      %v4722 = vmul.f32 %v4658, %v4690
      %v4723 = vmul.f32 %v4659, %v4691
      %v4724 = vmul.f32 %v4660, %v4692
      %v4725 = vmul.f32 %v4661, %v4693
      %v4726 = vmul.f32 %v4662, %v4694
      %v4727 = vmul.f32 %v4663, %v4695
      %v4728 = vmul.f32 %v4664, %v4696
      %v4729 = vmul.f32 %v4665, %v4697
      %v4730 = vmul.f32 %v4666, %v4698
      %v4731 = vmul.f32 %v4667, %v4699
      %v4732 = vmul.f32 %v4668, %v4700
      %v4733 = vmul.f32 %v4669, %v4701
      %v4734 = vmul.f32 %v4670, %v4702
      %v4735 = vmul.f32 %v4671, %v4703
      %v4736 = vmul.f32 %v4672, %v4704
      %v4737 = vmul.f32 %v4673, %v4705
      %v4738 = vmul.f32 %v4674, %v4706
      %v4739 = vmul.f32 %v4675, %v4707
      %v4740 = vmul.f32 %v4676, %v4708
      %v4741 = vmul.f32 %v4677, %v4709
      %v4742 = vmul.f32 %v4678, %v4710
      %v4743 = vmul.f32 %v4679, %v4711
      %v4744 = vmul.f32 %v4680, %v4712
      %v4745 = vmul.f32 %v4681, %v4713
      %v4746 = vmul.f32 %v4682, %v4714
      %v4747 = vmul.f32 %v4683, %v4715
      %v4748 = vadd.f32 %v4716, 1.0
      %v4749 = vadd.f32 %v4717, 1.0
      %v4750 = vadd.f32 %v4718, 1.0
      %v4751 = vadd.f32 %v4719, 1.0
      %v4752 = vadd.f32 %v4720, 1.0
      %v4753 = vadd.f32 %v4721, 1.0
      %v4754 = vadd.f32 %v4722, 1.0
      %v4755 = vadd.f32 %v4723, 1.0
      %v4756 = vadd.f32 %v4724, 1.0
      %v4757 = vadd.f32 %v4725, 1.0
      %v4758 = vadd.f32 %v4726, 1.0
      %v4759 = vadd.f32 %v4727, 1.0
      %v4760 = vadd.f32 %v4728, 1.0
      %v4761 = vadd.f32 %v4729, 1.0
      %v4762 = vadd.f32 %v4730, 1.0
      %v4763 = vadd.f32 %v4731, 1.0
      %v4764 = vadd.f32 %v4732, 1.0
      %v4765 = vadd.f32 %v4733, 1.0
      %v4766 = vadd.f32 %v4734, 1.0
      %v4767 = vadd.f32 %v4735, 1.0
      %v4768 = vadd.f32 %v4736, 1.0
      %v4769 = vadd.f32 %v4737, 1.0
      %v4770 = vadd.f32 %v4738, 1.0
      %v4771 = vadd.f32 %v4739, 1.0
      %v4772 = vadd.f32 %v4740, 1.0
      %v4773 = vadd.f32 %v4741, 1.0
      %v4774 = vadd.f32 %v4742, 1.0
      %v4775 = vadd.f32 %v4743, 1.0
      %v4776 = vadd.f32 %v4744, 1.0
      %v4777 = vadd.f32 %v4745, 1.0
      %v4778 = vadd.f32 %v4746, 1.0
      %v4779 = vadd.f32 %v4747, 1.0
      %v4780 = vmul.f32 %v3852, %v4748
      %v4781 = vmul.f32 %v3853, %v4749
      %v4782 = vmul.f32 %v3854, %v4750
      %v4783 = vmul.f32 %v3855, %v4751
      %v4784 = vmul.f32 %v3856, %v4752
      %v4785 = vmul.f32 %v3857, %v4753
      %v4786 = vmul.f32 %v3858, %v4754
      %v4787 = vmul.f32 %v3859, %v4755
      %v4788 = vmul.f32 %v3860, %v4756
      %v4789 = vmul.f32 %v3861, %v4757
      %v4790 = vmul.f32 %v3862, %v4758
      %v4791 = vmul.f32 %v3863, %v4759
      %v4792 = vmul.f32 %v3864, %v4760
      %v4793 = vmul.f32 %v3865, %v4761
      %v4794 = vmul.f32 %v3866, %v4762
      %v4795 = vmul.f32 %v3867, %v4763
      %v4796 = vmul.f32 %v3868, %v4764
      %v4797 = vmul.f32 %v3869, %v4765
      %v4798 = vmul.f32 %v3870, %v4766
      %v4799 = vmul.f32 %v3871, %v4767
      %v4800 = vmul.f32 %v3872, %v4768
      %v4801 = vmul.f32 %v3873, %v4769
      %v4802 = vmul.f32 %v3874, %v4770
      %v4803 = vmul.f32 %v3875, %v4771
      %v4804 = vmul.f32 %v3876, %v4772
      %v4805 = vmul.f32 %v3877, %v4773
      %v4806 = vmul.f32 %v3878, %v4774
      %v4807 = vmul.f32 %v3879, %v4775
      %v4808 = vmul.f32 %v3880, %v4776
      %v4809 = vmul.f32 %v3881, %v4777
      %v4810 = vmul.f32 %v3882, %v4778
      %v4811 = vmul.f32 %v3883, %v4779
      %4812 = vst.msk [vmem:[%s193] sm:$0xff] %vm1356, %v4780
      %4813 = vst.msk [vmem:[%s193 + $0x8] sm:$0xff] %vm1356, %v4781
      %4814 = vst.msk [vmem:[%s193 + $0x20] sm:$0xff] %vm1356, %v4782
      %4815 = vst.msk [vmem:[%s193 + $0x28] sm:$0xff] %vm1356, %v4783
      %4816 = vst.msk [vmem:[%s193 + $0x40] sm:$0xff] %vm1356, %v4784
      %4817 = vst.msk [vmem:[%s193 + $0x48] sm:$0xff] %vm1356, %v4785
      %4818 = vst.msk [vmem:[%s193 + $0x60] sm:$0xff] %vm1356, %v4786
      %4819 = vst.msk [vmem:[%s193 + $0x68] sm:$0xff] %vm1356, %v4787
      %4820 = vst.msk [vmem:[%s193 + $0x80] sm:$0xff] %vm1356, %v4788
      %4821 = vst.msk [vmem:[%s193 + $0x88] sm:$0xff] %vm1356, %v4789
      %4822 = vst.msk [vmem:[%s193 + $0xa0] sm:$0xff] %vm1356, %v4790
      %4823 = vst.msk [vmem:[%s193 + $0xa8] sm:$0xff] %vm1356, %v4791
      %4824 = vst.msk [vmem:[%s193 + $0xc0] sm:$0xff] %vm1356, %v4792
      %4825 = vst.msk [vmem:[%s193 + $0xc8] sm:$0xff] %vm1356, %v4793
      %4826 = vst.msk [vmem:[%s193 + $0xe0] sm:$0xff] %vm1356, %v4794
      %4827 = vst.msk [vmem:[%s193 + $0xe8] sm:$0xff] %vm1356, %v4795
      %4828 = vst.msk [vmem:[%s193 + $0x100] sm:$0xff] %vm1356, %v4796
      %4829 = vst.msk [vmem:[%s193 + $0x108] sm:$0xff] %vm1356, %v4797
      %4830 = vst.msk [vmem:[%s193 + $0x120] sm:$0xff] %vm1356, %v4798
      %4831 = vst.msk [vmem:[%s193 + $0x128] sm:$0xff] %vm1356, %v4799
      %4832 = vst.msk [vmem:[%s193 + $0x140] sm:$0xff] %vm1356, %v4800
      %4833 = vst.msk [vmem:[%s193 + $0x148] sm:$0xff] %vm1356, %v4801
      %4834 = vst.msk [vmem:[%s193 + $0x160] sm:$0xff] %vm1356, %v4802
      %4835 = vst.msk [vmem:[%s193 + $0x168] sm:$0xff] %vm1356, %v4803
      %4836 = vst.msk [vmem:[%s193 + $0x180] sm:$0xff] %vm1356, %v4804
      %4837 = vst.msk [vmem:[%s193 + $0x188] sm:$0xff] %vm1356, %v4805
      %4838 = vst.msk [vmem:[%s193 + $0x1a0] sm:$0xff] %vm1356, %v4806
      %4839 = vst.msk [vmem:[%s193 + $0x1a8] sm:$0xff] %vm1356, %v4807
      %4840 = vst.msk [vmem:[%s193 + $0x1c0] sm:$0xff] %vm1356, %v4808
      %4841 = vst.msk [vmem:[%s193 + $0x1c8] sm:$0xff] %vm1356, %v4809
      %4842 = vst.msk [vmem:[%s193 + $0x1e0] sm:$0xff] %vm1356, %v4810
      %4843 = vst.msk [vmem:[%s193 + $0x1e8] sm:$0xff] %vm1356, %v4811
      %4876 = vrot.lane.b32.xlu0 %v4780, 120
      %v4877 = vpop.permute.xlu0 %4876
      %4878 = vrot.lane.b32.xlu0 %v4781, 120
      %v4879 = vpop.permute.xlu0 %4878
      %4880 = vrot.lane.b32.xlu0 %v4782, 120
      %v4881 = vpop.permute.xlu0 %4880
      %4882 = vrot.lane.b32.xlu0 %v4783, 120
      %v4883 = vpop.permute.xlu0 %4882
      %4884 = vrot.lane.b32.xlu0 %v4784, 120
      %v4885 = vpop.permute.xlu0 %4884
      %4886 = vrot.lane.b32.xlu0 %v4785, 120
      %v4887 = vpop.permute.xlu0 %4886
      %4888 = vrot.lane.b32.xlu0 %v4786, 120
      %v4889 = vpop.permute.xlu0 %4888
      %4890 = vrot.lane.b32.xlu0 %v4787, 120
      %v4891 = vpop.permute.xlu0 %4890
      %4892 = vrot.lane.b32.xlu0 %v4788, 120
      %v4893 = vpop.permute.xlu0 %4892
      %4894 = vrot.lane.b32.xlu0 %v4789, 120
      %v4895 = vpop.permute.xlu0 %4894
      %4896 = vrot.lane.b32.xlu0 %v4790, 120
      %v4897 = vpop.permute.xlu0 %4896
      %4898 = vrot.lane.b32.xlu0 %v4791, 120
      %v4899 = vpop.permute.xlu0 %4898
      %4900 = vrot.lane.b32.xlu0 %v4792, 120
      %v4901 = vpop.permute.xlu0 %4900
      %4902 = vrot.lane.b32.xlu0 %v4793, 120
      %v4903 = vpop.permute.xlu0 %4902
      %4904 = vrot.lane.b32.xlu0 %v4794, 120
      %v4905 = vpop.permute.xlu0 %4904
      %4906 = vrot.lane.b32.xlu0 %v4795, 120
      %v4907 = vpop.permute.xlu0 %4906
      %4908 = vrot.lane.b32.xlu0 %v4796, 120
      %v4909 = vpop.permute.xlu0 %4908
      %4910 = vrot.lane.b32.xlu0 %v4797, 120
      %v4911 = vpop.permute.xlu0 %4910
      %4912 = vrot.lane.b32.xlu0 %v4798, 120
      %v4913 = vpop.permute.xlu0 %4912
      %4914 = vrot.lane.b32.xlu0 %v4799, 120
      %v4915 = vpop.permute.xlu0 %4914
      %4916 = vrot.lane.b32.xlu0 %v4800, 120
      %v4917 = vpop.permute.xlu0 %4916
      %4918 = vrot.lane.b32.xlu0 %v4801, 120
      %v4919 = vpop.permute.xlu0 %4918
      %4920 = vrot.lane.b32.xlu0 %v4802, 120
      %v4921 = vpop.permute.xlu0 %4920
      %4922 = vrot.lane.b32.xlu0 %v4803, 120
      %v4923 = vpop.permute.xlu0 %4922
      %4924 = vrot.lane.b32.xlu0 %v4804, 120
      %v4925 = vpop.permute.xlu0 %4924
      %4926 = vrot.lane.b32.xlu0 %v4805, 120
      %v4927 = vpop.permute.xlu0 %4926
      %4928 = vrot.lane.b32.xlu0 %v4806, 120
      %v4929 = vpop.permute.xlu0 %4928
      %4930 = vrot.lane.b32.xlu0 %v4807, 120
      %v4931 = vpop.permute.xlu0 %4930
      %4932 = vrot.lane.b32.xlu0 %v4808, 120
      %v4933 = vpop.permute.xlu0 %4932
      %4934 = vrot.lane.b32.xlu0 %v4809, 120
      %v4935 = vpop.permute.xlu0 %4934
      %4936 = vrot.lane.b32.xlu0 %v4810, 120
      %v4937 = vpop.permute.xlu0 %4936
      %4938 = vrot.lane.b32.xlu0 %v4811, 120
      %v4939 = vpop.permute.xlu0 %4938
      %s4972 = scalar_lea.vmem %s193, 16
      %4973 = vst.msk [vmem:[%s4972] sm:$0xff] %vm1356, %v4877
      %4974 = vst.msk [vmem:[%s4972 + $0x8] sm:$0xff] %vm1356, %v4879
      %4975 = vst.msk [vmem:[%s4972 + $0x20] sm:$0xff] %vm1356, %v4881
      %4976 = vst.msk [vmem:[%s4972 + $0x28] sm:$0xff] %vm1356, %v4883
      %4977 = vst.msk [vmem:[%s4972 + $0x40] sm:$0xff] %vm1356, %v4885
      %4978 = vst.msk [vmem:[%s4972 + $0x48] sm:$0xff] %vm1356, %v4887
      %4979 = vst.msk [vmem:[%s4972 + $0x60] sm:$0xff] %vm1356, %v4889
      %4980 = vst.msk [vmem:[%s4972 + $0x68] sm:$0xff] %vm1356, %v4891
      %4981 = vst.msk [vmem:[%s4972 + $0x80] sm:$0xff] %vm1356, %v4893
      %4982 = vst.msk [vmem:[%s4972 + $0x88] sm:$0xff] %vm1356, %v4895
      %4983 = vst.msk [vmem:[%s4972 + $0xa0] sm:$0xff] %vm1356, %v4897
      %4984 = vst.msk [vmem:[%s4972 + $0xa8] sm:$0xff] %vm1356, %v4899
      %4985 = vst.msk [vmem:[%s4972 + $0xc0] sm:$0xff] %vm1356, %v4901
      %4986 = vst.msk [vmem:[%s4972 + $0xc8] sm:$0xff] %vm1356, %v4903
      %4987 = vst.msk [vmem:[%s4972 + $0xe0] sm:$0xff] %vm1356, %v4905
      %4988 = vst.msk [vmem:[%s4972 + $0xe8] sm:$0xff] %vm1356, %v4907
      %4989 = vst.msk [vmem:[%s4972 + $0x100] sm:$0xff] %vm1356, %v4909
      %4990 = vst.msk [vmem:[%s4972 + $0x108] sm:$0xff] %vm1356, %v4911
      %4991 = vst.msk [vmem:[%s4972 + $0x120] sm:$0xff] %vm1356, %v4913
      %4992 = vst.msk [vmem:[%s4972 + $0x128] sm:$0xff] %vm1356, %v4915
      %4993 = vst.msk [vmem:[%s4972 + $0x140] sm:$0xff] %vm1356, %v4917
      %4994 = vst.msk [vmem:[%s4972 + $0x148] sm:$0xff] %vm1356, %v4919
      %4995 = vst.msk [vmem:[%s4972 + $0x160] sm:$0xff] %vm1356, %v4921
      %4996 = vst.msk [vmem:[%s4972 + $0x168] sm:$0xff] %vm1356, %v4923
      %4997 = vst.msk [vmem:[%s4972 + $0x180] sm:$0xff] %vm1356, %v4925
      %4998 = vst.msk [vmem:[%s4972 + $0x188] sm:$0xff] %vm1356, %v4927
      %4999 = vst.msk [vmem:[%s4972 + $0x1a0] sm:$0xff] %vm1356, %v4929
      %5000 = vst.msk [vmem:[%s4972 + $0x1a8] sm:$0xff] %vm1356, %v4931
      %5001 = vst.msk [vmem:[%s4972 + $0x1c0] sm:$0xff] %vm1356, %v4933
      %5002 = vst.msk [vmem:[%s4972 + $0x1c8] sm:$0xff] %vm1356, %v4935
      %5003 = vst.msk [vmem:[%s4972 + $0x1e0] sm:$0xff] %vm1356, %v4937
      %5004 = vst.msk [vmem:[%s4972 + $0x1e8] sm:$0xff] %vm1356, %v4939
      %s5005 = sadd.s32 %s18, %s19
      %s5006 = smul.u32 16, %s5005
      %p5007 = scmp.lt.s32.totalorder %s5006, 31
      %s5008 = scalar_select %p5007, %s5006, 31
      %s5009 = smul.addr %s5008, 4
      %s5010 = smul.addr %s5009, 8
      %s5011 = scalar_lea.vmem %s3, %s5010
      // Predicated region
      $region33: #{decoder_block.1} parent=31 // pred_check
        %p5012 = pneg %p114
      $region34: #{decoder_block.1} parent=31 // pred_check_branch
        %5014 = sbr.rel (%p5012) target = $region36
      $region35: #{decoder_block.1} parent=31 // pred_region
        %s5015 = sadd.s32 %s18, %s19
        %s5016 = smul.u32 16, %s5015
      $region36: #{decoder_block.1} parent=31 // pred_fallthru
        _
    $region32: #{decoder_block.1} parent=5 // pred_fallthru
      _
    %p5017 = scmp.le.s32.totalorder 2, %s9
    // Predicated region
    $region37: #{decoder_block.1} parent=5 // pred_check
      %p5018 = pneg %p5017
    $region38: #{decoder_block.1} parent=5 // pred_check_branch
      %5020 = sbr.rel (%p5018) target = $region40
    $region39: #{decoder_block.1} parent=5 // pred_region
      %s5021 = ssub.s32 %s9, 2
      // Predicated region
      $region41: #{decoder_block.1} parent=39 // pred_check
        %p5022 = pneg %p120
      $region42: #{decoder_block.1} parent=39 // pred_check_branch
        %5024 = sbr.rel (%p5022) target = $region44
      $region43: #{decoder_block.1} parent=39 // pred_region
        %s5025 = sadd.s32 %s20, %s21
        %s5026 = smul.u32 16, %s5025
        %p5027 = scmp.lt.s32.totalorder %s5026, 31
        %s5028 = scalar_select %p5027, %s5026, 31
        %s5029 = smul.addr %s5028, 4
        %s5030 = smul.addr %s5029, 8
        %s5031 = scalar_lea.vmem %s3, %s5030
      $region44: #{decoder_block.1} parent=39 // pred_fallthru
        _
    $region40: #{decoder_block.1} parent=5 // pred_fallthru
      _
  $region6: #{decoder_block.1} parent=0 // loop_footer
    %s13 = sadd.s32 1, %s9
  $region7: #{decoder_block.1} parent=0 // loop_footer_branch
    %8 = sbr.rel target = $region3
  $region8: #{decoder_block.1} parent=0 // loop_exit
    _

</llo_original>
